<compile_context>
chip_gen: v7x
topology: tpu7x:2x2x1
jax: 0.10.0
libtpu: 0.0.40
codegen_flags: <defaults>
</compile_context>

<pallas_src>
import functools
import math

import jax
import jax.numpy as jnp
from jax.experimental import pallas as pl
from jax.experimental.pallas import tpu as pltpu

_LN_EPS = 1e-5  # torch.nn.LayerNorm default
# Explicit scoped-VMEM budget: above the 16 MiB v5e default, comfortably under
# v6e's 128 MiB and leaves headroom under v7x's 64 MiB physical VMEM.
_VMEM_LIMIT = 32 * 1024 * 1024


# --------------------------------------------------------------------------- #
# helpers
# --------------------------------------------------------------------------- #
def _round_up(n, m):
    return ((n + m - 1) // m) * m


def _pick_tile(n, candidates):
    """Largest candidate that evenly divides n, else the full extent n."""
    for c in candidates:
        if c <= n and n % c == 0:
            return c
    return n


def _pick_row_tile(rp):
    """Largest row tile that still leaves >= 2 row blocks (the row axis is the
    'parallel' axis; v7x has 2 TensorCores, so a single row block would leave
    one core idle).  Falls back to one full-extent block for tiny row counts."""
    for c in (256, 128, 64, 32, 16, 8):
        if c <= rp and rp % c == 0 and rp // c >= 2:
            return c
    return _pick_tile(rp, (256, 128, 64, 32, 16, 8))


# --------------------------------------------------------------------------- #
# Kernel 1: fused LayerNorm + matmul (+ optional bias / ReLU)
# --------------------------------------------------------------------------- #
def _ln_matmul_kernel(x_ref, g_ref, b_ref, w_ref, bias_ref, o_ref, xn_ref, *,
                      relu):
    j = pl.program_id(1)

    # NOTE: this LN cache relies on the column axis j being the innermost
    # (default row-major) grid axis and marked 'arbitrary'; column tiles j > 0
    # reuse the scratch written at j == 0 for the current row tile.
    @pl.when(j == 0)
    def _():
        x = x_ref[...].astype(jnp.float32)
        mean = jnp.mean(x, axis=-1, keepdims=True)
        xc = x - mean
        var = jnp.mean(xc * xc, axis=-1, keepdims=True)   # biased var (torch)
        inv = jax.lax.rsqrt(var + _LN_EPS)
        y = xc * inv * g_ref[...] + b_ref[...]
        xn_ref[...] = y.astype(xn_ref.dtype)

    acc = jnp.dot(xn_ref[...], w_ref[...], preferred_element_type=jnp.float32)
    acc = acc + bias_ref[...].astype(jnp.float32)
    if relu:
        acc = jnp.maximum(acc, 0.0)
    o_ref[...] = acc.astype(o_ref.dtype)


def layernorm_matmul(x2, ln_g, ln_b, w, bias=None, *, relu=False):
    """out = [relu](LayerNorm(x2) @ w + bias).  x2: (R, Din), w: (Din, Dout)."""
    R, Din = x2.shape
    Dout = w.shape[1]
    out_dtype = x2.dtype

    Rp = _round_up(R, 8)
    if Rp != R:
        # Padded rows are all-zero -> LN output is just ln_b (eps keeps it
        # finite); they are computed and then discarded by the wrapper.
        x2 = jnp.pad(x2, ((0, Rp - R), (0, 0)))
    tm = _pick_row_tile(Rp)
    # Prefer 256-multiples for the N tile (v6e/v7x MXU is 256 wide).
    tn = _pick_tile(Dout, (512, 256, 128))

    if bias is None:
        bias = jnp.zeros((Dout,), w.dtype)

    # TODO(synk): for very large Din on v7x (64 MiB VMEM), this kernel should
    # additionally tile the K (Din) axis with partial LN statistics.
    out = pl.pallas_call(
        functools.partial(_ln_matmul_kernel, relu=relu),
        out_shape=jax.ShapeDtypeStruct((Rp, Dout), out_dtype),
        grid_spec=pltpu.PrefetchScalarGridSpec(
            num_scalar_prefetch=0,
            grid=(Rp // tm, Dout // tn),
            in_specs=[
                pl.BlockSpec((tm, Din), lambda i, j: (i, 0)),
                pl.BlockSpec((1, Din), lambda i, j: (0, 0)),
                pl.BlockSpec((1, Din), lambda i, j: (0, 0)),
                pl.BlockSpec((Din, tn), lambda i, j: (0, j)),
                pl.BlockSpec((1, tn), lambda i, j: (0, j)),
            ],
            out_specs=pl.BlockSpec((tm, tn), lambda i, j: (i, j)),
            scratch_shapes=[pltpu.VMEM((tm, Din), w.dtype)],
        ),
        compiler_params=pltpu.CompilerParams(
            dimension_semantics=("parallel", "arbitrary"),
            vmem_limit_bytes=_VMEM_LIMIT),
    )(x2,
      ln_g.reshape(1, Din).astype(jnp.float32),
      ln_b.reshape(1, Din).astype(jnp.float32),
      w,
      bias.reshape(1, Dout))
    if Rp != R:
        out = out[:R]
    return out


# --------------------------------------------------------------------------- #
# Kernel 2: tiled matmul + bias + layerscale + residual
#           out = scale * (h @ w + bias) + res       (res aliased to out)
# --------------------------------------------------------------------------- #
def _mm_scale_res_kernel(h_ref, w_ref, bias_ref, scale_ref, res_ref, o_ref,
                         acc_ref):
    k = pl.program_id(2)

    @pl.when(k == 0)
    def _():
        acc_ref[...] = jnp.zeros_like(acc_ref)

    acc_ref[...] += jnp.dot(h_ref[...], w_ref[...],
                            preferred_element_type=jnp.float32)

    @pl.when(k == pl.num_programs(2) - 1)
    def _():
        out = acc_ref[...] + bias_ref[...].astype(jnp.float32)
        out = out * scale_ref[...].astype(jnp.float32) \
            + res_ref[...].astype(jnp.float32)
        o_ref[...] = out.astype(o_ref.dtype)


def matmul_scale_residual(h, w, bias, scale, res):
    """out = scale * (h @ w + bias) + res.  h: (R, K), w: (K, Dout)."""
    R, K = h.shape
    Dout = w.shape[1]
    out_dtype = res.dtype

    Rp = _round_up(R, 8)
    if Rp != R:
        h = jnp.pad(h, ((0, Rp - R), (0, 0)))
        res = jnp.pad(res, ((0, Rp - R), (0, 0)))
    tm = _pick_row_tile(Rp)
    # Prefer 256-multiples for N / K tiles (256-wide MXU on v6e/v7x).
    tn = _pick_tile(Dout, (512, 256, 128))
    tk = _pick_tile(K, (512, 256, 128))

    out = pl.pallas_call(
        _mm_scale_res_kernel,
        out_shape=jax.ShapeDtypeStruct((Rp, Dout), out_dtype),
        grid_spec=pltpu.PrefetchScalarGridSpec(
            num_scalar_prefetch=0,
            grid=(Rp // tm, Dout // tn, K // tk),
            in_specs=[
                pl.BlockSpec((tm, tk), lambda i, j, k: (i, k)),
                pl.BlockSpec((tk, tn), lambda i, j, k: (k, j)),
                pl.BlockSpec((1, tn), lambda i, j, k: (0, j)),
                pl.BlockSpec((1, tn), lambda i, j, k: (0, j)),
                pl.BlockSpec((tm, tn), lambda i, j, k: (i, j)),
            ],
            out_specs=pl.BlockSpec((tm, tn), lambda i, j, k: (i, j)),
            scratch_shapes=[pltpu.VMEM((tm, tn), jnp.float32)],
        ),
        compiler_params=pltpu.CompilerParams(
            dimension_semantics=("parallel", "parallel", "arbitrary"),
            vmem_limit_bytes=_VMEM_LIMIT),
        # residual input (index 4) aliases the output buffer.
        input_output_aliases={4: 0},
    )(h, w, bias.reshape(1, Dout), scale.reshape(1, Dout), res)
    if Rp != R:
        out = out[:R]
    return out


# --------------------------------------------------------------------------- #
# Kernel 3: grouped multi-head softmax attention straight from the QKV slab
#   qkv3: (B, S, 3*H*d) -> out: (B, S, H*d)
#   grid = (B, H // G); q/k/v head-group blocks selected via index_map only.
# --------------------------------------------------------------------------- #
def _grouped_attention_kernel(q_ref, k_ref, v_ref, o_ref, *, num_heads,
                              dim_head, scale):
    d = dim_head
    # Fold the 1/sqrt(d) scale into q: O(S*d) multiplies instead of O(S^2).
    q = q_ref[0].astype(jnp.float32) * scale        # (S, G*d)
    k = k_ref[0].astype(jnp.float32)                # (S, G*d)
    v = v_ref[0].astype(jnp.float32)                # (S, G*d)

    # TODO(synk): for long sequences this should be flash-tiled over kv blocks
    # (online softmax) instead of materializing the full (S, S) score matrix.
    outs = []
    for h in range(num_heads):                      # static unroll over heads
        qh = q[:, h * d:(h + 1) * d]
        kh = k[:, h * d:(h + 1) * d]
        vh = v[:, h * d:(h + 1) * d]
        s = jax.lax.dot_general(qh, kh, (((1,), (1,)), ((), ())),
                                preferred_element_type=jnp.float32)
        s = s - jnp.max(s, axis=-1, keepdims=True)
        p = jnp.exp(s)
        # Softmax denominator via the EUP reciprocal slot (free vs. VPU divide).
        p = p * pl.reciprocal(jnp.sum(p, axis=-1, keepdims=True), approx=True)
        outs.append(jnp.dot(p, vh, preferred_element_type=jnp.float32))
    o_ref[0] = jnp.concatenate(outs, axis=-1).astype(o_ref.dtype)


def grouped_attention(qkv3, heads, dim_head, scale):
    """qkv3: (B, S, 3*heads*dim_head) -> (B, S, heads*dim_head)."""
    B, S, _ = qkv3.shape
    inner = heads * dim_head

    # Smallest head group G (dividing heads) with a 128-lane-aligned width.
    G = heads
    for g in range(1, heads + 1):
        if heads % g == 0 and (g * dim_head) % 128 == 0:
            G = g
            break
    gd = G * dim_head

    if gd % 128 != 0:
        # TODO(synk): head-group width not 128-aligned -> plain JAX fallback.
        q, k, v = jnp.split(qkv3, 3, axis=-1)

        def split_heads(t):
            return t.reshape(B, S, heads, dim_head).transpose(0, 2, 1, 3)

        q, k, v = map(split_heads, (q, k, v))
        p = jax.nn.softmax(jnp.einsum("bhid,bhjd->bhij", q, k) * scale, -1)
        o = jnp.einsum("bhij,bhjd->bhid", p, v)
        return o.transpose(0, 2, 1, 3).reshape(B, S, inner)

    n_groups = heads // G

    def q_map(b, g):
        return (b, 0, g)

    def k_map(b, g):
        return (b, 0, g + n_groups)

    def v_map(b, g):
        return (b, 0, g + 2 * n_groups)

    return pl.pallas_call(
        functools.partial(_grouped_attention_kernel, num_heads=G,
                          dim_head=dim_head, scale=scale),
        out_shape=jax.ShapeDtypeStruct((B, S, inner), qkv3.dtype),
        grid_spec=pltpu.PrefetchScalarGridSpec(
            num_scalar_prefetch=0,
            grid=(B, n_groups),
            in_specs=[
                pl.BlockSpec((1, S, gd), q_map),
                pl.BlockSpec((1, S, gd), k_map),
                pl.BlockSpec((1, S, gd), v_map),
            ],
            out_specs=pl.BlockSpec((1, S, gd), q_map),
        ),
        compiler_params=pltpu.CompilerParams(
            dimension_semantics=("parallel", "parallel"),
            vmem_limit_bytes=_VMEM_LIMIT),
    )(qkv3, qkv3, qkv3)


# --------------------------------------------------------------------------- #
# Transformer_Layerscale module
# --------------------------------------------------------------------------- #
class TransformerLayerscale:
    """Pallas version of Transformer_Layerscale.forward (dropout p=0 -> identity)."""

    def __init__(self, dim, depth, heads, dim_head, mlp_dim=1024, dropout=0.0,
                 *, key, dtype=jnp.float32):
        del dropout  # p = 0.0 in forward -> identity
        inner = heads * dim_head
        self.dim, self.depth = dim, depth
        self.heads, self.dim_head, self.inner = heads, dim_head, inner
        self.scale = dim_head ** (-0.5)
        project_out = not (heads == 1 and dim_head == dim)
        self.init_values = 0.0001
        self.gamma_1 = self.init_values * jnp.ones((dim,), dtype)
        self.gamma_2 = self.init_values * jnp.ones((dim,), dtype)

        def init_w(k, fan_in, shape):
            return jax.random.normal(k, shape, dtype) / math.sqrt(fan_in)

        self.layers = []
        for lk in jax.random.split(key, depth):
            k0, k1, k2, k3, k4, k5 = jax.random.split(lk, 6)
            if project_out:
                w_out = init_w(k1, inner, (inner, dim))
                b_out = init_w(k2, inner, (dim,))
            else:  # to_out == Identity  (inner == dim in that case)
                w_out = jnp.eye(inner, dtype=dtype)
                b_out = jnp.zeros((dim,), dtype)
            self.layers.append(dict(
                ln1_g=jnp.ones((dim,), dtype), ln1_b=jnp.zeros((dim,), dtype),
                w_qkv=init_w(k0, dim, (dim, 3 * inner)),   # bias=False in torch
                w_out=w_out, b_out=b_out,
                ln2_g=jnp.ones((dim,), dtype), ln2_b=jnp.zeros((dim,), dtype),
                w1=init_w(k3, dim, (dim, mlp_dim)),
                b1=init_w(k4, dim, (mlp_dim,)),
                w2=init_w(k5, mlp_dim, (mlp_dim, dim)),
                b2=jnp.zeros((dim,), dtype),
            ))

    def __call__(self, x):
        B, S, D = x.shape
        inner = self.inner
        x2 = x.reshape(B * S, D)
        for L in self.layers:
            # ---- attention branch: fused LN + QKV projection ---------------
            qkv = layernorm_matmul(x2, L["ln1_g"], L["ln1_b"], L["w_qkv"])
            # attention reads head-group slices of qkv via BlockSpec index_maps
            # (no jnp.split / transposes) and writes a lane-dense (B,S,H*d) slab
            attn = grouped_attention(qkv.reshape(B, S, 3 * inner),
                                     self.heads, self.dim_head, self.scale)
            # fused output projection + gamma_1 layerscale + residual
            x2 = matmul_scale_residual(attn.reshape(B * S, inner),
                                       L["w_out"], L["b_out"],
                                       self.gamma_1, x2)
            # ---- feed-forward branch: fused LN + Linear1 + ReLU -------------
            h = layernorm_matmul(x2, L["ln2_g"], L["ln2_b"], L["w1"], L["b1"],
                                 relu=True)
            # fused Linear2 + gamma_2 layerscale + residual
            x2 = matmul_scale_residual(h, L["w2"], L["b2"], self.gamma_2, x2)
        return x2.reshape(B, S, D)


# --------------------------------------------------------------------------- #
# pure-JAX reference
# --------------------------------------------------------------------------- #
def reference_forward(model, x):
    B, S, D = x.shape
    H, d = model.heads, model.dim_head

    def ln(t, g, b):
        mean = jnp.mean(t, axis=-1, keepdims=True)
        var = jnp.mean((t - mean) ** 2, axis=-1, keepdims=True)
        return (t - mean) / jnp.sqrt(var + _LN_EPS) * g + b

    for L in model.layers:
        h = ln(x, L["ln1_g"], L["ln1_b"])
        qkv = h @ L["w_qkv"]
        q, k, v = jnp.split(qkv, 3, axis=-1)
        q = q.reshape(B, S, H, d).transpose(0, 2, 1, 3)
        k = k.reshape(B, S, H, d).transpose(0, 2, 1, 3)
        v = v.reshape(B, S, H, d).transpose(0, 2, 1, 3)
        dots = jnp.einsum("bhid,bhjd->bhij", q, k) * model.scale
        attn = jax.nn.softmax(dots, axis=-1)
        out = jnp.einsum("bhij,bhjd->bhid", attn, v)
        out = out.transpose(0, 2, 1, 3).reshape(B, S, H * d)
        out = out @ L["w_out"] + L["b_out"]
        x = model.gamma_1 * out + x
        h = ln(x, L["ln2_g"], L["ln2_b"])
        h = jnp.maximum(h @ L["w1"] + L["b1"], 0.0)
        h = h @ L["w2"] + L["b2"]
        x = model.gamma_2 * h + x
    return x


if __name__ == "__main__":
    # small, module-consistent shapes: dim / inner multiples of 128 keep every
    # store lane-dense
    B, S = 2, 8
    dim, depth, heads, dim_head, mlp_dim = 128, 2, 4, 32, 256

    key = jax.random.PRNGKey(0)
    kx, kp = jax.random.split(key)
    x = jax.random.normal(kx, (B, S, dim), dtype=jnp.float32)

    model = TransformerLayerscale(dim, depth, heads, dim_head, mlp_dim, key=kp)
    fwd = jax.jit(model.__call__)
    out = jax.block_until_ready(fwd(x))

    ref = reference_forward(model, x)
    assert out.shape == (B, S, dim)
    assert jnp.allclose(out, ref, atol=2e-3, rtol=2e-3), \
        float(jnp.max(jnp.abs(out - ref)))

    # TODO(synk): `infere()` attention-map recording (get_local) not implemented;
    # dropout (p=0.0) is an identity in the forward pass.
    print("KERNEL_OK")
</pallas_src>

<mosaic_0001>
module attributes {stable_mosaic.version = 11 : i64} {
  func.func @_ln_matmul_kernel(%arg0: i32, %arg1: i32, %arg2: memref<8x128xf32, #tpu.memory_space<vmem>>, %arg3: memref<1x128xf32, #tpu.memory_space<vmem>>, %arg4: memref<1x128xf32, #tpu.memory_space<vmem>>, %arg5: memref<128x128xf32, #tpu.memory_space<vmem>>, %arg6: memref<1x128xf32, #tpu.memory_space<vmem>>, %arg7: memref<8x128xf32, #tpu.memory_space<vmem>>, %arg8: memref<8x128xf32, #tpu.memory_space<vmem>>) attributes {dimension_semantics = [#tpu.dimension_semantics<parallel>, #tpu.dimension_semantics<arbitrary>], iteration_bounds = array<i64: 2, 3>, scalar_prefetch = 0 : i64, scratch_operands = 1 : i64, tpu.core_type = #tpu.core_type<tc>, window_params = [{transform_indices = @transform_0, window_bounds = array<i64: 8, 128>}, {pipeline_mode = #tpu.pipeline_mode<synchronous>, transform_indices = @transform_1, window_bounds = array<i64: 1, 128>}, {pipeline_mode = #tpu.pipeline_mode<synchronous>, transform_indices = @transform_2, window_bounds = array<i64: 1, 128>}, {transform_indices = @transform_3, window_bounds = array<i64: 128, 128>}, {transform_indices = @transform_4, window_bounds = array<i64: 1, 128>}, {transform_indices = @transform_5, window_bounds = array<i64: 8, 128>}]} {
    %c0_i32 = arith.constant 0 : i32
    %0 = arith.cmpi eq, %arg1, %c0_i32 : i32
    %1 = arith.extui %0 : i1 to i32
    %c0_i32_0 = arith.constant 0 : i32
    %2 = arith.cmpi ne, %1, %c0_i32_0 : i32
    scf.if %2 {
      %c0_8 = arith.constant 0 : index
      %c0_9 = arith.constant 0 : index
      %10 = vector.load %arg2[%c0_8, %c0_9] : memref<8x128xf32, #tpu.memory_space<vmem>>, vector<8x128xf32>
      %cst_10 = arith.constant dense<0.000000e+00> : vector<8xf32>
      %11 = vector.multi_reduction <add>, %10, %cst_10 [1] : vector<8x128xf32> to vector<8xf32>
      %12 = vector.shape_cast %11 : vector<8xf32> to vector<8x1xf32>
      %cst_11 = arith.constant 1.280000e+02 : f32
      %13 = vector.broadcast %cst_11 : f32 to vector<8x1xf32>
      %14 = arith.divf %12, %13 : vector<8x1xf32>
      %15 = vector.broadcast %14 : vector<8x1xf32> to vector<8x128xf32>
      %16 = arith.subf %10, %15 : vector<8x128xf32>
      %17 = arith.mulf %16, %16 : vector<8x128xf32>
      %cst_12 = arith.constant dense<0.000000e+00> : vector<8xf32>
      %18 = vector.multi_reduction <add>, %17, %cst_12 [1] : vector<8x128xf32> to vector<8xf32>
      %19 = vector.shape_cast %18 : vector<8xf32> to vector<8x1xf32>
      %cst_13 = arith.constant 1.280000e+02 : f32
      %20 = vector.broadcast %cst_13 : f32 to vector<8x1xf32>
      %21 = arith.divf %19, %20 : vector<8x1xf32>
      %cst_14 = arith.constant 9.99999974E-6 : f32
      %22 = vector.broadcast %cst_14 : f32 to vector<8x1xf32>
      %23 = arith.addf %21, %22 : vector<8x1xf32>
      %24 = math.rsqrt %23 : vector<8x1xf32>
      %25 = vector.broadcast %24 : vector<8x1xf32> to vector<8x128xf32>
      %26 = arith.mulf %16, %25 : vector<8x128xf32>
      %c0_15 = arith.constant 0 : index
      %c0_16 = arith.constant 0 : index
      %27 = vector.load %arg3[%c0_15, %c0_16] : memref<1x128xf32, #tpu.memory_space<vmem>>, vector<1x128xf32>
      %28 = vector.broadcast %27 : vector<1x128xf32> to vector<8x128xf32>
      %29 = arith.mulf %26, %28 : vector<8x128xf32>
      %c0_17 = arith.constant 0 : index
      %c0_18 = arith.constant 0 : index
      %30 = vector.load %arg4[%c0_17, %c0_18] : memref<1x128xf32, #tpu.memory_space<vmem>>, vector<1x128xf32>
      %31 = vector.broadcast %30 : vector<1x128xf32> to vector<8x128xf32>
      %32 = arith.addf %29, %31 : vector<8x128xf32>
      %c0_19 = arith.constant 0 : index
      %c0_20 = arith.constant 0 : index
      %33 = vector.load %arg8[%c0_19, %c0_20] : memref<8x128xf32, #tpu.memory_space<vmem>>, vector<8x128xf32>
      tpu.vector_store %arg8[%c0_19, %c0_20], %32 {strides = array<i32>} : memref<8x128xf32, #tpu.memory_space<vmem>>, vector<8x128xf32>,
    } else {
    }
    %c0 = arith.constant 0 : index
    %c0_1 = arith.constant 0 : index
    %3 = vector.load %arg8[%c0, %c0_1] : memref<8x128xf32, #tpu.memory_space<vmem>>, vector<8x128xf32>
    %c0_2 = arith.constant 0 : index
    %c0_3 = arith.constant 0 : index
    %4 = vector.load %arg5[%c0_2, %c0_3] : memref<128x128xf32, #tpu.memory_space<vmem>>, vector<128x128xf32>
    %cst = arith.constant dense<0.000000e+00> : vector<8x128xf32>
    %5 = tpu.matmul %3, %4, %cst {dimension_numbers = #tpu.dot_dimension_numbers<[1], [0], [0], [1], [0, 0, 1, 1], [], []>} : vector<8x128xf32>, vector<128x128xf32>, vector<8x128xf32> -> vector<8x128xf32>
    %c0_4 = arith.constant 0 : index
    %c0_5 = arith.constant 0 : index
    %6 = vector.load %arg6[%c0_4, %c0_5] : memref<1x128xf32, #tpu.memory_space<vmem>>, vector<1x128xf32>
    %7 = vector.broadcast %6 : vector<1x128xf32> to vector<8x128xf32>
    %8 = arith.addf %5, %7 : vector<8x128xf32>
    %c0_6 = arith.constant 0 : index
    %c0_7 = arith.constant 0 : index
    %9 = vector.load %arg7[%c0_6, %c0_7] : memref<8x128xf32, #tpu.memory_space<vmem>>, vector<8x128xf32>
    tpu.vector_store %arg7[%c0_6, %c0_7], %8 {strides = array<i32>} : memref<8x128xf32, #tpu.memory_space<vmem>>, vector<8x128xf32>,
    return
  }
  func.func @transform_0(%arg0: i32, %arg1: i32) -> (i32, i32) {
    %c0_i32 = arith.constant 0 : i32
    %c0_i32_0 = arith.constant 0 : i32
    return %arg0, %c0_i32 : i32, i32
  }
  func.func @transform_1(%arg0: i32, %arg1: i32) -> (i32, i32) {
    %c0_i32 = arith.constant 0 : i32
    %c0_i32_0 = arith.constant 0 : i32
    %c0_i32_1 = arith.constant 0 : i32
    return %c0_i32, %c0_i32_0 : i32, i32
  }
  func.func @transform_2(%arg0: i32, %arg1: i32) -> (i32, i32) {
    %c0_i32 = arith.constant 0 : i32
    %c0_i32_0 = arith.constant 0 : i32
    %c0_i32_1 = arith.constant 0 : i32
    return %c0_i32, %c0_i32_0 : i32, i32
  }
  func.func @transform_3(%arg0: i32, %arg1: i32) -> (i32, i32) {
    %c0_i32 = arith.constant 0 : i32
    %c0_i32_0 = arith.constant 0 : i32
    return %c0_i32, %arg1 : i32, i32
  }
  func.func @transform_4(%arg0: i32, %arg1: i32) -> (i32, i32) {
    %c0_i32 = arith.constant 0 : i32
    %c0_i32_0 = arith.constant 0 : i32
    return %c0_i32, %arg1 : i32, i32
  }
  func.func @transform_5(%arg0: i32, %arg1: i32) -> (i32, i32) {
    %c0_i32 = arith.constant 0 : i32
    return %arg0, %arg1 : i32, i32
  }
}

module attributes {stable_mosaic.version = 11 : i64} {
  func.func @_grouped_attention_kernel(%arg0: i32, %arg1: i32, %arg2: memref<1x8x128xf32, #tpu.memory_space<vmem>>, %arg3: memref<1x8x128xf32, #tpu.memory_space<vmem>>, %arg4: memref<1x8x128xf32, #tpu.memory_space<vmem>>, %arg5: memref<1x8x128xf32, #tpu.memory_space<vmem>>) attributes {dimension_semantics = [#tpu.dimension_semantics<parallel>, #tpu.dimension_semantics<parallel>], iteration_bounds = array<i64: 2, 1>, scalar_prefetch = 0 : i64, scratch_operands = 0 : i64, tpu.core_type = #tpu.core_type<tc>, window_params = [{transform_indices = @transform_0, window_bounds = array<i64: 1, 8, 128>}, {transform_indices = @transform_1, window_bounds = array<i64: 1, 8, 128>}, {transform_indices = @transform_2, window_bounds = array<i64: 1, 8, 128>}, {transform_indices = @transform_3, window_bounds = array<i64: 1, 8, 128>}]} {
    %c0 = arith.constant 0 : index
    %c0_0 = arith.constant 0 : index
    %c0_1 = arith.constant 0 : index
    %0 = vector.load %arg2[%c0, %c0_0, %c0_1] : memref<1x8x128xf32, #tpu.memory_space<vmem>>, vector<1x8x128xf32>
    %1 = vector.shape_cast %0 : vector<1x8x128xf32> to vector<8x128xf32>
    %cst = arith.constant 0.176776692 : f32
    %2 = vector.broadcast %cst : f32 to vector<8x128xf32>
    %3 = arith.mulf %1, %2 : vector<8x128xf32>
    %c0_2 = arith.constant 0 : index
    %c0_3 = arith.constant 0 : index
    %c0_4 = arith.constant 0 : index
    %4 = vector.load %arg3[%c0_2, %c0_3, %c0_4] : memref<1x8x128xf32, #tpu.memory_space<vmem>>, vector<1x8x128xf32>
    %5 = vector.shape_cast %4 : vector<1x8x128xf32> to vector<8x128xf32>
    %c0_5 = arith.constant 0 : index
    %c0_6 = arith.constant 0 : index
    %c0_7 = arith.constant 0 : index
    %6 = vector.load %arg4[%c0_5, %c0_6, %c0_7] : memref<1x8x128xf32, #tpu.memory_space<vmem>>, vector<1x8x128xf32>
    %7 = vector.shape_cast %6 : vector<1x8x128xf32> to vector<8x128xf32>
    %8 = vector.extract_strided_slice %3 {offsets = [0, 0], sizes = [8, 32], strides = [1, 1]} : vector<8x128xf32> to vector<8x32xf32>
    %9 = vector.extract_strided_slice %5 {offsets = [0, 0], sizes = [8, 32], strides = [1, 1]} : vector<8x128xf32> to vector<8x32xf32>
    %10 = vector.extract_strided_slice %7 {offsets = [0, 0], sizes = [8, 32], strides = [1, 1]} : vector<8x128xf32> to vector<8x32xf32>
    %cst_8 = arith.constant dense<0.000000e+00> : vector<8x8xf32>
    %11 = tpu.matmul %8, %9, %cst_8 {dimension_numbers = #tpu.dot_dimension_numbers<[1], [1], [0], [0], [0, 0, 1, 0], [], []>} : vector<8x32xf32>, vector<8x32xf32>, vector<8x8xf32> -> vector<8x8xf32>
    %cst_9 = arith.constant dense<0xFF800000> : vector<8xf32>
    %12 = vector.multi_reduction <maximumf>, %11, %cst_9 [1] : vector<8x8xf32> to vector<8xf32>
    %13 = vector.shape_cast %12 : vector<8xf32> to vector<8x1xf32>
    %14 = vector.broadcast %13 : vector<8x1xf32> to vector<8x8xf32>
    %15 = arith.subf %11, %14 : vector<8x8xf32>
    %16 = math.exp %15 : vector<8x8xf32>
    %cst_10 = arith.constant dense<0.000000e+00> : vector<8xf32>
    %17 = vector.multi_reduction <add>, %16, %cst_10 [1] : vector<8x8xf32> to vector<8xf32>
    %18 = vector.shape_cast %17 : vector<8xf32> to vector<8x1xf32>
    %19 = tpu.reciprocal %18 {approx = true} : vector<8x1xf32> -> vector<8x1xf32>
    %20 = vector.broadcast %19 : vector<8x1xf32> to vector<8x8xf32>
    %21 = arith.mulf %16, %20 : vector<8x8xf32>
    %cst_11 = arith.constant dense<0.000000e+00> : vector<8x32xf32>
    %22 = tpu.matmul %21, %10, %cst_11 {dimension_numbers = #tpu.dot_dimension_numbers<[1], [0], [0], [1], [0, 0, 1, 1], [], []>} : vector<8x8xf32>, vector<8x32xf32>, vector<8x32xf32> -> vector<8x32xf32>
    %23 = vector.extract_strided_slice %3 {offsets = [0, 32], sizes = [8, 32], strides = [1, 1]} : vector<8x128xf32> to vector<8x32xf32>
    %24 = vector.extract_strided_slice %5 {offsets = [0, 32], sizes = [8, 32], strides = [1, 1]} : vector<8x128xf32> to vector<8x32xf32>
    %25 = vector.extract_strided_slice %7 {offsets = [0, 32], sizes = [8, 32], strides = [1, 1]} : vector<8x128xf32> to vector<8x32xf32>
    %cst_12 = arith.constant dense<0.000000e+00> : vector<8x8xf32>
    %26 = tpu.matmul %23, %24, %cst_12 {dimension_numbers = #tpu.dot_dimension_numbers<[1], [1], [0], [0], [0, 0, 1, 0], [], []>} : vector<8x32xf32>, vector<8x32xf32>, vector<8x8xf32> -> vector<8x8xf32>
    %cst_13 = arith.constant dense<0xFF800000> : vector<8xf32>
    %27 = vector.multi_reduction <maximumf>, %26, %cst_13 [1] : vector<8x8xf32> to vector<8xf32>
    %28 = vector.shape_cast %27 : vector<8xf32> to vector<8x1xf32>
    %29 = vector.broadcast %28 : vector<8x1xf32> to vector<8x8xf32>
    %30 = arith.subf %26, %29 : vector<8x8xf32>
    %31 = math.exp %30 : vector<8x8xf32>
    %cst_14 = arith.constant dense<0.000000e+00> : vector<8xf32>
    %32 = vector.multi_reduction <add>, %31, %cst_14 [1] : vector<8x8xf32> to vector<8xf32>
    %33 = vector.shape_cast %32 : vector<8xf32> to vector<8x1xf32>
    %34 = tpu.reciprocal %33 {approx = true} : vector<8x1xf32> -> vector<8x1xf32>
    %35 = vector.broadcast %34 : vector<8x1xf32> to vector<8x8xf32>
    %36 = arith.mulf %31, %35 : vector<8x8xf32>
    %cst_15 = arith.constant dense<0.000000e+00> : vector<8x32xf32>
    %37 = tpu.matmul %36, %25, %cst_15 {dimension_numbers = #tpu.dot_dimension_numbers<[1], [0], [0], [1], [0, 0, 1, 1], [], []>} : vector<8x8xf32>, vector<8x32xf32>, vector<8x32xf32> -> vector<8x32xf32>
    %38 = vector.extract_strided_slice %3 {offsets = [0, 64], sizes = [8, 32], strides = [1, 1]} : vector<8x128xf32> to vector<8x32xf32>
    %39 = vector.extract_strided_slice %5 {offsets = [0, 64], sizes = [8, 32], strides = [1, 1]} : vector<8x128xf32> to vector<8x32xf32>
    %40 = vector.extract_strided_slice %7 {offsets = [0, 64], sizes = [8, 32], strides = [1, 1]} : vector<8x128xf32> to vector<8x32xf32>
    %cst_16 = arith.constant dense<0.000000e+00> : vector<8x8xf32>
    %41 = tpu.matmul %38, %39, %cst_16 {dimension_numbers = #tpu.dot_dimension_numbers<[1], [1], [0], [0], [0, 0, 1, 0], [], []>} : vector<8x32xf32>, vector<8x32xf32>, vector<8x8xf32> -> vector<8x8xf32>
    %cst_17 = arith.constant dense<0xFF800000> : vector<8xf32>
    %42 = vector.multi_reduction <maximumf>, %41, %cst_17 [1] : vector<8x8xf32> to vector<8xf32>
    %43 = vector.shape_cast %42 : vector<8xf32> to vector<8x1xf32>
    %44 = vector.broadcast %43 : vector<8x1xf32> to vector<8x8xf32>
    %45 = arith.subf %41, %44 : vector<8x8xf32>
    %46 = math.exp %45 : vector<8x8xf32>
    %cst_18 = arith.constant dense<0.000000e+00> : vector<8xf32>
    %47 = vector.multi_reduction <add>, %46, %cst_18 [1] : vector<8x8xf32> to vector<8xf32>
    %48 = vector.shape_cast %47 : vector<8xf32> to vector<8x1xf32>
    %49 = tpu.reciprocal %48 {approx = true} : vector<8x1xf32> -> vector<8x1xf32>
    %50 = vector.broadcast %49 : vector<8x1xf32> to vector<8x8xf32>
    %51 = arith.mulf %46, %50 : vector<8x8xf32>
    %cst_19 = arith.constant dense<0.000000e+00> : vector<8x32xf32>
    %52 = tpu.matmul %51, %40, %cst_19 {dimension_numbers = #tpu.dot_dimension_numbers<[1], [0], [0], [1], [0, 0, 1, 1], [], []>} : vector<8x8xf32>, vector<8x32xf32>, vector<8x32xf32> -> vector<8x32xf32>
    %53 = vector.extract_strided_slice %3 {offsets = [0, 96], sizes = [8, 32], strides = [1, 1]} : vector<8x128xf32> to vector<8x32xf32>
    %54 = vector.extract_strided_slice %5 {offsets = [0, 96], sizes = [8, 32], strides = [1, 1]} : vector<8x128xf32> to vector<8x32xf32>
    %55 = vector.extract_strided_slice %7 {offsets = [0, 96], sizes = [8, 32], strides = [1, 1]} : vector<8x128xf32> to vector<8x32xf32>
    %cst_20 = arith.constant dense<0.000000e+00> : vector<8x8xf32>
    %56 = tpu.matmul %53, %54, %cst_20 {dimension_numbers = #tpu.dot_dimension_numbers<[1], [1], [0], [0], [0, 0, 1, 0], [], []>} : vector<8x32xf32>, vector<8x32xf32>, vector<8x8xf32> -> vector<8x8xf32>
    %cst_21 = arith.constant dense<0xFF800000> : vector<8xf32>
    %57 = vector.multi_reduction <maximumf>, %56, %cst_21 [1] : vector<8x8xf32> to vector<8xf32>
    %58 = vector.shape_cast %57 : vector<8xf32> to vector<8x1xf32>
    %59 = vector.broadcast %58 : vector<8x1xf32> to vector<8x8xf32>
    %60 = arith.subf %56, %59 : vector<8x8xf32>
    %61 = math.exp %60 : vector<8x8xf32>
    %cst_22 = arith.constant dense<0.000000e+00> : vector<8xf32>
    %62 = vector.multi_reduction <add>, %61, %cst_22 [1] : vector<8x8xf32> to vector<8xf32>
    %63 = vector.shape_cast %62 : vector<8xf32> to vector<8x1xf32>
    %64 = tpu.reciprocal %63 {approx = true} : vector<8x1xf32> -> vector<8x1xf32>
    %65 = vector.broadcast %64 : vector<8x1xf32> to vector<8x8xf32>
    %66 = arith.mulf %61, %65 : vector<8x8xf32>
    %cst_23 = arith.constant dense<0.000000e+00> : vector<8x32xf32>
    %67 = tpu.matmul %66, %55, %cst_23 {dimension_numbers = #tpu.dot_dimension_numbers<[1], [0], [0], [1], [0, 0, 1, 1], [], []>} : vector<8x8xf32>, vector<8x32xf32>, vector<8x32xf32> -> vector<8x32xf32>
    %68 = tpu.concatenate %22, %37, %52, %67 in 1 : vector<8x32xf32>, vector<8x32xf32>, vector<8x32xf32>, vector<8x32xf32> -> vector<8x128xf32>
    %c0_24 = arith.constant 0 : index
    %c0_25 = arith.constant 0 : index
    %c0_26 = arith.constant 0 : index
    %69 = vector.load %arg5[%c0_24, %c0_25, %c0_26] : memref<1x8x128xf32, #tpu.memory_space<vmem>>, vector<1x8x128xf32>
    %70 = vector.shape_cast %69 : vector<1x8x128xf32> to vector<8x128xf32>
    %71 = vector.shape_cast %68 : vector<8x128xf32> to vector<1x8x128xf32>
    tpu.vector_store %arg5[%c0_24, %c0_25, %c0_26], %71 {strides = array<i32>} : memref<1x8x128xf32, #tpu.memory_space<vmem>>, vector<1x8x128xf32>,
    return
  }
  func.func @transform_0(%arg0: i32, %arg1: i32) -> (i32, i32, i32) {
    %c0_i32 = arith.constant 0 : i32
    %c0_i32_0 = arith.constant 0 : i32
    return %arg0, %c0_i32, %arg1 : i32, i32, i32
  }
  func.func @transform_1(%arg0: i32, %arg1: i32) -> (i32, i32, i32) {
    %c1_i32 = arith.constant 1 : i32
    %0 = arith.addi %arg1, %c1_i32 : i32
    %c0_i32 = arith.constant 0 : i32
    %c0_i32_0 = arith.constant 0 : i32
    return %arg0, %c0_i32, %0 : i32, i32, i32
  }
  func.func @transform_2(%arg0: i32, %arg1: i32) -> (i32, i32, i32) {
    %c2_i32 = arith.constant 2 : i32
    %0 = arith.addi %arg1, %c2_i32 : i32
    %c0_i32 = arith.constant 0 : i32
    %c0_i32_0 = arith.constant 0 : i32
    return %arg0, %c0_i32, %0 : i32, i32, i32
  }
  func.func @transform_3(%arg0: i32, %arg1: i32) -> (i32, i32, i32) {
    %c0_i32 = arith.constant 0 : i32
    %c0_i32_0 = arith.constant 0 : i32
    return %arg0, %c0_i32, %arg1 : i32, i32, i32
  }
}

module attributes {stable_mosaic.version = 11 : i64} {
  func.func @_mm_scale_res_kernel(%arg0: i32, %arg1: i32, %arg2: i32, %arg3: memref<8x128xf32, #tpu.memory_space<vmem>>, %arg4: memref<128x128xf32, #tpu.memory_space<vmem>>, %arg5: memref<1x128xf32, #tpu.memory_space<vmem>>, %arg6: memref<1x128xf32, #tpu.memory_space<vmem>>, %arg7: memref<8x128xf32, #tpu.memory_space<vmem>>, %arg8: memref<8x128xf32, #tpu.memory_space<vmem>>, %arg9: memref<8x128xf32, #tpu.memory_space<vmem>>) attributes {dimension_semantics = [#tpu.dimension_semantics<parallel>, #tpu.dimension_semantics<parallel>, #tpu.dimension_semantics<arbitrary>], iteration_bounds = array<i64: 2, 1, 1>, scalar_prefetch = 0 : i64, scratch_operands = 1 : i64, tpu.core_type = #tpu.core_type<tc>, window_params = [{transform_indices = @transform_0, window_bounds = array<i64: 8, 128>}, {transform_indices = @transform_1, window_bounds = array<i64: 128, 128>}, {transform_indices = @transform_2, window_bounds = array<i64: 1, 128>}, {transform_indices = @transform_3, window_bounds = array<i64: 1, 128>}, {transform_indices = @transform_4, window_bounds = array<i64: 8, 128>}, {transform_indices = @transform_5, window_bounds = array<i64: 8, 128>}]} {
    %c0_i32 = arith.constant 0 : i32
    %0 = arith.cmpi eq, %arg2, %c0_i32 : i32
    %1 = arith.extui %0 : i1 to i32
    %c0_i32_0 = arith.constant 0 : i32
    %2 = arith.cmpi ne, %1, %c0_i32_0 : i32
    scf.if %2 {
      %cst_10 = arith.constant 0.000000e+00 : f32
      %12 = vector.broadcast %cst_10 : f32 to vector<8x128xf32>
      %c0_11 = arith.constant 0 : index
      %c0_12 = arith.constant 0 : index
      %13 = vector.load %arg9[%c0_11, %c0_12] : memref<8x128xf32, #tpu.memory_space<vmem>>, vector<8x128xf32>
      tpu.vector_store %arg9[%c0_11, %c0_12], %12 {strides = array<i32>} : memref<8x128xf32, #tpu.memory_space<vmem>>, vector<8x128xf32>,
    } else {
    }
    %c0 = arith.constant 0 : index
    %c0_1 = arith.constant 0 : index
    %3 = vector.load %arg9[%c0, %c0_1] : memref<8x128xf32, #tpu.memory_space<vmem>>, vector<8x128xf32>
    %c0_2 = arith.constant 0 : index
    %c0_3 = arith.constant 0 : index
    %4 = vector.load %arg3[%c0_2, %c0_3] : memref<8x128xf32, #tpu.memory_space<vmem>>, vector<8x128xf32>
    %c0_4 = arith.constant 0 : index
    %c0_5 = arith.constant 0 : index
    %5 = vector.load %arg4[%c0_4, %c0_5] : memref<128x128xf32, #tpu.memory_space<vmem>>, vector<128x128xf32>
    %cst = arith.constant dense<0.000000e+00> : vector<8x128xf32>
    %6 = tpu.matmul %4, %5, %cst {dimension_numbers = #tpu.dot_dimension_numbers<[1], [0], [0], [1], [0, 0, 1, 1], [], []>} : vector<8x128xf32>, vector<128x128xf32>, vector<8x128xf32> -> vector<8x128xf32>
    %7 = arith.addf %3, %6 : vector<8x128xf32>
    %c0_6 = arith.constant 0 : index
    %c0_7 = arith.constant 0 : index
    %8 = vector.load %arg9[%c0_6, %c0_7] : memref<8x128xf32, #tpu.memory_space<vmem>>, vector<8x128xf32>
    tpu.vector_store %arg9[%c0_6, %c0_7], %7 {strides = array<i32>} : memref<8x128xf32, #tpu.memory_space<vmem>>, vector<8x128xf32>,
    %c0_i32_8 = arith.constant 0 : i32
    %9 = arith.cmpi eq, %arg2, %c0_i32_8 : i32
    %10 = arith.extui %9 : i1 to i32
    %c0_i32_9 = arith.constant 0 : i32
    %11 = arith.cmpi ne, %10, %c0_i32_9 : i32
    scf.if %11 {
      %c0_10 = arith.constant 0 : index
      %c0_11 = arith.constant 0 : index
      %12 = vector.load %arg9[%c0_10, %c0_11] : memref<8x128xf32, #tpu.memory_space<vmem>>, vector<8x128xf32>
      %c0_12 = arith.constant 0 : index
      %c0_13 = arith.constant 0 : index
      %13 = vector.load %arg5[%c0_12, %c0_13] : memref<1x128xf32, #tpu.memory_space<vmem>>, vector<1x128xf32>
      %14 = vector.broadcast %13 : vector<1x128xf32> to vector<8x128xf32>
      %15 = arith.addf %12, %14 : vector<8x128xf32>
      %c0_14 = arith.constant 0 : index
      %c0_15 = arith.constant 0 : index
      %16 = vector.load %arg6[%c0_14, %c0_15] : memref<1x128xf32, #tpu.memory_space<vmem>>, vector<1x128xf32>
      %17 = vector.broadcast %16 : vector<1x128xf32> to vector<8x128xf32>
      %18 = arith.mulf %15, %17 : vector<8x128xf32>
      %c0_16 = arith.constant 0 : index
      %c0_17 = arith.constant 0 : index
      %19 = vector.load %arg7[%c0_16, %c0_17] : memref<8x128xf32, #tpu.memory_space<vmem>>, vector<8x128xf32>
      %20 = arith.addf %18, %19 : vector<8x128xf32>
      %c0_18 = arith.constant 0 : index
      %c0_19 = arith.constant 0 : index
      %21 = vector.load %arg8[%c0_18, %c0_19] : memref<8x128xf32, #tpu.memory_space<vmem>>, vector<8x128xf32>
      tpu.vector_store %arg8[%c0_18, %c0_19], %20 {strides = array<i32>} : memref<8x128xf32, #tpu.memory_space<vmem>>, vector<8x128xf32>,
    } else {
    }
    return
  }
  func.func @transform_0(%arg0: i32, %arg1: i32, %arg2: i32) -> (i32, i32) {
    %c0_i32 = arith.constant 0 : i32
    return %arg0, %arg2 : i32, i32
  }
  func.func @transform_1(%arg0: i32, %arg1: i32, %arg2: i32) -> (i32, i32) {
    %c0_i32 = arith.constant 0 : i32
    return %arg2, %arg1 : i32, i32
  }
  func.func @transform_2(%arg0: i32, %arg1: i32, %arg2: i32) -> (i32, i32) {
    %c0_i32 = arith.constant 0 : i32
    %c0_i32_0 = arith.constant 0 : i32
    return %c0_i32, %arg1 : i32, i32
  }
  func.func @transform_3(%arg0: i32, %arg1: i32, %arg2: i32) -> (i32, i32) {
    %c0_i32 = arith.constant 0 : i32
    %c0_i32_0 = arith.constant 0 : i32
    return %c0_i32, %arg1 : i32, i32
  }
  func.func @transform_4(%arg0: i32, %arg1: i32, %arg2: i32) -> (i32, i32) {
    %c0_i32 = arith.constant 0 : i32
    return %arg0, %arg1 : i32, i32
  }
  func.func @transform_5(%arg0: i32, %arg1: i32, %arg2: i32) -> (i32, i32) {
    %c0_i32 = arith.constant 0 : i32
    return %arg0, %arg1 : i32, i32
  }
}

module attributes {stable_mosaic.version = 11 : i64} {
  func.func @_ln_matmul_kernel(%arg0: i32, %arg1: i32, %arg2: memref<8x128xf32, #tpu.memory_space<vmem>>, %arg3: memref<1x128xf32, #tpu.memory_space<vmem>>, %arg4: memref<1x128xf32, #tpu.memory_space<vmem>>, %arg5: memref<128x256xf32, #tpu.memory_space<vmem>>, %arg6: memref<1x256xf32, #tpu.memory_space<vmem>>, %arg7: memref<8x256xf32, #tpu.memory_space<vmem>>, %arg8: memref<8x128xf32, #tpu.memory_space<vmem>>) attributes {dimension_semantics = [#tpu.dimension_semantics<parallel>, #tpu.dimension_semantics<arbitrary>], iteration_bounds = array<i64: 2, 1>, scalar_prefetch = 0 : i64, scratch_operands = 1 : i64, tpu.core_type = #tpu.core_type<tc>, window_params = [{transform_indices = @transform_0, window_bounds = array<i64: 8, 128>}, {pipeline_mode = #tpu.pipeline_mode<synchronous>, transform_indices = @transform_1, window_bounds = array<i64: 1, 128>}, {pipeline_mode = #tpu.pipeline_mode<synchronous>, transform_indices = @transform_2, window_bounds = array<i64: 1, 128>}, {transform_indices = @transform_3, window_bounds = array<i64: 128, 256>}, {transform_indices = @transform_4, window_bounds = array<i64: 1, 256>}, {transform_indices = @transform_5, window_bounds = array<i64: 8, 256>}]} {
    %c0_i32 = arith.constant 0 : i32
    %0 = arith.cmpi eq, %arg1, %c0_i32 : i32
    %1 = arith.extui %0 : i1 to i32
    %c0_i32_0 = arith.constant 0 : i32
    %2 = arith.cmpi ne, %1, %c0_i32_0 : i32
    scf.if %2 {
      %c0_9 = arith.constant 0 : index
      %c0_10 = arith.constant 0 : index
      %12 = vector.load %arg2[%c0_9, %c0_10] : memref<8x128xf32, #tpu.memory_space<vmem>>, vector<8x128xf32>
      %cst_11 = arith.constant dense<0.000000e+00> : vector<8xf32>
      %13 = vector.multi_reduction <add>, %12, %cst_11 [1] : vector<8x128xf32> to vector<8xf32>
      %14 = vector.shape_cast %13 : vector<8xf32> to vector<8x1xf32>
      %cst_12 = arith.constant 1.280000e+02 : f32
      %15 = vector.broadcast %cst_12 : f32 to vector<8x1xf32>
      %16 = arith.divf %14, %15 : vector<8x1xf32>
      %17 = vector.broadcast %16 : vector<8x1xf32> to vector<8x128xf32>
      %18 = arith.subf %12, %17 : vector<8x128xf32>
      %19 = arith.mulf %18, %18 : vector<8x128xf32>
      %cst_13 = arith.constant dense<0.000000e+00> : vector<8xf32>
      %20 = vector.multi_reduction <add>, %19, %cst_13 [1] : vector<8x128xf32> to vector<8xf32>
      %21 = vector.shape_cast %20 : vector<8xf32> to vector<8x1xf32>
      %cst_14 = arith.constant 1.280000e+02 : f32
      %22 = vector.broadcast %cst_14 : f32 to vector<8x1xf32>
      %23 = arith.divf %21, %22 : vector<8x1xf32>
      %cst_15 = arith.constant 9.99999974E-6 : f32
      %24 = vector.broadcast %cst_15 : f32 to vector<8x1xf32>
      %25 = arith.addf %23, %24 : vector<8x1xf32>
      %26 = math.rsqrt %25 : vector<8x1xf32>
      %27 = vector.broadcast %26 : vector<8x1xf32> to vector<8x128xf32>
      %28 = arith.mulf %18, %27 : vector<8x128xf32>
      %c0_16 = arith.constant 0 : index
      %c0_17 = arith.constant 0 : index
      %29 = vector.load %arg3[%c0_16, %c0_17] : memref<1x128xf32, #tpu.memory_space<vmem>>, vector<1x128xf32>
      %30 = vector.broadcast %29 : vector<1x128xf32> to vector<8x128xf32>
      %31 = arith.mulf %28, %30 : vector<8x128xf32>
      %c0_18 = arith.constant 0 : index
      %c0_19 = arith.constant 0 : index
      %32 = vector.load %arg4[%c0_18, %c0_19] : memref<1x128xf32, #tpu.memory_space<vmem>>, vector<1x128xf32>
      %33 = vector.broadcast %32 : vector<1x128xf32> to vector<8x128xf32>
      %34 = arith.addf %31, %33 : vector<8x128xf32>
      %c0_20 = arith.constant 0 : index
      %c0_21 = arith.constant 0 : index
      %35 = vector.load %arg8[%c0_20, %c0_21] : memref<8x128xf32, #tpu.memory_space<vmem>>, vector<8x128xf32>
      tpu.vector_store %arg8[%c0_20, %c0_21], %34 {strides = array<i32>} : memref<8x128xf32, #tpu.memory_space<vmem>>, vector<8x128xf32>,
    } else {
    }
    %c0 = arith.constant 0 : index
    %c0_1 = arith.constant 0 : index
    %3 = vector.load %arg8[%c0, %c0_1] : memref<8x128xf32, #tpu.memory_space<vmem>>, vector<8x128xf32>
    %c0_2 = arith.constant 0 : index
    %c0_3 = arith.constant 0 : index
    %4 = vector.load %arg5[%c0_2, %c0_3] : memref<128x256xf32, #tpu.memory_space<vmem>>, vector<128x256xf32>
    %cst = arith.constant dense<0.000000e+00> : vector<8x256xf32>
    %5 = tpu.matmul %3, %4, %cst {dimension_numbers = #tpu.dot_dimension_numbers<[1], [0], [0], [1], [0, 0, 1, 1], [], []>} : vector<8x128xf32>, vector<128x256xf32>, vector<8x256xf32> -> vector<8x256xf32>
    %c0_4 = arith.constant 0 : index
    %c0_5 = arith.constant 0 : index
    %6 = vector.load %arg6[%c0_4, %c0_5] : memref<1x256xf32, #tpu.memory_space<vmem>>, vector<1x256xf32>
    %7 = vector.broadcast %6 : vector<1x256xf32> to vector<8x256xf32>
    %8 = arith.addf %5, %7 : vector<8x256xf32>
    %cst_6 = arith.constant 0.000000e+00 : f32
    %9 = vector.broadcast %cst_6 : f32 to vector<8x256xf32>
    %10 = arith.maximumf %8, %9 : vector<8x256xf32>
    %c0_7 = arith.constant 0 : index
    %c0_8 = arith.constant 0 : index
    %11 = vector.load %arg7[%c0_7, %c0_8] : memref<8x256xf32, #tpu.memory_space<vmem>>, vector<8x256xf32>
    tpu.vector_store %arg7[%c0_7, %c0_8], %10 {strides = array<i32>} : memref<8x256xf32, #tpu.memory_space<vmem>>, vector<8x256xf32>,
    return
  }
  func.func @transform_0(%arg0: i32, %arg1: i32) -> (i32, i32) {
    %c0_i32 = arith.constant 0 : i32
    %c0_i32_0 = arith.constant 0 : i32
    return %arg0, %c0_i32 : i32, i32
  }
  func.func @transform_1(%arg0: i32, %arg1: i32) -> (i32, i32) {
    %c0_i32 = arith.constant 0 : i32
    %c0_i32_0 = arith.constant 0 : i32
    %c0_i32_1 = arith.constant 0 : i32
    return %c0_i32, %c0_i32_0 : i32, i32
  }
  func.func @transform_2(%arg0: i32, %arg1: i32) -> (i32, i32) {
    %c0_i32 = arith.constant 0 : i32
    %c0_i32_0 = arith.constant 0 : i32
    %c0_i32_1 = arith.constant 0 : i32
    return %c0_i32, %c0_i32_0 : i32, i32
  }
  func.func @transform_3(%arg0: i32, %arg1: i32) -> (i32, i32) {
    %c0_i32 = arith.constant 0 : i32
    %c0_i32_0 = arith.constant 0 : i32
    return %c0_i32, %arg1 : i32, i32
  }
  func.func @transform_4(%arg0: i32, %arg1: i32) -> (i32, i32) {
    %c0_i32 = arith.constant 0 : i32
    %c0_i32_0 = arith.constant 0 : i32
    return %c0_i32, %arg1 : i32, i32
  }
  func.func @transform_5(%arg0: i32, %arg1: i32) -> (i32, i32) {
    %c0_i32 = arith.constant 0 : i32
    return %arg0, %arg1 : i32, i32
  }
}

module attributes {stable_mosaic.version = 11 : i64} {
  func.func @_mm_scale_res_kernel(%arg0: i32, %arg1: i32, %arg2: i32, %arg3: memref<8x256xf32, #tpu.memory_space<vmem>>, %arg4: memref<256x128xf32, #tpu.memory_space<vmem>>, %arg5: memref<1x128xf32, #tpu.memory_space<vmem>>, %arg6: memref<1x128xf32, #tpu.memory_space<vmem>>, %arg7: memref<8x128xf32, #tpu.memory_space<vmem>>, %arg8: memref<8x128xf32, #tpu.memory_space<vmem>>, %arg9: memref<8x128xf32, #tpu.memory_space<vmem>>) attributes {dimension_semantics = [#tpu.dimension_semantics<parallel>, #tpu.dimension_semantics<parallel>, #tpu.dimension_semantics<arbitrary>], iteration_bounds = array<i64: 2, 1, 1>, scalar_prefetch = 0 : i64, scratch_operands = 1 : i64, tpu.core_type = #tpu.core_type<tc>, window_params = [{transform_indices = @transform_0, window_bounds = array<i64: 8, 256>}, {transform_indices = @transform_1, window_bounds = array<i64: 256, 128>}, {transform_indices = @transform_2, window_bounds = array<i64: 1, 128>}, {transform_indices = @transform_3, window_bounds = array<i64: 1, 128>}, {transform_indices = @transform_4, window_bounds = array<i64: 8, 128>}, {transform_indices = @transform_5, window_bounds = array<i64: 8, 128>}]} {
    %c0_i32 = arith.constant 0 : i32
    %0 = arith.cmpi eq, %arg2, %c0_i32 : i32
    %1 = arith.extui %0 : i1 to i32
    %c0_i32_0 = arith.constant 0 : i32
    %2 = arith.cmpi ne, %1, %c0_i32_0 : i32
    scf.if %2 {
      %cst_10 = arith.constant 0.000000e+00 : f32
      %12 = vector.broadcast %cst_10 : f32 to vector<8x128xf32>
      %c0_11 = arith.constant 0 : index
      %c0_12 = arith.constant 0 : index
      %13 = vector.load %arg9[%c0_11, %c0_12] : memref<8x128xf32, #tpu.memory_space<vmem>>, vector<8x128xf32>
      tpu.vector_store %arg9[%c0_11, %c0_12], %12 {strides = array<i32>} : memref<8x128xf32, #tpu.memory_space<vmem>>, vector<8x128xf32>,
    } else {
    }
    %c0 = arith.constant 0 : index
    %c0_1 = arith.constant 0 : index
    %3 = vector.load %arg9[%c0, %c0_1] : memref<8x128xf32, #tpu.memory_space<vmem>>, vector<8x128xf32>
    %c0_2 = arith.constant 0 : index
    %c0_3 = arith.constant 0 : index
    %4 = vector.load %arg3[%c0_2, %c0_3] : memref<8x256xf32, #tpu.memory_space<vmem>>, vector<8x256xf32>
    %c0_4 = arith.constant 0 : index
    %c0_5 = arith.constant 0 : index
    %5 = vector.load %arg4[%c0_4, %c0_5] : memref<256x128xf32, #tpu.memory_space<vmem>>, vector<256x128xf32>
    %cst = arith.constant dense<0.000000e+00> : vector<8x128xf32>
    %6 = tpu.matmul %4, %5, %cst {dimension_numbers = #tpu.dot_dimension_numbers<[1], [0], [0], [1], [0, 0, 1, 1], [], []>} : vector<8x256xf32>, vector<256x128xf32>, vector<8x128xf32> -> vector<8x128xf32>
    %7 = arith.addf %3, %6 : vector<8x128xf32>
    %c0_6 = arith.constant 0 : index
    %c0_7 = arith.constant 0 : index
    %8 = vector.load %arg9[%c0_6, %c0_7] : memref<8x128xf32, #tpu.memory_space<vmem>>, vector<8x128xf32>
    tpu.vector_store %arg9[%c0_6, %c0_7], %7 {strides = array<i32>} : memref<8x128xf32, #tpu.memory_space<vmem>>, vector<8x128xf32>,
    %c0_i32_8 = arith.constant 0 : i32
    %9 = arith.cmpi eq, %arg2, %c0_i32_8 : i32
    %10 = arith.extui %9 : i1 to i32
    %c0_i32_9 = arith.constant 0 : i32
    %11 = arith.cmpi ne, %10, %c0_i32_9 : i32
    scf.if %11 {
      %c0_10 = arith.constant 0 : index
      %c0_11 = arith.constant 0 : index
      %12 = vector.load %arg9[%c0_10, %c0_11] : memref<8x128xf32, #tpu.memory_space<vmem>>, vector<8x128xf32>
      %c0_12 = arith.constant 0 : index
      %c0_13 = arith.constant 0 : index
      %13 = vector.load %arg5[%c0_12, %c0_13] : memref<1x128xf32, #tpu.memory_space<vmem>>, vector<1x128xf32>
      %14 = vector.broadcast %13 : vector<1x128xf32> to vector<8x128xf32>
      %15 = arith.addf %12, %14 : vector<8x128xf32>
      %c0_14 = arith.constant 0 : index
      %c0_15 = arith.constant 0 : index
      %16 = vector.load %arg6[%c0_14, %c0_15] : memref<1x128xf32, #tpu.memory_space<vmem>>, vector<1x128xf32>
      %17 = vector.broadcast %16 : vector<1x128xf32> to vector<8x128xf32>
      %18 = arith.mulf %15, %17 : vector<8x128xf32>
      %c0_16 = arith.constant 0 : index
      %c0_17 = arith.constant 0 : index
      %19 = vector.load %arg7[%c0_16, %c0_17] : memref<8x128xf32, #tpu.memory_space<vmem>>, vector<8x128xf32>
      %20 = arith.addf %18, %19 : vector<8x128xf32>
      %c0_18 = arith.constant 0 : index
      %c0_19 = arith.constant 0 : index
      %21 = vector.load %arg8[%c0_18, %c0_19] : memref<8x128xf32, #tpu.memory_space<vmem>>, vector<8x128xf32>
      tpu.vector_store %arg8[%c0_18, %c0_19], %20 {strides = array<i32>} : memref<8x128xf32, #tpu.memory_space<vmem>>, vector<8x128xf32>,
    } else {
    }
    return
  }
  func.func @transform_0(%arg0: i32, %arg1: i32, %arg2: i32) -> (i32, i32) {
    %c0_i32 = arith.constant 0 : i32
    return %arg0, %arg2 : i32, i32
  }
  func.func @transform_1(%arg0: i32, %arg1: i32, %arg2: i32) -> (i32, i32) {
    %c0_i32 = arith.constant 0 : i32
    return %arg2, %arg1 : i32, i32
  }
  func.func @transform_2(%arg0: i32, %arg1: i32, %arg2: i32) -> (i32, i32) {
    %c0_i32 = arith.constant 0 : i32
    %c0_i32_0 = arith.constant 0 : i32
    return %c0_i32, %arg1 : i32, i32
  }
  func.func @transform_3(%arg0: i32, %arg1: i32, %arg2: i32) -> (i32, i32) {
    %c0_i32 = arith.constant 0 : i32
    %c0_i32_0 = arith.constant 0 : i32
    return %c0_i32, %arg1 : i32, i32
  }
  func.func @transform_4(%arg0: i32, %arg1: i32, %arg2: i32) -> (i32, i32) {
    %c0_i32 = arith.constant 0 : i32
    return %arg0, %arg1 : i32, i32
  }
  func.func @transform_5(%arg0: i32, %arg1: i32, %arg2: i32) -> (i32, i32) {
    %c0_i32 = arith.constant 0 : i32
    return %arg0, %arg1 : i32, i32
  }
}

module attributes {stable_mosaic.version = 11 : i64} {
  func.func @_ln_matmul_kernel(%arg0: i32, %arg1: i32, %arg2: memref<8x128xf32, #tpu.memory_space<vmem>>, %arg3: memref<1x128xf32, #tpu.memory_space<vmem>>, %arg4: memref<1x128xf32, #tpu.memory_space<vmem>>, %arg5: memref<128x128xf32, #tpu.memory_space<vmem>>, %arg6: memref<1x128xf32, #tpu.memory_space<vmem>>, %arg7: memref<8x128xf32, #tpu.memory_space<vmem>>, %arg8: memref<8x128xf32, #tpu.memory_space<vmem>>) attributes {dimension_semantics = [#tpu.dimension_semantics<parallel>, #tpu.dimension_semantics<arbitrary>], iteration_bounds = array<i64: 2, 3>, scalar_prefetch = 0 : i64, scratch_operands = 1 : i64, tpu.core_type = #tpu.core_type<tc>, window_params = [{transform_indices = @transform_0, window_bounds = array<i64: 8, 128>}, {pipeline_mode = #tpu.pipeline_mode<synchronous>, transform_indices = @transform_1, window_bounds = array<i64: 1, 128>}, {pipeline_mode = #tpu.pipeline_mode<synchronous>, transform_indices = @transform_2, window_bounds = array<i64: 1, 128>}, {transform_indices = @transform_3, window_bounds = array<i64: 128, 128>}, {transform_indices = @transform_4, window_bounds = array<i64: 1, 128>}, {transform_indices = @transform_5, window_bounds = array<i64: 8, 128>}]} {
    %c0_i32 = arith.constant 0 : i32
    %0 = arith.cmpi eq, %arg1, %c0_i32 : i32
    %1 = arith.extui %0 : i1 to i32
    %c0_i32_0 = arith.constant 0 : i32
    %2 = arith.cmpi ne, %1, %c0_i32_0 : i32
    scf.if %2 {
      %c0_8 = arith.constant 0 : index
      %c0_9 = arith.constant 0 : index
      %10 = vector.load %arg2[%c0_8, %c0_9] : memref<8x128xf32, #tpu.memory_space<vmem>>, vector<8x128xf32>
      %cst_10 = arith.constant dense<0.000000e+00> : vector<8xf32>
      %11 = vector.multi_reduction <add>, %10, %cst_10 [1] : vector<8x128xf32> to vector<8xf32>
      %12 = vector.shape_cast %11 : vector<8xf32> to vector<8x1xf32>
      %cst_11 = arith.constant 1.280000e+02 : f32
      %13 = vector.broadcast %cst_11 : f32 to vector<8x1xf32>
      %14 = arith.divf %12, %13 : vector<8x1xf32>
      %15 = vector.broadcast %14 : vector<8x1xf32> to vector<8x128xf32>
      %16 = arith.subf %10, %15 : vector<8x128xf32>
      %17 = arith.mulf %16, %16 : vector<8x128xf32>
      %cst_12 = arith.constant dense<0.000000e+00> : vector<8xf32>
      %18 = vector.multi_reduction <add>, %17, %cst_12 [1] : vector<8x128xf32> to vector<8xf32>
      %19 = vector.shape_cast %18 : vector<8xf32> to vector<8x1xf32>
      %cst_13 = arith.constant 1.280000e+02 : f32
      %20 = vector.broadcast %cst_13 : f32 to vector<8x1xf32>
      %21 = arith.divf %19, %20 : vector<8x1xf32>
      %cst_14 = arith.constant 9.99999974E-6 : f32
      %22 = vector.broadcast %cst_14 : f32 to vector<8x1xf32>
      %23 = arith.addf %21, %22 : vector<8x1xf32>
      %24 = math.rsqrt %23 : vector<8x1xf32>
      %25 = vector.broadcast %24 : vector<8x1xf32> to vector<8x128xf32>
      %26 = arith.mulf %16, %25 : vector<8x128xf32>
      %c0_15 = arith.constant 0 : index
      %c0_16 = arith.constant 0 : index
      %27 = vector.load %arg3[%c0_15, %c0_16] : memref<1x128xf32, #tpu.memory_space<vmem>>, vector<1x128xf32>
      %28 = vector.broadcast %27 : vector<1x128xf32> to vector<8x128xf32>
      %29 = arith.mulf %26, %28 : vector<8x128xf32>
      %c0_17 = arith.constant 0 : index
      %c0_18 = arith.constant 0 : index
      %30 = vector.load %arg4[%c0_17, %c0_18] : memref<1x128xf32, #tpu.memory_space<vmem>>, vector<1x128xf32>
      %31 = vector.broadcast %30 : vector<1x128xf32> to vector<8x128xf32>
      %32 = arith.addf %29, %31 : vector<8x128xf32>
      %c0_19 = arith.constant 0 : index
      %c0_20 = arith.constant 0 : index
      %33 = vector.load %arg8[%c0_19, %c0_20] : memref<8x128xf32, #tpu.memory_space<vmem>>, vector<8x128xf32>
      tpu.vector_store %arg8[%c0_19, %c0_20], %32 {strides = array<i32>} : memref<8x128xf32, #tpu.memory_space<vmem>>, vector<8x128xf32>,
    } else {
    }
    %c0 = arith.constant 0 : index
    %c0_1 = arith.constant 0 : index
    %3 = vector.load %arg8[%c0, %c0_1] : memref<8x128xf32, #tpu.memory_space<vmem>>, vector<8x128xf32>
    %c0_2 = arith.constant 0 : index
    %c0_3 = arith.constant 0 : index
    %4 = vector.load %arg5[%c0_2, %c0_3] : memref<128x128xf32, #tpu.memory_space<vmem>>, vector<128x128xf32>
    %cst = arith.constant dense<0.000000e+00> : vector<8x128xf32>
    %5 = tpu.matmul %3, %4, %cst {dimension_numbers = #tpu.dot_dimension_numbers<[1], [0], [0], [1], [0, 0, 1, 1], [], []>} : vector<8x128xf32>, vector<128x128xf32>, vector<8x128xf32> -> vector<8x128xf32>
    %c0_4 = arith.constant 0 : index
    %c0_5 = arith.constant 0 : index
    %6 = vector.load %arg6[%c0_4, %c0_5] : memref<1x128xf32, #tpu.memory_space<vmem>>, vector<1x128xf32>
    %7 = vector.broadcast %6 : vector<1x128xf32> to vector<8x128xf32>
    %8 = arith.addf %5, %7 : vector<8x128xf32>
    %c0_6 = arith.constant 0 : index
    %c0_7 = arith.constant 0 : index
    %9 = vector.load %arg7[%c0_6, %c0_7] : memref<8x128xf32, #tpu.memory_space<vmem>>, vector<8x128xf32>
    tpu.vector_store %arg7[%c0_6, %c0_7], %8 {strides = array<i32>} : memref<8x128xf32, #tpu.memory_space<vmem>>, vector<8x128xf32>,
    return
  }
  func.func @transform_0(%arg0: i32, %arg1: i32) -> (i32, i32) {
    %c0_i32 = arith.constant 0 : i32
    %c0_i32_0 = arith.constant 0 : i32
    return %arg0, %c0_i32 : i32, i32
  }
  func.func @transform_1(%arg0: i32, %arg1: i32) -> (i32, i32) {
    %c0_i32 = arith.constant 0 : i32
    %c0_i32_0 = arith.constant 0 : i32
    %c0_i32_1 = arith.constant 0 : i32
    return %c0_i32, %c0_i32_0 : i32, i32
  }
  func.func @transform_2(%arg0: i32, %arg1: i32) -> (i32, i32) {
    %c0_i32 = arith.constant 0 : i32
    %c0_i32_0 = arith.constant 0 : i32
    %c0_i32_1 = arith.constant 0 : i32
    return %c0_i32, %c0_i32_0 : i32, i32
  }
  func.func @transform_3(%arg0: i32, %arg1: i32) -> (i32, i32) {
    %c0_i32 = arith.constant 0 : i32
    %c0_i32_0 = arith.constant 0 : i32
    return %c0_i32, %arg1 : i32, i32
  }
  func.func @transform_4(%arg0: i32, %arg1: i32) -> (i32, i32) {
    %c0_i32 = arith.constant 0 : i32
    %c0_i32_0 = arith.constant 0 : i32
    return %c0_i32, %arg1 : i32, i32
  }
  func.func @transform_5(%arg0: i32, %arg1: i32) -> (i32, i32) {
    %c0_i32 = arith.constant 0 : i32
    return %arg0, %arg1 : i32, i32
  }
}

</mosaic_0001>

<llo_original>
// kernel: a_call__.10
$region0: #{a_call__.10}
  #allocation0 [shape = 'u32[]', space=smem, size = 0x4, offset = 0x4, fixed_abs, tag = 'smem constant byte address 0x4 - core index']
  #allocation1 [shape = 'u32[144,128]{1,0:T(1,128)}', space=vmem, size = 0x12000, scoped, tag = 'internal scratch']
  #allocation2 [shape = 'f32[8,128]{1,0:T(8,128)}', space=vmem, size = 0x1000, scoped, tag = 'scratch operand']
  %s0 = inlined_call_operand.vmem [shape: f32[16,128], index: 0, kind: input, shape index: {}]
  %s1 = inlined_call_operand.vmem [shape: f32[1,128], index: 1, kind: input, shape index: {}]
  %s2 = inlined_call_operand.vmem [shape: f32[1,128], index: 2, kind: input, shape index: {}]
  %s3 = inlined_call_operand.hbm [shape: f32[128,384], index: 3, kind: input, shape index: {}]
  %s4 = inlined_call_operand.vmem [shape: f32[1,384], index: 4, kind: input, shape index: {}]
  %s5 = inlined_call_operand.vmem [shape: f32[16,384], index: 5, kind: output, shape index: {}]
  %s6 = sld [smem:[#allocation0]]
  $region61: #{a_call__.10} parent=0
    _
  %s8 = ssub.s32 1, %s6
  %s9 = scalar_select 0, %s8, %s6
  $region1: #{a_call__.10} parent=0
    #allocation3 [shape = 'u8[131072]{0}', space=vmem, size = 0x20000, scoped, tag = 'input window, operand 3']
    #allocation4 [shape = 's32[2]{0}', space=sflag, size = 0x8, scoped, tag = 'scoped memory for a_call__.10']
    %10 = vsyncpa [#allocation4], 0
    %s11 = scalar_lea.sflag [#allocation4], 1
    %12 = vsyncpa %s11, 0
    loop: start=0, step=1, limit=8
    $region2: #{a_call__.10} parent=1 // loop_pre_header
      _
    $region3: #{a_call__.10} parent=1 // loop_header
      %s14 = sphi 0, %s18
      %p15 = scmp.ge.s32.totalorder %s14, 8
      %s21 = sphi 0, %s33
      %s22 = sphi 0, %s29
      %s23 = sphi 0, %s21
      %s24 = sphi 0, %s22
      %s25 = sphi 0, %s23
      %s26 = sphi 0, %s24
      %s36 = sphi 0, %s38
      %s39 = sphi 0, %s36
      %s40 = sphi 0, %s39
      %s56 = sphi 0, %s40
      %s60 = sphi 0, %s60
      %s62 = sphi 0, %s60
      %s63 = sphi 0, %s62
      %s77 = sphi 0, %s63
      %s81 = sphi 0, %s81
      %s83 = sphi 0, %s81
      %s84 = sphi 0, %s83
      %s98 = sphi 0, %s84
      %s104 = sphi 0, %s106
      %s107 = sphi 0, %s104
      %s108 = sphi 0, %s107
      %s124 = sphi 0, %s108
      %s130 = sphi 0, %s132
      %s133 = sphi 0, %s130
      %s134 = sphi 0, %s133
      %s150 = sphi 0, %s134
      %s158 = sphi 0, %s160
      %s161 = sphi 0, %s158
      %s162 = sphi 0, %s161
      %s178 = sphi 0, %s162
    $region4: #{a_call__.10} parent=1 // loop_header_branch
      %17 = sbr.rel (%p15) target = $region8
    $region5: #{a_call__.10} parent=1 // loop_body
      %s19 = ssub.s32 %s14, 1
      %s20 = ssub.s32 %s14, 2
      %s27 = sadd.s32 1, %s22
      %p28 = scmp.ge.s32.totalorder %s27, 3
      %s29 = scalar_select %p28, 0, %s27
      %s30 = sadd.s32 1, %s21
      %s31 = scalar_select %p28, %s30, %s21
      %p32 = scmp.ge.s32.totalorder %s31, 2
      %s33 = scalar_select %p32, 0, %s31
      %s34 = ssub.s32 %s21, %s33
      %p35 = scmp.eq.s32.totalorder %s34, 0
      %s37 = sadd.s32 %s36, 1
      %s38 = scalar_select %p35, %s36, %s37
      %p41 = pneg %p35
      %p42 = scmp.eq.s32.totalorder %s14, 5
      %p43 = por %p41, %p42
      %p44 = scmp.ne.s32.totalorder %s36, %s39
      %p45 = scmp.eq.s32.totalorder %s14, 0
      %p46 = por %p44, %p45
      %p47 = scmp.ne.s32.totalorder %s36, %s39
      %p48 = scmp.eq.s32.totalorder %s19, 5
      %p49 = por %p47, %p48
      %p50 = scmp.ne.s32.totalorder %s39, %s40
      %p51 = scmp.eq.s32.totalorder %s19, 0
      %p52 = por %p50, %p51
      %p53 = scmp.ne.s32.totalorder %s39, %s40
      %p54 = scmp.eq.s32.totalorder %s20, 5
      %p55 = por %p53, %p54
      %p57 = scmp.ne.s32.totalorder %s40, %s56
      %p58 = scmp.eq.s32.totalorder %s20, 0
      %p59 = por %p57, %p58
      %s61 = sadd.s32 %s60, 1
      %p64 = scmp.eq.s32.totalorder %s14, 5
      %p65 = scmp.ne.s32.totalorder %s60, %s62
      %p66 = scmp.eq.s32.totalorder %s14, 0
      %p67 = por %p65, %p66
      %p68 = scmp.ne.s32.totalorder %s60, %s62
      %p69 = scmp.eq.s32.totalorder %s19, 5
      %p70 = por %p68, %p69
      %p71 = scmp.ne.s32.totalorder %s62, %s63
      %p72 = scmp.eq.s32.totalorder %s19, 0
      %p73 = por %p71, %p72
      %p74 = scmp.ne.s32.totalorder %s62, %s63
      %p75 = scmp.eq.s32.totalorder %s20, 5
      %p76 = por %p74, %p75
      %p78 = scmp.ne.s32.totalorder %s63, %s77
      %p79 = scmp.eq.s32.totalorder %s20, 0
      %p80 = por %p78, %p79
      %s82 = sadd.s32 %s81, 1
      %p85 = scmp.eq.s32.totalorder %s14, 5
      %p86 = scmp.ne.s32.totalorder %s81, %s83
      %p87 = scmp.eq.s32.totalorder %s14, 0
      %p88 = por %p86, %p87
      %p89 = scmp.ne.s32.totalorder %s81, %s83
      %p90 = scmp.eq.s32.totalorder %s19, 5
      %p91 = por %p89, %p90
      %p92 = scmp.ne.s32.totalorder %s83, %s84
      %p93 = scmp.eq.s32.totalorder %s19, 0
      %p94 = por %p92, %p93
      %p95 = scmp.ne.s32.totalorder %s83, %s84
      %p96 = scmp.eq.s32.totalorder %s20, 5
      %p97 = por %p95, %p96
      %p99 = scmp.ne.s32.totalorder %s84, %s98
      %p100 = scmp.eq.s32.totalorder %s20, 0
      %p101 = por %p99, %p100
      %s102 = ssub.s32 %s22, %s29
      %p103 = scmp.eq.s32.totalorder %s102, 0
      %s105 = sadd.s32 %s104, 1
      %s106 = scalar_select %p103, %s104, %s105
      %p109 = pneg %p103
      %p110 = scmp.eq.s32.totalorder %s14, 5
      %p111 = por %p109, %p110
      %p112 = scmp.ne.s32.totalorder %s104, %s107
      %p113 = scmp.eq.s32.totalorder %s14, 0
      %p114 = por %p112, %p113
      %p115 = scmp.ne.s32.totalorder %s104, %s107
      %p116 = scmp.eq.s32.totalorder %s19, 5
      %p117 = por %p115, %p116
      %p118 = scmp.ne.s32.totalorder %s107, %s108
      %p119 = scmp.eq.s32.totalorder %s19, 0
      %p120 = por %p118, %p119
      %p121 = scmp.ne.s32.totalorder %s107, %s108
      %p122 = scmp.eq.s32.totalorder %s20, 5
      %p123 = por %p121, %p122
      %p125 = scmp.ne.s32.totalorder %s108, %s124
      %p126 = scmp.eq.s32.totalorder %s20, 0
      %p127 = por %p125, %p126
      %s128 = ssub.s32 %s22, %s29
      %p129 = scmp.eq.s32.totalorder %s128, 0
      %s131 = sadd.s32 %s130, 1
      %s132 = scalar_select %p129, %s130, %s131
      %p135 = pneg %p129
      %p136 = scmp.eq.s32.totalorder %s14, 5
      %p137 = por %p135, %p136
      %p138 = scmp.ne.s32.totalorder %s130, %s133
      %p139 = scmp.eq.s32.totalorder %s14, 0
      %p140 = por %p138, %p139
      %p141 = scmp.ne.s32.totalorder %s130, %s133
      %p142 = scmp.eq.s32.totalorder %s19, 5
      %p143 = por %p141, %p142
      %p144 = scmp.ne.s32.totalorder %s133, %s134
      %p145 = scmp.eq.s32.totalorder %s19, 0
      %p146 = por %p144, %p145
      %p147 = scmp.ne.s32.totalorder %s133, %s134
      %p148 = scmp.eq.s32.totalorder %s20, 5
      %p149 = por %p147, %p148
      %p151 = scmp.ne.s32.totalorder %s134, %s150
      %p152 = scmp.eq.s32.totalorder %s20, 0
      %p153 = por %p151, %p152
      %s154 = ssub.s32 %s21, %s33
      %s155 = ssub.s32 %s22, %s29
      %s156 = sor.u32 %s154, %s155
      %p157 = scmp.eq.s32.totalorder %s156, 0
      %s159 = sadd.s32 %s158, 1
      %s160 = scalar_select %p157, %s158, %s159
      %p163 = pneg %p157
      %p164 = scmp.eq.s32.totalorder %s14, 5
      %p165 = por %p163, %p164
      %p166 = scmp.ne.s32.totalorder %s158, %s161
      %p167 = scmp.eq.s32.totalorder %s14, 0
      %p168 = por %p166, %p167
      %p169 = scmp.ne.s32.totalorder %s158, %s161
      %p170 = scmp.eq.s32.totalorder %s19, 5
      %p171 = por %p169, %p170
      %p172 = scmp.ne.s32.totalorder %s161, %s162
      %p173 = scmp.eq.s32.totalorder %s19, 0
      %p174 = por %p172, %p173
      %p175 = scmp.ne.s32.totalorder %s161, %s162
      %p176 = scmp.eq.s32.totalorder %s20, 5
      %p177 = por %p175, %p176
      %p179 = scmp.ne.s32.totalorder %s162, %s178
      %p180 = scmp.eq.s32.totalorder %s20, 0
      %p181 = por %p179, %p180
      %p182 = scmp.le.s32.totalorder 1, %s14
      %p183 = scmp.lt.s32.totalorder %s14, 7
      %p184 = pnand %p182, %p183
      %p185 = pneg %p184
      // Predicated region
      $region9: #{a_call__.10} parent=5 // pred_check
        _
      $region10: #{a_call__.10} parent=5 // pred_check_branch
        %187 = sbr.rel (%p184) target = $region12
      $region11: #{a_call__.10} parent=5 // pred_region
        %s188 = ssub.s32 %s14, 1
        // Predicated region
        $region13: #{a_call__.10} parent=11 // pred_check
          %p189 = pneg %p73
        $region14: #{a_call__.10} parent=11 // pred_check_branch
          %191 = sbr.rel (%p189) target = $region16
        $region15: #{a_call__.10} parent=11 // pred_region
          _
        $region16: #{a_call__.10} parent=11 // pred_fallthru
          _
        // Predicated region
        $region17: #{a_call__.10} parent=11 // pred_check
          %p192 = pneg %p94
        $region18: #{a_call__.10} parent=11 // pred_check_branch
          %194 = sbr.rel (%p192) target = $region20
        $region19: #{a_call__.10} parent=11 // pred_region
          _
        $region20: #{a_call__.10} parent=11 // pred_fallthru
          _
      $region12: #{a_call__.10} parent=5 // pred_fallthru
        _
      %p195 = scmp.lt.s32.totalorder %s14, 6
      // Predicated region
      $region21: #{a_call__.10} parent=5 // pred_check
        %p196 = pneg %p195
      $region22: #{a_call__.10} parent=5 // pred_check_branch
        %198 = sbr.rel (%p196) target = $region24
      $region23: #{a_call__.10} parent=5 // pred_region
        // Predicated region
        $region25: #{a_call__.10} parent=23 // pred_check
          %p199 = pneg %p46
        $region26: #{a_call__.10} parent=23 // pred_check_branch
          %201 = sbr.rel (%p199) target = $region28
        $region27: #{a_call__.10} parent=23 // pred_region
          %p202 = scmp.lt.s32.totalorder %s21, 1
          %s203 = scalar_select %p202, %s21, 1
          %s204 = smul.addr %s203, 8
          %s205 = scalar_lea.vmem %s0, %s204
        $region28: #{a_call__.10} parent=23 // pred_fallthru
          _
        // Predicated region
        $region29: #{a_call__.10} parent=23 // pred_check
          %p206 = pneg %p114
        $region30: #{a_call__.10} parent=23 // pred_check_branch
          %208 = sbr.rel (%p206) target = $region32
        $region31: #{a_call__.10} parent=23 // pred_region
          %s209 = sand.u32 %s104, 1
          %s210 = scalar_lea.sflag [#allocation4], %s209
          %s211 = sand.u32 %s104, 1
          %s212 = smul.addr %s211, 128
          %s213 = scalar_lea.vmem [#allocation3], %s212
          %s215 = ssub.s32 2048, 2048
          %216 = vsyncadd %s210, %s215
          %s217 = smul.addr %s22, 128
          %s218 = scalar_lea.hbm %s3, %s217
          %s219 = sshll.u32 %s213, 4
          %s220 = int_to_ptr.vmem [resolvable:$true] %s219
          %225 = dma.hbm_to_vmem [thread:$0]  %s218, 2048, %s220, %s210, 384, 128, 8
        $region32: #{a_call__.10} parent=23 // pred_fallthru
          _
        // Predicated region
        $region33: #{a_call__.10} parent=23 // pred_check
          %p226 = pneg %p140
        $region34: #{a_call__.10} parent=23 // pred_check_branch
          %228 = sbr.rel (%p226) target = $region36
        $region35: #{a_call__.10} parent=23 // pred_region
          %p229 = scmp.lt.s32.totalorder %s22, 2
          %s230 = scalar_select %p229, %s22, 2
          %s231 = scalar_lea.vmem %s4, %s230
        $region36: #{a_call__.10} parent=23 // pred_fallthru
          _
      $region24: #{a_call__.10} parent=5 // pred_fallthru
        _
      %p232 = scmp.le.s32.totalorder 1, %s14
      %p233 = scmp.lt.s32.totalorder %s14, 7
      %p234 = pnand %p232, %p233
      %p235 = pneg %p234
      // Predicated region
      $region37: #{a_call__.10} parent=5 // pred_check
        _
      $region38: #{a_call__.10} parent=5 // pred_check_branch
        %237 = sbr.rel (%p234) target = $region40
      $region39: #{a_call__.10} parent=5 // pred_region
        %s238 = ssub.s32 %s14, 1
        %s239 = sand.u32 %s107, 1
        %s240 = scalar_lea.sflag [#allocation4], %s239
        %s241 = sand.u32 %s107, 1
        %s242 = smul.addr %s241, 128
        %s243 = scalar_lea.vmem [#allocation3], %s242
        // Predicated region
        $region41: #{a_call__.10} parent=39 // pred_check
          %p244 = pneg %p120
        $region42: #{a_call__.10} parent=39 // pred_check_branch
          %246 = sbr.rel (%p244) target = $region44
        $region43: #{a_call__.10} parent=39 // pred_region
          %247 = dma.done %s240, 2048
        $region44: #{a_call__.10} parent=39 // pred_fallthru
          _
        %p248 = scmp.lt.s32.totalorder %s23, 1
        %s249 = scalar_select %p248, %s23, 1
        %s250 = smul.addr %s249, 8
        %s251 = scalar_lea.vmem %s0, %s250
        %p252 = pneg %p52
        %p253 = pneg %p49
        %p254 = pneg %p73
        %p255 = pneg %p70
        %p256 = pneg %p94
        %p257 = pneg %p91
        %s258 = sand.u32 %s107, 1
        %s259 = scalar_lea.sflag [#allocation4], %s258
        %s260 = sand.u32 %s107, 1
        %s261 = smul.addr %s260, 128
        %s262 = scalar_lea.vmem [#allocation3], %s261
        %p263 = pneg %p120
        %p264 = pneg %p117
        %p265 = scmp.lt.s32.totalorder %s24, 2
        %s266 = scalar_select %p265, %s24, 2
        %s267 = scalar_lea.vmem %s4, %s266
        %p268 = pneg %p146
        %p269 = pneg %p143
        %p270 = pneg %p174
        %p271 = pneg %p171
        %p272 = scmp.lt.s32.totalorder %s23, 1
        %s273 = scalar_select %p272, %s23, 1
        %p274 = scmp.lt.s32.totalorder %s24, 2
        %s275 = scalar_select %p274, %s24, 2
        %s276 = smul.addr %s273, 3
        %s277 = sadd.s32 %s275, %s276
        %s278 = smul.addr %s277, 8
        %s279 = scalar_lea.vmem %s5, %s278
        %p280 = scmp.lt.s32.totalorder %s23, 1
        %s281 = scalar_select %p280, %s23, 1
        %s282 = smul.addr %s281, 8
        %s283 = scalar_lea.vmem %s0, %s282
        %p284 = scmp.lt.s32.totalorder %s24, 2
        %s285 = scalar_select %p284, %s24, 2
        %s286 = scalar_lea.vmem %s4, %s285
        %p287 = scmp.lt.s32.totalorder %s23, 1
        %s288 = scalar_select %p287, %s23, 1
        %p289 = scmp.lt.s32.totalorder %s24, 2
        %s290 = scalar_select %p289, %s24, 2
        %s291 = smul.addr %s288, 3
        %s292 = sadd.s32 %s290, %s291
        %s293 = smul.addr %s292, 8
        %s294 = scalar_lea.vmem %s5, %s293
        %p295 = scmp.eq.s32.totalorder %s24, 0
        // Predicated region
        $region45: #{a_call__.10} parent=39 // pred_check
          %p296 = pneg %p295
        $region46: #{a_call__.10} parent=39 // pred_check_branch
          %298 = sbr.rel (%p296) target = $region48
        $region47: #{a_call__.10} parent=39 // pred_region
          %v299 = vld [vmem:[%s283] sm:$0xff]
          %300 = vadd.xlane.f32.xlu0 %v299
          %v301 = vpop.xlane.xlu0 %300
          %v302 = vrcp.pop 128.0
          %v303 = vmul.f32 %v301, %v302
          %v304 = vsub.f32 %v299, %v303
          %v305 = vmul.f32 %v304, %v304
          %306 = vadd.xlane.f32.xlu0 %v305
          %v307 = vpop.xlane.xlu0 %306
          %v308 = vmul.f32 %v307, %v302
          %v309 = vadd.f32 %v308, 1e-05
          %v310 = vrsqrt.pop %v309
          %v311 = vmul.f32 %v304, %v310
          %v312 = vld [vmem:[%s1] sm:$0x1]
          %v314 = vlaneseq
          %v315 = vshrl.u32 %v314, 7
          %v316 = vsub.s32 0, %v315
          %v317 = vrot.slane %v312, %v316
          %v319 = vmul.f32 %v311, %v317
          %v320 = vld [vmem:[%s2] sm:$0x1]
          %v322 = vlaneseq
          %v323 = vshrl.u32 %v322, 7
          %v324 = vsub.s32 0, %v323
          %v325 = vrot.slane %v320, %v324
          %v327 = vadd.f32 %v319, %v325
          %328 = vst [vmem:[#allocation2] sm:$0xff] %v327
        $region48: #{a_call__.10} parent=39 // pred_fallthru
          _
        %v329 = vld [vmem:[#allocation2] sm:$0xff]
        %v330 = vld [vmem:[%s243] sm:$0xff]
        %v331 = vld [vmem:[%s243 + $0x8] sm:$0xff]
        %v332 = vld [vmem:[%s243 + $0x10] sm:$0xff]
        %v333 = vld [vmem:[%s243 + $0x18] sm:$0xff]
        %v334 = vld [vmem:[%s243 + $0x20] sm:$0xff]
        %v335 = vld [vmem:[%s243 + $0x28] sm:$0xff]
        %v336 = vld [vmem:[%s243 + $0x30] sm:$0xff]
        %v337 = vld [vmem:[%s243 + $0x38] sm:$0xff]
        %v338 = vld [vmem:[%s243 + $0x40] sm:$0xff]
        %v339 = vld [vmem:[%s243 + $0x48] sm:$0xff]
        %v340 = vld [vmem:[%s243 + $0x50] sm:$0xff]
        %v341 = vld [vmem:[%s243 + $0x58] sm:$0xff]
        %v342 = vld [vmem:[%s243 + $0x60] sm:$0xff]
        %v343 = vld [vmem:[%s243 + $0x68] sm:$0xff]
        %v344 = vld [vmem:[%s243 + $0x70] sm:$0xff]
        %v345 = vld [vmem:[%s243 + $0x78] sm:$0xff]
        %v346 = vld [vmem:[%s286] sm:$0x1]
        %v348 = vlaneseq
        %v349 = vshrl.u32 %v348, 7
        %v350 = vsub.s32 0, %v349
        %v351 = vrot.slane %v346, %v350
        %353 = vmatprep.subr.mxu0 0.0
        %354 = vmatpush1.msra.mxu0 %v330
        %355 = vmatprep.subr.mxu0 0.0
        %356 = vmatpush1.msra.mxu0 %v331
        %357 = vmatprep.subr.mxu0 0.0
        %358 = vmatpush1.msra.mxu0 %v332
        %359 = vmatprep.subr.mxu0 0.0
        %360 = vmatpush1.msra.mxu0 %v333
        %361 = vmatprep.subr.mxu0 0.0
        %362 = vmatpush1.msra.mxu0 %v334
        %363 = vmatprep.subr.mxu0 0.0
        %364 = vmatpush1.msra.mxu0 %v335
        %365 = vmatprep.subr.mxu0 0.0
        %366 = vmatpush1.msra.mxu0 %v336
        %367 = vmatprep.subr.mxu0 0.0
        %368 = vmatpush1.msra.mxu0 %v337
        %369 = vmatprep.subr.mxu0 0.0
        %370 = vmatpush1.msra.mxu0 %v338
        %371 = vmatprep.subr.mxu0 0.0
        %372 = vmatpush1.msra.mxu0 %v339
        %373 = vmatprep.subr.mxu0 0.0
        %374 = vmatpush1.msra.mxu0 %v340
        %375 = vmatprep.subr.mxu0 0.0
        %376 = vmatpush1.msra.mxu0 %v341
        %377 = vmatprep.subr.mxu0 0.0
        %378 = vmatpush1.msra.mxu0 %v342
        %379 = vmatprep.subr.mxu0 0.0
        %380 = vmatpush1.msra.mxu0 %v343
        %381 = vmatprep.subr.mxu0 0.0
        %382 = vmatpush1.msra.mxu0 %v344
        %383 = vmatprep.subr.mxu0 0.0
        %384 = vmatpush1.msra.mxu0 %v345
        %385 = vmatprep.subr.mxu0 0.0
        %386 = vmatpush1.msra.mxu0 0.0
        %387 = vmatprep.subr.mxu0 0.0
        %388 = vmatpush1.msra.mxu0 0.0
        %389 = vmatprep.subr.mxu0 0.0
        %390 = vmatpush1.msra.mxu0 0.0
        %391 = vmatprep.subr.mxu0 0.0
        %392 = vmatpush1.msra.mxu0 0.0
        %393 = vmatprep.subr.mxu0 0.0
        %394 = vmatpush1.msra.mxu0 0.0
        %395 = vmatprep.subr.mxu0 0.0
        %396 = vmatpush1.msra.mxu0 0.0
        %397 = vmatprep.subr.mxu0 0.0
        %398 = vmatpush1.msra.mxu0 0.0
        %399 = vmatprep.subr.mxu0 0.0
        %400 = vmatpush1.msra.mxu0 0.0
        %401 = vmatprep.subr.mxu0 0.0
        %402 = vmatpush1.msra.mxu0 0.0
        %403 = vmatprep.subr.mxu0 0.0
        %404 = vmatpush1.msra.mxu0 0.0
        %405 = vmatprep.subr.mxu0 0.0
        %406 = vmatpush1.msra.mxu0 0.0
        %407 = vmatprep.subr.mxu0 0.0
        %408 = vmatpush1.msra.mxu0 0.0
        %409 = vmatprep.subr.mxu0 0.0
        %410 = vmatpush1.msra.mxu0 0.0
        %411 = vmatprep.subr.mxu0 0.0
        %412 = vmatpush1.msra.mxu0 0.0
        %413 = vmatprep.subr.mxu0 0.0
        %414 = vmatpush1.msra.mxu0 0.0
        %415 = vmatprep.subr.mxu0 0.0
        %416 = vmatpush1.msra.mxu0 0.0
        %417 = vmatprep.mubr.f32.mxu0 0.0
        %418 = vmatmul.mubr.f32.gmra.mrb[0].mxu0 %v329
        %v419 = vpop.f32.mrb[0].mxu0
        %v420 = vadd.f32 %v351, %v419
        %v421 = vpop.f32.mrb[0].mxu0
        %422 = vdwg.mxu0
        %423 = vst [vmem:[%s294] sm:$0xff] %v420
        %p424 = scmp.lt.s32.totalorder %s23, 1
        %s425 = scalar_select %p424, %s23, 1
        %p426 = scmp.lt.s32.totalorder %s24, 2
        %s427 = scalar_select %p426, %s24, 2
        %s428 = smul.addr %s425, 3
        %s429 = sadd.s32 %s427, %s428
        %s430 = smul.addr %s429, 8
        %s431 = scalar_lea.vmem %s5, %s430
        // Predicated region
        $region49: #{a_call__.10} parent=39 // pred_check
          %p432 = pneg %p171
        $region50: #{a_call__.10} parent=39 // pred_check_branch
          %434 = sbr.rel (%p432) target = $region52
        $region51: #{a_call__.10} parent=39 // pred_region
          _
        $region52: #{a_call__.10} parent=39 // pred_fallthru
          _
      $region40: #{a_call__.10} parent=5 // pred_fallthru
        _
      %p435 = scmp.le.s32.totalorder 2, %s14
      // Predicated region
      $region53: #{a_call__.10} parent=5 // pred_check
        %p436 = pneg %p435
      $region54: #{a_call__.10} parent=5 // pred_check_branch
        %438 = sbr.rel (%p436) target = $region56
      $region55: #{a_call__.10} parent=5 // pred_region
        %s439 = ssub.s32 %s14, 2
        // Predicated region
        $region57: #{a_call__.10} parent=55 // pred_check
          %p440 = pneg %p177
        $region58: #{a_call__.10} parent=55 // pred_check_branch
          %442 = sbr.rel (%p440) target = $region60
        $region59: #{a_call__.10} parent=55 // pred_region
          %p443 = scmp.lt.s32.totalorder %s25, 1
          %s444 = scalar_select %p443, %s25, 1
          %p445 = scmp.lt.s32.totalorder %s26, 2
          %s446 = scalar_select %p445, %s26, 2
          %s447 = smul.addr %s444, 3
          %s448 = sadd.s32 %s446, %s447
          %s449 = smul.addr %s448, 8
          %s450 = scalar_lea.vmem %s5, %s449
        $region60: #{a_call__.10} parent=55 // pred_fallthru
          _
      $region56: #{a_call__.10} parent=5 // pred_fallthru
        _
    $region6: #{a_call__.10} parent=1 // loop_footer
      %s18 = sadd.s32 1, %s14
    $region7: #{a_call__.10} parent=1 // loop_footer_branch
      %13 = sbr.rel target = $region3
    $region8: #{a_call__.10} parent=1 // loop_exit
      _
    %451 = vsyncpa [#allocation4], 1
    %s452 = scalar_lea.sflag [#allocation4], 1
    %453 = vsyncpa %s452, 1

// kernel: a_call__.12
$region0: #{a_call__.12}
  #allocation0 [shape = 'u32[]', space=smem, size = 0x4, offset = 0x4, fixed_abs, tag = 'smem constant byte address 0x4 - core index']
  #allocation1 [shape = 'u32[144,128]{1,0:T(1,128)}', space=vmem, size = 0x12000, scoped, tag = 'internal scratch']
  #allocation2 [shape = 'f32[8,128]{1,0:T(8,128)}', space=vmem, size = 0x1000, scoped, tag = 'scratch operand']
  %s0 = inlined_call_operand.vmem [shape: f32[16,128], index: 0, kind: input, shape index: {}]
  %s1 = inlined_call_operand.vmem [shape: f32[128,128], index: 1, kind: input, shape index: {}]
  %s2 = inlined_call_operand.vmem [shape: f32[1,128], index: 2, kind: input, shape index: {}]
  %s3 = inlined_call_operand.vmem [shape: f32[1,128], index: 3, kind: input, shape index: {}]
  %s4 = inlined_call_operand.vmem [shape: f32[16,128], index: 4, kind: input, shape index: {}, may-alias: {4,5}]
  %s5 = inlined_call_operand.vmem [shape: f32[16,128], index: 5, kind: output, shape index: {}, may-alias: {4,5}]
  %s6 = sld [smem:[#allocation0]]
  $region61: #{a_call__.12} parent=0
    _
  %s8 = ssub.s32 1, %s6
  %s9 = scalar_select 0, %s8, %s6
  loop: start=0, step=1, limit=4
  $region2: #{a_call__.12} parent=0 // loop_pre_header
    _
  $region3: #{a_call__.12} parent=0 // loop_header
    %s11 = sphi 0, %s15
    %p12 = scmp.ge.s32.totalorder %s11, 4
    %s18 = sphi 0, %s37
    %s19 = sphi 0, %s33
    %s20 = sphi 0, %s29
    %s21 = sphi 0, %s18
    %s22 = sphi 0, %s19
    %s23 = sphi 0, %s20
    %s24 = sphi 0, %s21
    %s25 = sphi 0, %s22
    %s26 = sphi 0, %s23
    %s42 = sphi 0, %s44
    %s45 = sphi 0, %s42
    %s46 = sphi 0, %s45
    %s62 = sphi 0, %s46
    %s70 = sphi 0, %s72
    %s73 = sphi 0, %s70
    %s74 = sphi 0, %s73
    %s90 = sphi 0, %s74
    %s96 = sphi 0, %s98
    %s99 = sphi 0, %s96
    %s100 = sphi 0, %s99
    %s116 = sphi 0, %s100
    %s122 = sphi 0, %s124
    %s125 = sphi 0, %s122
    %s126 = sphi 0, %s125
    %s142 = sphi 0, %s126
    %s150 = sphi 0, %s152
    %s153 = sphi 0, %s150
    %s154 = sphi 0, %s153
    %s170 = sphi 0, %s154
    %s178 = sphi 0, %s180
    %s181 = sphi 0, %s178
    %s182 = sphi 0, %s181
    %s198 = sphi 0, %s182
  $region4: #{a_call__.12} parent=0 // loop_header_branch
    %14 = sbr.rel (%p12) target = $region8
  $region5: #{a_call__.12} parent=0 // loop_body
    %s16 = ssub.s32 %s11, 1
    %s17 = ssub.s32 %s11, 2
    %s27 = sadd.s32 1, %s20
    %p28 = scmp.ge.s32.totalorder %s27, 1
    %s29 = scalar_select %p28, 0, %s27
    %s30 = sadd.s32 1, %s19
    %s31 = scalar_select %p28, %s30, %s19
    %p32 = scmp.ge.s32.totalorder %s31, 1
    %s33 = scalar_select %p32, 0, %s31
    %s34 = sadd.s32 1, %s18
    %s35 = scalar_select %p32, %s34, %s18
    %p36 = scmp.ge.s32.totalorder %s35, 2
    %s37 = scalar_select %p36, 0, %s35
    %s38 = ssub.s32 %s18, %s37
    %s39 = ssub.s32 %s20, %s29
    %s40 = sor.u32 %s38, %s39
    %p41 = scmp.eq.s32.totalorder %s40, 0
    %s43 = sadd.s32 %s42, 1
    %s44 = scalar_select %p41, %s42, %s43
    %p47 = pneg %p41
    %p48 = scmp.eq.s32.totalorder %s11, 1
    %p49 = por %p47, %p48
    %p50 = scmp.ne.s32.totalorder %s42, %s45
    %p51 = scmp.eq.s32.totalorder %s11, 0
    %p52 = por %p50, %p51
    %p53 = scmp.ne.s32.totalorder %s42, %s45
    %p54 = scmp.eq.s32.totalorder %s16, 1
    %p55 = por %p53, %p54
    %p56 = scmp.ne.s32.totalorder %s45, %s46
    %p57 = scmp.eq.s32.totalorder %s16, 0
    %p58 = por %p56, %p57
    %p59 = scmp.ne.s32.totalorder %s45, %s46
    %p60 = scmp.eq.s32.totalorder %s17, 1
    %p61 = por %p59, %p60
    %p63 = scmp.ne.s32.totalorder %s46, %s62
    %p64 = scmp.eq.s32.totalorder %s17, 0
    %p65 = por %p63, %p64
    %s66 = ssub.s32 %s20, %s29
    %s67 = ssub.s32 %s19, %s33
    %s68 = sor.u32 %s66, %s67
    %p69 = scmp.eq.s32.totalorder %s68, 0
    %s71 = sadd.s32 %s70, 1
    %s72 = scalar_select %p69, %s70, %s71
    %p75 = pneg %p69
    %p76 = scmp.eq.s32.totalorder %s11, 1
    %p77 = por %p75, %p76
    %p78 = scmp.ne.s32.totalorder %s70, %s73
    %p79 = scmp.eq.s32.totalorder %s11, 0
    %p80 = por %p78, %p79
    %p81 = scmp.ne.s32.totalorder %s70, %s73
    %p82 = scmp.eq.s32.totalorder %s16, 1
    %p83 = por %p81, %p82
    %p84 = scmp.ne.s32.totalorder %s73, %s74
    %p85 = scmp.eq.s32.totalorder %s16, 0
    %p86 = por %p84, %p85
    %p87 = scmp.ne.s32.totalorder %s73, %s74
    %p88 = scmp.eq.s32.totalorder %s17, 1
    %p89 = por %p87, %p88
    %p91 = scmp.ne.s32.totalorder %s74, %s90
    %p92 = scmp.eq.s32.totalorder %s17, 0
    %p93 = por %p91, %p92
    %s94 = ssub.s32 %s19, %s33
    %p95 = scmp.eq.s32.totalorder %s94, 0
    %s97 = sadd.s32 %s96, 1
    %s98 = scalar_select %p95, %s96, %s97
    %p101 = pneg %p95
    %p102 = scmp.eq.s32.totalorder %s11, 1
    %p103 = por %p101, %p102
    %p104 = scmp.ne.s32.totalorder %s96, %s99
    %p105 = scmp.eq.s32.totalorder %s11, 0
    %p106 = por %p104, %p105
    %p107 = scmp.ne.s32.totalorder %s96, %s99
    %p108 = scmp.eq.s32.totalorder %s16, 1
    %p109 = por %p107, %p108
    %p110 = scmp.ne.s32.totalorder %s99, %s100
    %p111 = scmp.eq.s32.totalorder %s16, 0
    %p112 = por %p110, %p111
    %p113 = scmp.ne.s32.totalorder %s99, %s100
    %p114 = scmp.eq.s32.totalorder %s17, 1
    %p115 = por %p113, %p114
    %p117 = scmp.ne.s32.totalorder %s100, %s116
    %p118 = scmp.eq.s32.totalorder %s17, 0
    %p119 = por %p117, %p118
    %s120 = ssub.s32 %s19, %s33
    %p121 = scmp.eq.s32.totalorder %s120, 0
    %s123 = sadd.s32 %s122, 1
    %s124 = scalar_select %p121, %s122, %s123
    %p127 = pneg %p121
    %p128 = scmp.eq.s32.totalorder %s11, 1
    %p129 = por %p127, %p128
    %p130 = scmp.ne.s32.totalorder %s122, %s125
    %p131 = scmp.eq.s32.totalorder %s11, 0
    %p132 = por %p130, %p131
    %p133 = scmp.ne.s32.totalorder %s122, %s125
    %p134 = scmp.eq.s32.totalorder %s16, 1
    %p135 = por %p133, %p134
    %p136 = scmp.ne.s32.totalorder %s125, %s126
    %p137 = scmp.eq.s32.totalorder %s16, 0
    %p138 = por %p136, %p137
    %p139 = scmp.ne.s32.totalorder %s125, %s126
    %p140 = scmp.eq.s32.totalorder %s17, 1
    %p141 = por %p139, %p140
    %p143 = scmp.ne.s32.totalorder %s126, %s142
    %p144 = scmp.eq.s32.totalorder %s17, 0
    %p145 = por %p143, %p144
    %s146 = ssub.s32 %s18, %s37
    %s147 = ssub.s32 %s19, %s33
    %s148 = sor.u32 %s146, %s147
    %p149 = scmp.eq.s32.totalorder %s148, 0
    %s151 = sadd.s32 %s150, 1
    %s152 = scalar_select %p149, %s150, %s151
    %p155 = pneg %p149
    %p156 = scmp.eq.s32.totalorder %s11, 1
    %p157 = por %p155, %p156
    %p158 = scmp.ne.s32.totalorder %s150, %s153
    %p159 = scmp.eq.s32.totalorder %s11, 0
    %p160 = por %p158, %p159
    %p161 = scmp.ne.s32.totalorder %s150, %s153
    %p162 = scmp.eq.s32.totalorder %s16, 1
    %p163 = por %p161, %p162
    %p164 = scmp.ne.s32.totalorder %s153, %s154
    %p165 = scmp.eq.s32.totalorder %s16, 0
    %p166 = por %p164, %p165
    %p167 = scmp.ne.s32.totalorder %s153, %s154
    %p168 = scmp.eq.s32.totalorder %s17, 1
    %p169 = por %p167, %p168
    %p171 = scmp.ne.s32.totalorder %s154, %s170
    %p172 = scmp.eq.s32.totalorder %s17, 0
    %p173 = por %p171, %p172
    %s174 = ssub.s32 %s18, %s37
    %s175 = ssub.s32 %s19, %s33
    %s176 = sor.u32 %s174, %s175
    %p177 = scmp.eq.s32.totalorder %s176, 0
    %s179 = sadd.s32 %s178, 1
    %s180 = scalar_select %p177, %s178, %s179
    %p183 = pneg %p177
    %p184 = scmp.eq.s32.totalorder %s11, 1
    %p185 = por %p183, %p184
    %p186 = scmp.ne.s32.totalorder %s178, %s181
    %p187 = scmp.eq.s32.totalorder %s11, 0
    %p188 = por %p186, %p187
    %p189 = scmp.ne.s32.totalorder %s178, %s181
    %p190 = scmp.eq.s32.totalorder %s16, 1
    %p191 = por %p189, %p190
    %p192 = scmp.ne.s32.totalorder %s181, %s182
    %p193 = scmp.eq.s32.totalorder %s16, 0
    %p194 = por %p192, %p193
    %p195 = scmp.ne.s32.totalorder %s181, %s182
    %p196 = scmp.eq.s32.totalorder %s17, 1
    %p197 = por %p195, %p196
    %p199 = scmp.ne.s32.totalorder %s182, %s198
    %p200 = scmp.eq.s32.totalorder %s17, 0
    %p201 = por %p199, %p200
    %p202 = scmp.le.s32.totalorder 1, %s11
    %p203 = scmp.lt.s32.totalorder %s11, 3
    %p204 = pnand %p202, %p203
    %p205 = pneg %p204
    // Predicated region
    $region9: #{a_call__.12} parent=5 // pred_check
      _
    $region10: #{a_call__.12} parent=5 // pred_check_branch
      %207 = sbr.rel (%p204) target = $region12
    $region11: #{a_call__.12} parent=5 // pred_region
      %s208 = ssub.s32 %s11, 1
      // Predicated region
      $region13: #{a_call__.12} parent=11 // pred_check
        %p209 = pneg %p86
      $region14: #{a_call__.12} parent=11 // pred_check_branch
        %211 = sbr.rel (%p209) target = $region16
      $region15: #{a_call__.12} parent=11 // pred_region
        %s212 = smul.u32 16, %s23
        %p213 = scmp.lt.s32.totalorder %s212, 15
        %s214 = scalar_select %p213, %s212, 15
        %p215 = scmp.lt.s32.totalorder %s22, 0
        %s216 = scalar_select %p215, %s22, 0
        %s217 = sadd.s32 %s216, %s214
        %s218 = smul.addr %s217, 8
        %s219 = scalar_lea.vmem %s1, %s218
        %s220 = smul.u32 16, %s23
      $region16: #{a_call__.12} parent=11 // pred_fallthru
        _
      // Predicated region
      $region17: #{a_call__.12} parent=11 // pred_check
        %p221 = pneg %p112
      $region18: #{a_call__.12} parent=11 // pred_check_branch
        %223 = sbr.rel (%p221) target = $region20
      $region19: #{a_call__.12} parent=11 // pred_region
        %p224 = scmp.lt.s32.totalorder %s22, 0
        %s225 = scalar_select %p224, %s22, 0
        %s226 = scalar_lea.vmem %s2, %s225
      $region20: #{a_call__.12} parent=11 // pred_fallthru
        _
      // Predicated region
      $region21: #{a_call__.12} parent=11 // pred_check
        %p227 = pneg %p138
      $region22: #{a_call__.12} parent=11 // pred_check_branch
        %229 = sbr.rel (%p227) target = $region24
      $region23: #{a_call__.12} parent=11 // pred_region
        %p230 = scmp.lt.s32.totalorder %s22, 0
        %s231 = scalar_select %p230, %s22, 0
        %s232 = scalar_lea.vmem %s3, %s231
      $region24: #{a_call__.12} parent=11 // pred_fallthru
        _
    $region12: #{a_call__.12} parent=5 // pred_fallthru
      _
    %p233 = scmp.lt.s32.totalorder %s11, 2
    // Predicated region
    $region25: #{a_call__.12} parent=5 // pred_check
      %p234 = pneg %p233
    $region26: #{a_call__.12} parent=5 // pred_check_branch
      %236 = sbr.rel (%p234) target = $region28
    $region27: #{a_call__.12} parent=5 // pred_region
      // Predicated region
      $region29: #{a_call__.12} parent=27 // pred_check
        %p237 = pneg %p52
      $region30: #{a_call__.12} parent=27 // pred_check_branch
        %239 = sbr.rel (%p237) target = $region32
      $region31: #{a_call__.12} parent=27 // pred_region
        %p240 = scmp.lt.s32.totalorder %s18, 1
        %s241 = scalar_select %p240, %s18, 1
        %p242 = scmp.lt.s32.totalorder %s20, 0
        %s243 = scalar_select %p242, %s20, 0
        %s244 = sadd.s32 %s243, %s241
        %s245 = smul.addr %s244, 8
        %s246 = scalar_lea.vmem %s0, %s245
      $region32: #{a_call__.12} parent=27 // pred_fallthru
        _
      // Predicated region
      $region33: #{a_call__.12} parent=27 // pred_check
        %p247 = pneg %p160
      $region34: #{a_call__.12} parent=27 // pred_check_branch
        %249 = sbr.rel (%p247) target = $region36
      $region35: #{a_call__.12} parent=27 // pred_region
        %p250 = scmp.lt.s32.totalorder %s18, 1
        %s251 = scalar_select %p250, %s18, 1
        %p252 = scmp.lt.s32.totalorder %s19, 0
        %s253 = scalar_select %p252, %s19, 0
        %s254 = sadd.s32 %s253, %s251
        %s255 = smul.addr %s254, 8
        %s256 = scalar_lea.vmem %s4, %s255
      $region36: #{a_call__.12} parent=27 // pred_fallthru
        _
    $region28: #{a_call__.12} parent=5 // pred_fallthru
      _
    %p257 = scmp.le.s32.totalorder 1, %s11
    %p258 = scmp.lt.s32.totalorder %s11, 3
    %p259 = pnand %p257, %p258
    %p260 = pneg %p259
    // Predicated region
    $region37: #{a_call__.12} parent=5 // pred_check
      _
    $region38: #{a_call__.12} parent=5 // pred_check_branch
      %262 = sbr.rel (%p259) target = $region40
    $region39: #{a_call__.12} parent=5 // pred_region
      %s263 = ssub.s32 %s11, 1
      %p264 = scmp.lt.s32.totalorder %s21, 1
      %s265 = scalar_select %p264, %s21, 1
      %p266 = scmp.lt.s32.totalorder %s23, 0
      %s267 = scalar_select %p266, %s23, 0
      %s268 = sadd.s32 %s267, %s265
      %s269 = smul.addr %s268, 8
      %s270 = scalar_lea.vmem %s0, %s269
      %p271 = pneg %p58
      %p272 = pneg %p55
      %s273 = smul.u32 16, %s23
      %p274 = scmp.lt.s32.totalorder %s273, 15
      %s275 = scalar_select %p274, %s273, 15
      %p276 = scmp.lt.s32.totalorder %s22, 0
      %s277 = scalar_select %p276, %s22, 0
      %s278 = sadd.s32 %s277, %s275
      %s279 = smul.addr %s278, 8
      %s280 = scalar_lea.vmem %s1, %s279
      %p281 = pneg %p86
      %p282 = pneg %p83
      %p283 = scmp.lt.s32.totalorder %s22, 0
      %s284 = scalar_select %p283, %s22, 0
      %s285 = scalar_lea.vmem %s2, %s284
      %p286 = pneg %p112
      %p287 = pneg %p109
      %p288 = scmp.lt.s32.totalorder %s22, 0
      %s289 = scalar_select %p288, %s22, 0
      %s290 = scalar_lea.vmem %s3, %s289
      %p291 = pneg %p138
      %p292 = pneg %p135
      %p293 = scmp.lt.s32.totalorder %s21, 1
      %s294 = scalar_select %p293, %s21, 1
      %p295 = scmp.lt.s32.totalorder %s22, 0
      %s296 = scalar_select %p295, %s22, 0
      %s297 = sadd.s32 %s296, %s294
      %s298 = smul.addr %s297, 8
      %s299 = scalar_lea.vmem %s4, %s298
      %p300 = pneg %p166
      %p301 = pneg %p163
      %p302 = pneg %p194
      %p303 = pneg %p191
      %p304 = scmp.lt.s32.totalorder %s21, 1
      %s305 = scalar_select %p304, %s21, 1
      %p306 = scmp.lt.s32.totalorder %s22, 0
      %s307 = scalar_select %p306, %s22, 0
      %s308 = sadd.s32 %s307, %s305
      %s309 = smul.addr %s308, 8
      %s310 = scalar_lea.vmem %s5, %s309
      %p311 = scmp.lt.s32.totalorder %s21, 1
      %s312 = scalar_select %p311, %s21, 1
      %p313 = scmp.lt.s32.totalorder %s23, 0
      %s314 = scalar_select %p313, %s23, 0
      %s315 = sadd.s32 %s314, %s312
      %s316 = smul.addr %s315, 8
      %s317 = scalar_lea.vmem %s0, %s316
      %s318 = smul.u32 16, %s23
      %p319 = scmp.lt.s32.totalorder %s318, 15
      %s320 = scalar_select %p319, %s318, 15
      %p321 = scmp.lt.s32.totalorder %s22, 0
      %s322 = scalar_select %p321, %s22, 0
      %s323 = sadd.s32 %s322, %s320
      %s324 = smul.addr %s323, 8
      %s325 = scalar_lea.vmem %s1, %s324
      %s326 = smul.u32 16, %s23
      %p327 = scmp.lt.s32.totalorder %s22, 0
      %s328 = scalar_select %p327, %s22, 0
      %s329 = scalar_lea.vmem %s2, %s328
      %p330 = scmp.lt.s32.totalorder %s22, 0
      %s331 = scalar_select %p330, %s22, 0
      %s332 = scalar_lea.vmem %s3, %s331
      %p333 = scmp.lt.s32.totalorder %s21, 1
      %s334 = scalar_select %p333, %s21, 1
      %p335 = scmp.lt.s32.totalorder %s22, 0
      %s336 = scalar_select %p335, %s22, 0
      %s337 = sadd.s32 %s336, %s334
      %s338 = smul.addr %s337, 8
      %s339 = scalar_lea.vmem %s4, %s338
      %p340 = scmp.lt.s32.totalorder %s21, 1
      %s341 = scalar_select %p340, %s21, 1
      %p342 = scmp.lt.s32.totalorder %s22, 0
      %s343 = scalar_select %p342, %s22, 0
      %s344 = sadd.s32 %s343, %s341
      %s345 = smul.addr %s344, 8
      %s346 = scalar_lea.vmem %s5, %s345
      %p347 = scmp.eq.s32.totalorder %s23, 0
      // Predicated region
      $region41: #{a_call__.12} parent=39 // pred_check
        %p348 = pneg %p347
      $region42: #{a_call__.12} parent=39 // pred_check_branch
        %350 = sbr.rel (%p348) target = $region44
      $region43: #{a_call__.12} parent=39 // pred_region
        %351 = vst [vmem:[#allocation2] sm:$0xff] 0.0
      $region44: #{a_call__.12} parent=39 // pred_fallthru
        _
      %v352 = vld [vmem:[#allocation2] sm:$0xff]
      %v353 = vld [vmem:[%s317] sm:$0xff]
      %v354 = vld [vmem:[%s325] sm:$0xff]
      %v355 = vld [vmem:[%s325 + $0x8] sm:$0xff]
      %v356 = vld [vmem:[%s325 + $0x10] sm:$0xff]
      %v357 = vld [vmem:[%s325 + $0x18] sm:$0xff]
      %v358 = vld [vmem:[%s325 + $0x20] sm:$0xff]
      %v359 = vld [vmem:[%s325 + $0x28] sm:$0xff]
      %v360 = vld [vmem:[%s325 + $0x30] sm:$0xff]
      %v361 = vld [vmem:[%s325 + $0x38] sm:$0xff]
      %v362 = vld [vmem:[%s325 + $0x40] sm:$0xff]
      %v363 = vld [vmem:[%s325 + $0x48] sm:$0xff]
      %v364 = vld [vmem:[%s325 + $0x50] sm:$0xff]
      %v365 = vld [vmem:[%s325 + $0x58] sm:$0xff]
      %v366 = vld [vmem:[%s325 + $0x60] sm:$0xff]
      %v367 = vld [vmem:[%s325 + $0x68] sm:$0xff]
      %v368 = vld [vmem:[%s325 + $0x70] sm:$0xff]
      %v369 = vld [vmem:[%s325 + $0x78] sm:$0xff]
      %370 = vmatprep.subr.mxu0 0.0
      %371 = vmatpush1.msra.mxu0 %v354
      %372 = vmatprep.subr.mxu0 0.0
      %373 = vmatpush1.msra.mxu0 %v355
      %374 = vmatprep.subr.mxu0 0.0
      %375 = vmatpush1.msra.mxu0 %v356
      %376 = vmatprep.subr.mxu0 0.0
      %377 = vmatpush1.msra.mxu0 %v357
      %378 = vmatprep.subr.mxu0 0.0
      %379 = vmatpush1.msra.mxu0 %v358
      %380 = vmatprep.subr.mxu0 0.0
      %381 = vmatpush1.msra.mxu0 %v359
      %382 = vmatprep.subr.mxu0 0.0
      %383 = vmatpush1.msra.mxu0 %v360
      %384 = vmatprep.subr.mxu0 0.0
      %385 = vmatpush1.msra.mxu0 %v361
      %386 = vmatprep.subr.mxu0 0.0
      %387 = vmatpush1.msra.mxu0 %v362
      %388 = vmatprep.subr.mxu0 0.0
      %389 = vmatpush1.msra.mxu0 %v363
      %390 = vmatprep.subr.mxu0 0.0
      %391 = vmatpush1.msra.mxu0 %v364
      %392 = vmatprep.subr.mxu0 0.0
      %393 = vmatpush1.msra.mxu0 %v365
      %394 = vmatprep.subr.mxu0 0.0
      %395 = vmatpush1.msra.mxu0 %v366
      %396 = vmatprep.subr.mxu0 0.0
      %397 = vmatpush1.msra.mxu0 %v367
      %398 = vmatprep.subr.mxu0 0.0
      %399 = vmatpush1.msra.mxu0 %v368
      %400 = vmatprep.subr.mxu0 0.0
      %401 = vmatpush1.msra.mxu0 %v369
      %402 = vmatprep.subr.mxu0 0.0
      %403 = vmatpush1.msra.mxu0 0.0
      %404 = vmatprep.subr.mxu0 0.0
      %405 = vmatpush1.msra.mxu0 0.0
      %406 = vmatprep.subr.mxu0 0.0
      %407 = vmatpush1.msra.mxu0 0.0
      %408 = vmatprep.subr.mxu0 0.0
      %409 = vmatpush1.msra.mxu0 0.0
      %410 = vmatprep.subr.mxu0 0.0
      %411 = vmatpush1.msra.mxu0 0.0
      %412 = vmatprep.subr.mxu0 0.0
      %413 = vmatpush1.msra.mxu0 0.0
      %414 = vmatprep.subr.mxu0 0.0
      %415 = vmatpush1.msra.mxu0 0.0
      %416 = vmatprep.subr.mxu0 0.0
      %417 = vmatpush1.msra.mxu0 0.0
      %418 = vmatprep.subr.mxu0 0.0
      %419 = vmatpush1.msra.mxu0 0.0
      %420 = vmatprep.subr.mxu0 0.0
      %421 = vmatpush1.msra.mxu0 0.0
      %422 = vmatprep.subr.mxu0 0.0
      %423 = vmatpush1.msra.mxu0 0.0
      %424 = vmatprep.subr.mxu0 0.0
      %425 = vmatpush1.msra.mxu0 0.0
      %426 = vmatprep.subr.mxu0 0.0
      %427 = vmatpush1.msra.mxu0 0.0
      %428 = vmatprep.subr.mxu0 0.0
      %429 = vmatpush1.msra.mxu0 0.0
      %430 = vmatprep.subr.mxu0 0.0
      %431 = vmatpush1.msra.mxu0 0.0
      %432 = vmatprep.subr.mxu0 0.0
      %433 = vmatpush1.msra.mxu0 0.0
      %434 = vmatprep.mubr.f32.mxu0 0.0
      %435 = vmatmul.mubr.f32.gmra.mrb[0].mxu0 %v353
      %v436 = vpop.f32.mrb[0].mxu0
      %v437 = vadd.f32 0.0, %v436
      %v438 = vpop.f32.mrb[0].mxu0
      %439 = vdwg.mxu0
      %v440 = vadd.f32 %v352, %v437
      %441 = vst [vmem:[#allocation2] sm:$0xff] %v440
      // Predicated region
      $region45: #{a_call__.12} parent=39 // pred_check
        %p442 = pneg %p347
      $region46: #{a_call__.12} parent=39 // pred_check_branch
        %444 = sbr.rel (%p442) target = $region48
      $region47: #{a_call__.12} parent=39 // pred_region
        %v445 = vld [vmem:[#allocation2] sm:$0xff]
        %v446 = vld [vmem:[%s329] sm:$0x1]
        %v448 = vlaneseq
        %v449 = vshrl.u32 %v448, 7
        %v450 = vsub.s32 0, %v449
        %v451 = vrot.slane %v446, %v450
        %v453 = vadd.f32 %v445, %v451
        %v454 = vld [vmem:[%s332] sm:$0x1]
        %v456 = vlaneseq
        %v457 = vshrl.u32 %v456, 7
        %v458 = vsub.s32 0, %v457
        %v459 = vrot.slane %v454, %v458
        %v461 = vmul.f32 %v453, %v459
        %v462 = vld [vmem:[%s339] sm:$0xff]
        %v463 = vadd.f32 %v461, %v462
        %464 = vst [vmem:[%s346] sm:$0xff] %v463
      $region48: #{a_call__.12} parent=39 // pred_fallthru
        _
      %p465 = scmp.lt.s32.totalorder %s21, 1
      %s466 = scalar_select %p465, %s21, 1
      %p467 = scmp.lt.s32.totalorder %s22, 0
      %s468 = scalar_select %p467, %s22, 0
      %s469 = sadd.s32 %s468, %s466
      %s470 = smul.addr %s469, 8
      %s471 = scalar_lea.vmem %s5, %s470
      // Predicated region
      $region49: #{a_call__.12} parent=39 // pred_check
        %p472 = pneg %p191
      $region50: #{a_call__.12} parent=39 // pred_check_branch
        %474 = sbr.rel (%p472) target = $region52
      $region51: #{a_call__.12} parent=39 // pred_region
        _
      $region52: #{a_call__.12} parent=39 // pred_fallthru
        _
    $region40: #{a_call__.12} parent=5 // pred_fallthru
      _
    %p475 = scmp.le.s32.totalorder 2, %s11
    // Predicated region
    $region53: #{a_call__.12} parent=5 // pred_check
      %p476 = pneg %p475
    $region54: #{a_call__.12} parent=5 // pred_check_branch
      %478 = sbr.rel (%p476) target = $region56
    $region55: #{a_call__.12} parent=5 // pred_region
      %s479 = ssub.s32 %s11, 2
      // Predicated region
      $region57: #{a_call__.12} parent=55 // pred_check
        %p480 = pneg %p197
      $region58: #{a_call__.12} parent=55 // pred_check_branch
        %482 = sbr.rel (%p480) target = $region60
      $region59: #{a_call__.12} parent=55 // pred_region
        %p483 = scmp.lt.s32.totalorder %s24, 1
        %s484 = scalar_select %p483, %s24, 1
        %p485 = scmp.lt.s32.totalorder %s25, 0
        %s486 = scalar_select %p485, %s25, 0
        %s487 = sadd.s32 %s486, %s484
        %s488 = smul.addr %s487, 8
        %s489 = scalar_lea.vmem %s5, %s488
      $region60: #{a_call__.12} parent=55 // pred_fallthru
        _
    $region56: #{a_call__.12} parent=5 // pred_fallthru
      _
  $region6: #{a_call__.12} parent=0 // loop_footer
    %s15 = sadd.s32 1, %s11
  $region7: #{a_call__.12} parent=0 // loop_footer_branch
    %10 = sbr.rel target = $region3
  $region8: #{a_call__.12} parent=0 // loop_exit
    _

// kernel: a_call__.11
$region0: #{a_call__.11}
  #allocation0 [shape = 'u32[]', space=smem, size = 0x4, offset = 0x4, fixed_abs, tag = 'smem constant byte address 0x4 - core index']
  #allocation1 [shape = 'u32[144,128]{1,0:T(1,128)}', space=vmem, size = 0x12000, scoped, tag = 'internal scratch']
  %s0 = inlined_call_operand.vmem [shape: f32[2,8,384], index: 0, kind: input, shape index: {}, may-alias: {0,1,2}]
  %s1 = inlined_call_operand.vmem [shape: f32[2,8,384], index: 1, kind: input, shape index: {}, may-alias: {0,1,2}]
  %s2 = inlined_call_operand.vmem [shape: f32[2,8,384], index: 2, kind: input, shape index: {}, may-alias: {0,1,2}]
  %s3 = inlined_call_operand.vmem [shape: f32[2,8,128], index: 3, kind: output, shape index: {}]
  %s4 = sld [smem:[#allocation0]]
  $region45: #{a_call__.11} parent=0
    _
  %s6 = ssub.s32 1, %s4
  %s7 = scalar_select 0, %s6, %s4
  loop: start=0, step=1, limit=4
  $region2: #{a_call__.11} parent=0 // loop_pre_header
    _
  $region3: #{a_call__.11} parent=0 // loop_header
    %s9 = sphi 0, %s13
    %p10 = scmp.ge.s32.totalorder %s9, 4
    %s16 = sphi 0, %s28
    %s17 = sphi 0, %s24
    %s18 = sphi 0, %s16
    %s19 = sphi 0, %s17
    %s20 = sphi 0, %s18
    %s21 = sphi 0, %s19
    %s33 = sphi 0, %s35
    %s36 = sphi 0, %s33
    %s37 = sphi 0, %s36
    %s53 = sphi 0, %s37
    %s63 = sphi 0, %s65
    %s66 = sphi 0, %s63
    %s67 = sphi 0, %s66
    %s83 = sphi 0, %s67
    %s93 = sphi 0, %s95
    %s96 = sphi 0, %s93
    %s97 = sphi 0, %s96
    %s113 = sphi 0, %s97
    %s121 = sphi 0, %s123
    %s124 = sphi 0, %s121
    %s125 = sphi 0, %s124
    %s141 = sphi 0, %s125
  $region4: #{a_call__.11} parent=0 // loop_header_branch
    %12 = sbr.rel (%p10) target = $region8
  $region5: #{a_call__.11} parent=0 // loop_body
    %s14 = ssub.s32 %s9, 1
    %s15 = ssub.s32 %s9, 2
    %s22 = sadd.s32 1, %s17
    %p23 = scmp.ge.s32.totalorder %s22, 1
    %s24 = scalar_select %p23, 0, %s22
    %s25 = sadd.s32 1, %s16
    %s26 = scalar_select %p23, %s25, %s16
    %p27 = scmp.ge.s32.totalorder %s26, 2
    %s28 = scalar_select %p27, 0, %s26
    %s29 = ssub.s32 %s16, %s28
    %s30 = ssub.s32 %s17, %s24
    %s31 = sor.u32 %s29, %s30
    %p32 = scmp.eq.s32.totalorder %s31, 0
    %s34 = sadd.s32 %s33, 1
    %s35 = scalar_select %p32, %s33, %s34
    %p38 = pneg %p32
    %p39 = scmp.eq.s32.totalorder %s9, 1
    %p40 = por %p38, %p39
    %p41 = scmp.ne.s32.totalorder %s33, %s36
    %p42 = scmp.eq.s32.totalorder %s9, 0
    %p43 = por %p41, %p42
    %p44 = scmp.ne.s32.totalorder %s33, %s36
    %p45 = scmp.eq.s32.totalorder %s14, 1
    %p46 = por %p44, %p45
    %p47 = scmp.ne.s32.totalorder %s36, %s37
    %p48 = scmp.eq.s32.totalorder %s14, 0
    %p49 = por %p47, %p48
    %p50 = scmp.ne.s32.totalorder %s36, %s37
    %p51 = scmp.eq.s32.totalorder %s15, 1
    %p52 = por %p50, %p51
    %p54 = scmp.ne.s32.totalorder %s37, %s53
    %p55 = scmp.eq.s32.totalorder %s15, 0
    %p56 = por %p54, %p55
    %s57 = sadd.s32 %s17, 1
    %s58 = sadd.s32 %s24, 1
    %s59 = ssub.s32 %s16, %s28
    %s60 = ssub.s32 %s57, %s58
    %s61 = sor.u32 %s59, %s60
    %p62 = scmp.eq.s32.totalorder %s61, 0
    %s64 = sadd.s32 %s63, 1
    %s65 = scalar_select %p62, %s63, %s64
    %p68 = pneg %p62
    %p69 = scmp.eq.s32.totalorder %s9, 1
    %p70 = por %p68, %p69
    %p71 = scmp.ne.s32.totalorder %s63, %s66
    %p72 = scmp.eq.s32.totalorder %s9, 0
    %p73 = por %p71, %p72
    %p74 = scmp.ne.s32.totalorder %s63, %s66
    %p75 = scmp.eq.s32.totalorder %s14, 1
    %p76 = por %p74, %p75
    %p77 = scmp.ne.s32.totalorder %s66, %s67
    %p78 = scmp.eq.s32.totalorder %s14, 0
    %p79 = por %p77, %p78
    %p80 = scmp.ne.s32.totalorder %s66, %s67
    %p81 = scmp.eq.s32.totalorder %s15, 1
    %p82 = por %p80, %p81
    %p84 = scmp.ne.s32.totalorder %s67, %s83
    %p85 = scmp.eq.s32.totalorder %s15, 0
    %p86 = por %p84, %p85
    %s87 = sadd.s32 %s17, 2
    %s88 = sadd.s32 %s24, 2
    %s89 = ssub.s32 %s16, %s28
    %s90 = ssub.s32 %s87, %s88
    %s91 = sor.u32 %s89, %s90
    %p92 = scmp.eq.s32.totalorder %s91, 0
    %s94 = sadd.s32 %s93, 1
    %s95 = scalar_select %p92, %s93, %s94
    %p98 = pneg %p92
    %p99 = scmp.eq.s32.totalorder %s9, 1
    %p100 = por %p98, %p99
    %p101 = scmp.ne.s32.totalorder %s93, %s96
    %p102 = scmp.eq.s32.totalorder %s9, 0
    %p103 = por %p101, %p102
    %p104 = scmp.ne.s32.totalorder %s93, %s96
    %p105 = scmp.eq.s32.totalorder %s14, 1
    %p106 = por %p104, %p105
    %p107 = scmp.ne.s32.totalorder %s96, %s97
    %p108 = scmp.eq.s32.totalorder %s14, 0
    %p109 = por %p107, %p108
    %p110 = scmp.ne.s32.totalorder %s96, %s97
    %p111 = scmp.eq.s32.totalorder %s15, 1
    %p112 = por %p110, %p111
    %p114 = scmp.ne.s32.totalorder %s97, %s113
    %p115 = scmp.eq.s32.totalorder %s15, 0
    %p116 = por %p114, %p115
    %s117 = ssub.s32 %s16, %s28
    %s118 = ssub.s32 %s17, %s24
    %s119 = sor.u32 %s117, %s118
    %p120 = scmp.eq.s32.totalorder %s119, 0
    %s122 = sadd.s32 %s121, 1
    %s123 = scalar_select %p120, %s121, %s122
    %p126 = pneg %p120
    %p127 = scmp.eq.s32.totalorder %s9, 1
    %p128 = por %p126, %p127
    %p129 = scmp.ne.s32.totalorder %s121, %s124
    %p130 = scmp.eq.s32.totalorder %s9, 0
    %p131 = por %p129, %p130
    %p132 = scmp.ne.s32.totalorder %s121, %s124
    %p133 = scmp.eq.s32.totalorder %s14, 1
    %p134 = por %p132, %p133
    %p135 = scmp.ne.s32.totalorder %s124, %s125
    %p136 = scmp.eq.s32.totalorder %s14, 0
    %p137 = por %p135, %p136
    %p138 = scmp.ne.s32.totalorder %s124, %s125
    %p139 = scmp.eq.s32.totalorder %s15, 1
    %p140 = por %p138, %p139
    %p142 = scmp.ne.s32.totalorder %s125, %s141
    %p143 = scmp.eq.s32.totalorder %s15, 0
    %p144 = por %p142, %p143
    %p145 = scmp.le.s32.totalorder 1, %s9
    %p146 = scmp.lt.s32.totalorder %s9, 3
    %p147 = pnand %p145, %p146
    %p148 = pneg %p147
    // Predicated region
    $region9: #{a_call__.11} parent=5 // pred_check
      _
    $region10: #{a_call__.11} parent=5 // pred_check_branch
      %150 = sbr.rel (%p147) target = $region12
    $region11: #{a_call__.11} parent=5 // pred_region
      %s151 = ssub.s32 %s9, 1
    $region12: #{a_call__.11} parent=5 // pred_fallthru
      _
    %p152 = scmp.lt.s32.totalorder %s9, 2
    // Predicated region
    $region13: #{a_call__.11} parent=5 // pred_check
      %p153 = pneg %p152
    $region14: #{a_call__.11} parent=5 // pred_check_branch
      %155 = sbr.rel (%p153) target = $region16
    $region15: #{a_call__.11} parent=5 // pred_region
      // Predicated region
      $region17: #{a_call__.11} parent=15 // pred_check
        %p156 = pneg %p43
      $region18: #{a_call__.11} parent=15 // pred_check_branch
        %158 = sbr.rel (%p156) target = $region20
      $region19: #{a_call__.11} parent=15 // pred_region
        %p159 = scmp.lt.s32.totalorder %s16, 1
        %s160 = scalar_select %p159, %s16, 1
        %p161 = scmp.lt.s32.totalorder %s17, 2
        %s162 = scalar_select %p161, %s17, 2
        %s163 = smul.addr %s160, 3
        %s164 = sadd.s32 %s162, %s163
        %s165 = smul.addr %s164, 8
        %s166 = scalar_lea.vmem %s0, %s165
      $region20: #{a_call__.11} parent=15 // pred_fallthru
        _
      // Predicated region
      $region21: #{a_call__.11} parent=15 // pred_check
        %p167 = pneg %p73
      $region22: #{a_call__.11} parent=15 // pred_check_branch
        %169 = sbr.rel (%p167) target = $region24
      $region23: #{a_call__.11} parent=15 // pred_region
        %s170 = sadd.s32 %s17, 1
        %p171 = scmp.lt.s32.totalorder %s16, 1
        %s172 = scalar_select %p171, %s16, 1
        %p173 = scmp.lt.s32.totalorder %s170, 2
        %s174 = scalar_select %p173, %s170, 2
        %s175 = smul.addr %s172, 3
        %s176 = sadd.s32 %s174, %s175
        %s177 = smul.addr %s176, 8
        %s178 = scalar_lea.vmem %s1, %s177
        %s179 = sadd.s32 %s17, 1
      $region24: #{a_call__.11} parent=15 // pred_fallthru
        _
      // Predicated region
      $region25: #{a_call__.11} parent=15 // pred_check
        %p180 = pneg %p103
      $region26: #{a_call__.11} parent=15 // pred_check_branch
        %182 = sbr.rel (%p180) target = $region28
      $region27: #{a_call__.11} parent=15 // pred_region
        %s183 = sadd.s32 %s17, 2
        %p184 = scmp.lt.s32.totalorder %s16, 1
        %s185 = scalar_select %p184, %s16, 1
        %p186 = scmp.lt.s32.totalorder %s183, 2
        %s187 = scalar_select %p186, %s183, 2
        %s188 = smul.addr %s185, 3
        %s189 = sadd.s32 %s187, %s188
        %s190 = smul.addr %s189, 8
        %s191 = scalar_lea.vmem %s2, %s190
        %s192 = sadd.s32 %s17, 2
      $region28: #{a_call__.11} parent=15 // pred_fallthru
        _
    $region16: #{a_call__.11} parent=5 // pred_fallthru
      _
    %p193 = scmp.le.s32.totalorder 1, %s9
    %p194 = scmp.lt.s32.totalorder %s9, 3
    %p195 = pnand %p193, %p194
    %p196 = pneg %p195
    // Predicated region
    $region29: #{a_call__.11} parent=5 // pred_check
      _
    $region30: #{a_call__.11} parent=5 // pred_check_branch
      %198 = sbr.rel (%p195) target = $region32
    $region31: #{a_call__.11} parent=5 // pred_region
      %s199 = ssub.s32 %s9, 1
      %p200 = scmp.lt.s32.totalorder %s18, 1
      %s201 = scalar_select %p200, %s18, 1
      %p202 = scmp.lt.s32.totalorder %s19, 2
      %s203 = scalar_select %p202, %s19, 2
      %s204 = smul.addr %s201, 3
      %s205 = sadd.s32 %s203, %s204
      %s206 = smul.addr %s205, 8
      %s207 = scalar_lea.vmem %s0, %s206
      %p208 = pneg %p49
      %p209 = pneg %p46
      %s210 = sadd.s32 %s19, 1
      %p211 = scmp.lt.s32.totalorder %s18, 1
      %s212 = scalar_select %p211, %s18, 1
      %p213 = scmp.lt.s32.totalorder %s210, 2
      %s214 = scalar_select %p213, %s210, 2
      %s215 = smul.addr %s212, 3
      %s216 = sadd.s32 %s214, %s215
      %s217 = smul.addr %s216, 8
      %s218 = scalar_lea.vmem %s1, %s217
      %p219 = pneg %p79
      %p220 = pneg %p76
      %s221 = sadd.s32 %s19, 2
      %p222 = scmp.lt.s32.totalorder %s18, 1
      %s223 = scalar_select %p222, %s18, 1
      %p224 = scmp.lt.s32.totalorder %s221, 2
      %s225 = scalar_select %p224, %s221, 2
      %s226 = smul.addr %s223, 3
      %s227 = sadd.s32 %s225, %s226
      %s228 = smul.addr %s227, 8
      %s229 = scalar_lea.vmem %s2, %s228
      %p230 = pneg %p109
      %p231 = pneg %p106
      %p232 = pneg %p137
      %p233 = pneg %p134
      %p234 = scmp.lt.s32.totalorder %s18, 1
      %s235 = scalar_select %p234, %s18, 1
      %p236 = scmp.lt.s32.totalorder %s19, 0
      %s237 = scalar_select %p236, %s19, 0
      %s238 = sadd.s32 %s237, %s235
      %s239 = smul.addr %s238, 8
      %s240 = scalar_lea.vmem %s3, %s239
      %p241 = scmp.lt.s32.totalorder %s18, 1
      %s242 = scalar_select %p241, %s18, 1
      %p243 = scmp.lt.s32.totalorder %s19, 2
      %s244 = scalar_select %p243, %s19, 2
      %s245 = smul.addr %s242, 3
      %s246 = sadd.s32 %s244, %s245
      %s247 = smul.addr %s246, 8
      %s248 = scalar_lea.vmem %s0, %s247
      %s249 = sadd.s32 %s19, 1
      %p250 = scmp.lt.s32.totalorder %s18, 1
      %s251 = scalar_select %p250, %s18, 1
      %p252 = scmp.lt.s32.totalorder %s249, 2
      %s253 = scalar_select %p252, %s249, 2
      %s254 = smul.addr %s251, 3
      %s255 = sadd.s32 %s253, %s254
      %s256 = smul.addr %s255, 8
      %s257 = scalar_lea.vmem %s1, %s256
      %s258 = sadd.s32 %s19, 1
      %s259 = sadd.s32 %s19, 2
      %p260 = scmp.lt.s32.totalorder %s18, 1
      %s261 = scalar_select %p260, %s18, 1
      %p262 = scmp.lt.s32.totalorder %s259, 2
      %s263 = scalar_select %p262, %s259, 2
      %s264 = smul.addr %s261, 3
      %s265 = sadd.s32 %s263, %s264
      %s266 = smul.addr %s265, 8
      %s267 = scalar_lea.vmem %s2, %s266
      %s268 = sadd.s32 %s19, 2
      %p269 = scmp.lt.s32.totalorder %s18, 1
      %s270 = scalar_select %p269, %s18, 1
      %p271 = scmp.lt.s32.totalorder %s19, 0
      %s272 = scalar_select %p271, %s19, 0
      %s273 = sadd.s32 %s272, %s270
      %s274 = smul.addr %s273, 8
      %s275 = scalar_lea.vmem %s3, %s274
      %v276 = vld [vmem:[%s248] sm:$0xff]
      %v277 = vmul.f32 %v276, 0.17677669
      %v278 = vld [vmem:[%s257] sm:$0xff]
      %v279 = vld [vmem:[%s267] sm:$0xff]
      %vm280 = vcmask 261120
      %v282 = vsel %vm280, %v277, 0
      %v285 = vsel %vm280, %v278, 0
      %287 = vmatprep.subr.mxu0 0.0
      %288 = vmatpush1.xpose.msra.mxu0 %v285
      %289 = vmatprep.subr.mxu0 0.0
      %290 = vmatpush1.xpose.msra.mxu0 0.0
      %291 = vmatprep.subr.mxu0 0.0
      %292 = vmatpush1.xpose.msra.mxu0 0.0
      %293 = vmatprep.subr.mxu0 0.0
      %294 = vmatpush1.xpose.msra.mxu0 0.0
      %295 = vmatprep.subr.mxu0 0.0
      %296 = vmatpush1.xpose.msra.mxu0 0.0
      %297 = vmatprep.subr.mxu0 0.0
      %298 = vmatpush1.xpose.msra.mxu0 0.0
      %299 = vmatprep.subr.mxu0 0.0
      %300 = vmatpush1.xpose.msra.mxu0 0.0
      %301 = vmatprep.subr.mxu0 0.0
      %302 = vmatpush1.xpose.msra.mxu0 0.0
      %303 = vmatprep.subr.mxu0 0.0
      %304 = vmatpush1.xpose.msra.mxu0 0.0
      %305 = vmatprep.subr.mxu0 0.0
      %306 = vmatpush1.xpose.msra.mxu0 0.0
      %307 = vmatprep.subr.mxu0 0.0
      %308 = vmatpush1.xpose.msra.mxu0 0.0
      %309 = vmatprep.subr.mxu0 0.0
      %310 = vmatpush1.xpose.msra.mxu0 0.0
      %311 = vmatprep.subr.mxu0 0.0
      %312 = vmatpush1.xpose.msra.mxu0 0.0
      %313 = vmatprep.subr.mxu0 0.0
      %314 = vmatpush1.xpose.msra.mxu0 0.0
      %315 = vmatprep.subr.mxu0 0.0
      %316 = vmatpush1.xpose.msra.mxu0 0.0
      %317 = vmatprep.subr.mxu0 0.0
      %318 = vmatpush1.xpose.msra.mxu0 0.0
      %319 = vmatprep.subr.mxu0 0.0
      %320 = vmatpush1.xpose.msra.mxu0 0.0
      %321 = vmatprep.subr.mxu0 0.0
      %322 = vmatpush1.xpose.msra.mxu0 0.0
      %323 = vmatprep.subr.mxu0 0.0
      %324 = vmatpush1.xpose.msra.mxu0 0.0
      %325 = vmatprep.subr.mxu0 0.0
      %326 = vmatpush1.xpose.msra.mxu0 0.0
      %327 = vmatprep.subr.mxu0 0.0
      %328 = vmatpush1.xpose.msra.mxu0 0.0
      %329 = vmatprep.subr.mxu0 0.0
      %330 = vmatpush1.xpose.msra.mxu0 0.0
      %331 = vmatprep.subr.mxu0 0.0
      %332 = vmatpush1.xpose.msra.mxu0 0.0
      %333 = vmatprep.subr.mxu0 0.0
      %334 = vmatpush1.xpose.msra.mxu0 0.0
      %335 = vmatprep.subr.mxu0 0.0
      %336 = vmatpush1.xpose.msra.mxu0 0.0
      %337 = vmatprep.subr.mxu0 0.0
      %338 = vmatpush1.xpose.msra.mxu0 0.0
      %339 = vmatprep.subr.mxu0 0.0
      %340 = vmatpush1.xpose.msra.mxu0 0.0
      %341 = vmatprep.subr.mxu0 0.0
      %342 = vmatpush1.xpose.msra.mxu0 0.0
      %343 = vmatprep.subr.mxu0 0.0
      %344 = vmatpush1.xpose.msra.mxu0 0.0
      %345 = vmatprep.subr.mxu0 0.0
      %346 = vmatpush1.xpose.msra.mxu0 0.0
      %347 = vmatprep.subr.mxu0 0.0
      %348 = vmatpush1.xpose.msra.mxu0 0.0
      %349 = vmatprep.subr.mxu0 0.0
      %350 = vmatpush1.xpose.msra.mxu0 0.0
      %351 = vmatprep.mubr.f32.mxu0 0.0
      %352 = vmatmul.mubr.f32.gmra.mrb[0].mxu0 %v282
      %v353 = vpop.f32.mrb[0].mxu0
      %v354 = vadd.f32 0.0, %v353
      %v355 = vpop.f32.mrb[0].mxu0
      %356 = vdwg.mxu0
      %vm357 = vcmask 64512
      %v358 = vsel %vm357, %v354, -inf
      %359 = vmax.xlane.f32.xlu0 %v358
      %v360 = vpop.xlane.xlu0 %359
      %v361 = vsub.f32 %v354, %v360
      %v362 = vmul.f32 %v361, 1.442695
      %v363 = vpow.pop %v362
      %v364 = vsel %vm357, %v363, 0.0
      %365 = vadd.xlane.f32.xlu0 %v364
      %v366 = vpop.xlane.xlu0 %365
      %v367 = vrcp.pop %v366
      %v368 = vmul.f32 %v363, %v367
      %v370 = vsel %vm357, %v368, 0
      %372 = vmatprep.subr.mxu0 0.0
      %373 = vmatpush1.msra.mxu0 %v279
      %374 = vmatprep.subr.mxu0 0.0
      %375 = vmatpush1.msra.mxu0 0.0
      %376 = vmatprep.subr.mxu0 0.0
      %377 = vmatpush1.msra.mxu0 0.0
      %378 = vmatprep.subr.mxu0 0.0
      %379 = vmatpush1.msra.mxu0 0.0
      %380 = vmatprep.subr.mxu0 0.0
      %381 = vmatpush1.msra.mxu0 0.0
      %382 = vmatprep.subr.mxu0 0.0
      %383 = vmatpush1.msra.mxu0 0.0
      %384 = vmatprep.subr.mxu0 0.0
      %385 = vmatpush1.msra.mxu0 0.0
      %386 = vmatprep.subr.mxu0 0.0
      %387 = vmatpush1.msra.mxu0 0.0
      %388 = vmatprep.subr.mxu0 0.0
      %389 = vmatpush1.msra.mxu0 0.0
      %390 = vmatprep.subr.mxu0 0.0
      %391 = vmatpush1.msra.mxu0 0.0
      %392 = vmatprep.subr.mxu0 0.0
      %393 = vmatpush1.msra.mxu0 0.0
      %394 = vmatprep.subr.mxu0 0.0
      %395 = vmatpush1.msra.mxu0 0.0
      %396 = vmatprep.subr.mxu0 0.0
      %397 = vmatpush1.msra.mxu0 0.0
      %398 = vmatprep.subr.mxu0 0.0
      %399 = vmatpush1.msra.mxu0 0.0
      %400 = vmatprep.subr.mxu0 0.0
      %401 = vmatpush1.msra.mxu0 0.0
      %402 = vmatprep.subr.mxu0 0.0
      %403 = vmatpush1.msra.mxu0 0.0
      %404 = vmatprep.subr.mxu0 0.0
      %405 = vmatpush1.msra.mxu0 0.0
      %406 = vmatprep.subr.mxu0 0.0
      %407 = vmatpush1.msra.mxu0 0.0
      %408 = vmatprep.subr.mxu0 0.0
      %409 = vmatpush1.msra.mxu0 0.0
      %410 = vmatprep.subr.mxu0 0.0
      %411 = vmatpush1.msra.mxu0 0.0
      %412 = vmatprep.subr.mxu0 0.0
      %413 = vmatpush1.msra.mxu0 0.0
      %414 = vmatprep.subr.mxu0 0.0
      %415 = vmatpush1.msra.mxu0 0.0
      %416 = vmatprep.subr.mxu0 0.0
      %417 = vmatpush1.msra.mxu0 0.0
      %418 = vmatprep.subr.mxu0 0.0
      %419 = vmatpush1.msra.mxu0 0.0
      %420 = vmatprep.subr.mxu0 0.0
      %421 = vmatpush1.msra.mxu0 0.0
      %422 = vmatprep.subr.mxu0 0.0
      %423 = vmatpush1.msra.mxu0 0.0
      %424 = vmatprep.subr.mxu0 0.0
      %425 = vmatpush1.msra.mxu0 0.0
      %426 = vmatprep.subr.mxu0 0.0
      %427 = vmatpush1.msra.mxu0 0.0
      %428 = vmatprep.subr.mxu0 0.0
      %429 = vmatpush1.msra.mxu0 0.0
      %430 = vmatprep.subr.mxu0 0.0
      %431 = vmatpush1.msra.mxu0 0.0
      %432 = vmatprep.subr.mxu0 0.0
      %433 = vmatpush1.msra.mxu0 0.0
      %434 = vmatprep.subr.mxu0 0.0
      %435 = vmatpush1.msra.mxu0 0.0
      %436 = vmatprep.mubr.f32.mxu0 0.0
      %437 = vmatmul.mubr.f32.gmra.mrb[0].mxu0 %v370
      %v438 = vpop.f32.mrb[0].mxu0
      %v439 = vadd.f32 0.0, %v438
      %v440 = vpop.f32.mrb[0].mxu0
      %441 = vdwg.mxu0
      %442 = vrot.lane.b32.xlu0 %v277, 96
      %v443 = vpop.permute.xlu0 %442
      %444 = vrot.lane.b32.xlu0 %v278, 96
      %v445 = vpop.permute.xlu0 %444
      %v446 = vsel %vm280, %v443, 0
      %v448 = vsel %vm280, %v445, 0
      %450 = vmatprep.subr.mxu0 0.0
      %451 = vmatpush1.xpose.msra.mxu0 %v448
      %452 = vmatprep.subr.mxu0 0.0
      %453 = vmatpush1.xpose.msra.mxu0 0.0
      %454 = vmatprep.subr.mxu0 0.0
      %455 = vmatpush1.xpose.msra.mxu0 0.0
      %456 = vmatprep.subr.mxu0 0.0
      %457 = vmatpush1.xpose.msra.mxu0 0.0
      %458 = vmatprep.subr.mxu0 0.0
      %459 = vmatpush1.xpose.msra.mxu0 0.0
      %460 = vmatprep.subr.mxu0 0.0
      %461 = vmatpush1.xpose.msra.mxu0 0.0
      %462 = vmatprep.subr.mxu0 0.0
      %463 = vmatpush1.xpose.msra.mxu0 0.0
      %464 = vmatprep.subr.mxu0 0.0
      %465 = vmatpush1.xpose.msra.mxu0 0.0
      %466 = vmatprep.subr.mxu0 0.0
      %467 = vmatpush1.xpose.msra.mxu0 0.0
      %468 = vmatprep.subr.mxu0 0.0
      %469 = vmatpush1.xpose.msra.mxu0 0.0
      %470 = vmatprep.subr.mxu0 0.0
      %471 = vmatpush1.xpose.msra.mxu0 0.0
      %472 = vmatprep.subr.mxu0 0.0
      %473 = vmatpush1.xpose.msra.mxu0 0.0
      %474 = vmatprep.subr.mxu0 0.0
      %475 = vmatpush1.xpose.msra.mxu0 0.0
      %476 = vmatprep.subr.mxu0 0.0
      %477 = vmatpush1.xpose.msra.mxu0 0.0
      %478 = vmatprep.subr.mxu0 0.0
      %479 = vmatpush1.xpose.msra.mxu0 0.0
      %480 = vmatprep.subr.mxu0 0.0
      %481 = vmatpush1.xpose.msra.mxu0 0.0
      %482 = vmatprep.subr.mxu0 0.0
      %483 = vmatpush1.xpose.msra.mxu0 0.0
      %484 = vmatprep.subr.mxu0 0.0
      %485 = vmatpush1.xpose.msra.mxu0 0.0
      %486 = vmatprep.subr.mxu0 0.0
      %487 = vmatpush1.xpose.msra.mxu0 0.0
      %488 = vmatprep.subr.mxu0 0.0
      %489 = vmatpush1.xpose.msra.mxu0 0.0
      %490 = vmatprep.subr.mxu0 0.0
      %491 = vmatpush1.xpose.msra.mxu0 0.0
      %492 = vmatprep.subr.mxu0 0.0
      %493 = vmatpush1.xpose.msra.mxu0 0.0
      %494 = vmatprep.subr.mxu0 0.0
      %495 = vmatpush1.xpose.msra.mxu0 0.0
      %496 = vmatprep.subr.mxu0 0.0
      %497 = vmatpush1.xpose.msra.mxu0 0.0
      %498 = vmatprep.subr.mxu0 0.0
      %499 = vmatpush1.xpose.msra.mxu0 0.0
      %500 = vmatprep.subr.mxu0 0.0
      %501 = vmatpush1.xpose.msra.mxu0 0.0
      %502 = vmatprep.subr.mxu0 0.0
      %503 = vmatpush1.xpose.msra.mxu0 0.0
      %504 = vmatprep.subr.mxu0 0.0
      %505 = vmatpush1.xpose.msra.mxu0 0.0
      %506 = vmatprep.subr.mxu0 0.0
      %507 = vmatpush1.xpose.msra.mxu0 0.0
      %508 = vmatprep.subr.mxu0 0.0
      %509 = vmatpush1.xpose.msra.mxu0 0.0
      %510 = vmatprep.subr.mxu0 0.0
      %511 = vmatpush1.xpose.msra.mxu0 0.0
      %512 = vmatprep.subr.mxu0 0.0
      %513 = vmatpush1.xpose.msra.mxu0 0.0
      %514 = vmatprep.mubr.f32.mxu0 0.0
      %515 = vmatmul.mubr.f32.gmra.mrb[0].mxu0 %v446
      %v516 = vpop.f32.mrb[0].mxu0
      %v517 = vadd.f32 0.0, %v516
      %v518 = vpop.f32.mrb[0].mxu0
      %519 = vdwg.mxu0
      %v520 = vsel %vm357, %v517, -inf
      %521 = vmax.xlane.f32.xlu0 %v520
      %v522 = vpop.xlane.xlu0 %521
      %v523 = vsub.f32 %v517, %v522
      %v524 = vmul.f32 %v523, 1.442695
      %v525 = vpow.pop %v524
      %v526 = vsel %vm357, %v525, 0.0
      %527 = vadd.xlane.f32.xlu0 %v526
      %v528 = vpop.xlane.xlu0 %527
      %v529 = vrcp.pop %v528
      %v530 = vmul.f32 %v525, %v529
      %532 = vrot.lane.b32.xlu0 %v279, 96
      %v533 = vpop.permute.xlu0 %532
      %v536 = vsel %vm357, %v530, 0
      %538 = vmatprep.subr.mxu0 0.0
      %539 = vmatpush1.msra.mxu0 %v533
      %540 = vmatprep.subr.mxu0 0.0
      %541 = vmatpush1.msra.mxu0 0.0
      %542 = vmatprep.subr.mxu0 0.0
      %543 = vmatpush1.msra.mxu0 0.0
      %544 = vmatprep.subr.mxu0 0.0
      %545 = vmatpush1.msra.mxu0 0.0
      %546 = vmatprep.subr.mxu0 0.0
      %547 = vmatpush1.msra.mxu0 0.0
      %548 = vmatprep.subr.mxu0 0.0
      %549 = vmatpush1.msra.mxu0 0.0
      %550 = vmatprep.subr.mxu0 0.0
      %551 = vmatpush1.msra.mxu0 0.0
      %552 = vmatprep.subr.mxu0 0.0
      %553 = vmatpush1.msra.mxu0 0.0
      %554 = vmatprep.subr.mxu0 0.0
      %555 = vmatpush1.msra.mxu0 0.0
      %556 = vmatprep.subr.mxu0 0.0
      %557 = vmatpush1.msra.mxu0 0.0
      %558 = vmatprep.subr.mxu0 0.0
      %559 = vmatpush1.msra.mxu0 0.0
      %560 = vmatprep.subr.mxu0 0.0
      %561 = vmatpush1.msra.mxu0 0.0
      %562 = vmatprep.subr.mxu0 0.0
      %563 = vmatpush1.msra.mxu0 0.0
      %564 = vmatprep.subr.mxu0 0.0
      %565 = vmatpush1.msra.mxu0 0.0
      %566 = vmatprep.subr.mxu0 0.0
      %567 = vmatpush1.msra.mxu0 0.0
      %568 = vmatprep.subr.mxu0 0.0
      %569 = vmatpush1.msra.mxu0 0.0
      %570 = vmatprep.subr.mxu0 0.0
      %571 = vmatpush1.msra.mxu0 0.0
      %572 = vmatprep.subr.mxu0 0.0
      %573 = vmatpush1.msra.mxu0 0.0
      %574 = vmatprep.subr.mxu0 0.0
      %575 = vmatpush1.msra.mxu0 0.0
      %576 = vmatprep.subr.mxu0 0.0
      %577 = vmatpush1.msra.mxu0 0.0
      %578 = vmatprep.subr.mxu0 0.0
      %579 = vmatpush1.msra.mxu0 0.0
      %580 = vmatprep.subr.mxu0 0.0
      %581 = vmatpush1.msra.mxu0 0.0
      %582 = vmatprep.subr.mxu0 0.0
      %583 = vmatpush1.msra.mxu0 0.0
      %584 = vmatprep.subr.mxu0 0.0
      %585 = vmatpush1.msra.mxu0 0.0
      %586 = vmatprep.subr.mxu0 0.0
      %587 = vmatpush1.msra.mxu0 0.0
      %588 = vmatprep.subr.mxu0 0.0
      %589 = vmatpush1.msra.mxu0 0.0
      %590 = vmatprep.subr.mxu0 0.0
      %591 = vmatpush1.msra.mxu0 0.0
      %592 = vmatprep.subr.mxu0 0.0
      %593 = vmatpush1.msra.mxu0 0.0
      %594 = vmatprep.subr.mxu0 0.0
      %595 = vmatpush1.msra.mxu0 0.0
      %596 = vmatprep.subr.mxu0 0.0
      %597 = vmatpush1.msra.mxu0 0.0
      %598 = vmatprep.subr.mxu0 0.0
      %599 = vmatpush1.msra.mxu0 0.0
      %600 = vmatprep.subr.mxu0 0.0
      %601 = vmatpush1.msra.mxu0 0.0
      %602 = vmatprep.mubr.f32.mxu0 0.0
      %603 = vmatmul.mubr.f32.gmra.mrb[0].mxu0 %v536
      %v604 = vpop.f32.mrb[0].mxu0
      %v605 = vadd.f32 0.0, %v604
      %v606 = vpop.f32.mrb[0].mxu0
      %607 = vdwg.mxu0
      %608 = vrot.lane.b32.xlu0 %v277, 64
      %v609 = vpop.permute.xlu0 %608
      %610 = vrot.lane.b32.xlu0 %v278, 64
      %v611 = vpop.permute.xlu0 %610
      %v612 = vsel %vm280, %v609, 0
      %v614 = vsel %vm280, %v611, 0
      %616 = vmatprep.subr.mxu0 0.0
      %617 = vmatpush1.xpose.msra.mxu0 %v614
      %618 = vmatprep.subr.mxu0 0.0
      %619 = vmatpush1.xpose.msra.mxu0 0.0
      %620 = vmatprep.subr.mxu0 0.0
      %621 = vmatpush1.xpose.msra.mxu0 0.0
      %622 = vmatprep.subr.mxu0 0.0
      %623 = vmatpush1.xpose.msra.mxu0 0.0
      %624 = vmatprep.subr.mxu0 0.0
      %625 = vmatpush1.xpose.msra.mxu0 0.0
      %626 = vmatprep.subr.mxu0 0.0
      %627 = vmatpush1.xpose.msra.mxu0 0.0
      %628 = vmatprep.subr.mxu0 0.0
      %629 = vmatpush1.xpose.msra.mxu0 0.0
      %630 = vmatprep.subr.mxu0 0.0
      %631 = vmatpush1.xpose.msra.mxu0 0.0
      %632 = vmatprep.subr.mxu0 0.0
      %633 = vmatpush1.xpose.msra.mxu0 0.0
      %634 = vmatprep.subr.mxu0 0.0
      %635 = vmatpush1.xpose.msra.mxu0 0.0
      %636 = vmatprep.subr.mxu0 0.0
      %637 = vmatpush1.xpose.msra.mxu0 0.0
      %638 = vmatprep.subr.mxu0 0.0
      %639 = vmatpush1.xpose.msra.mxu0 0.0
      %640 = vmatprep.subr.mxu0 0.0
      %641 = vmatpush1.xpose.msra.mxu0 0.0
      %642 = vmatprep.subr.mxu0 0.0
      %643 = vmatpush1.xpose.msra.mxu0 0.0
      %644 = vmatprep.subr.mxu0 0.0
      %645 = vmatpush1.xpose.msra.mxu0 0.0
      %646 = vmatprep.subr.mxu0 0.0
      %647 = vmatpush1.xpose.msra.mxu0 0.0
      %648 = vmatprep.subr.mxu0 0.0
      %649 = vmatpush1.xpose.msra.mxu0 0.0
      %650 = vmatprep.subr.mxu0 0.0
      %651 = vmatpush1.xpose.msra.mxu0 0.0
      %652 = vmatprep.subr.mxu0 0.0
      %653 = vmatpush1.xpose.msra.mxu0 0.0
      %654 = vmatprep.subr.mxu0 0.0
      %655 = vmatpush1.xpose.msra.mxu0 0.0
      %656 = vmatprep.subr.mxu0 0.0
      %657 = vmatpush1.xpose.msra.mxu0 0.0
      %658 = vmatprep.subr.mxu0 0.0
      %659 = vmatpush1.xpose.msra.mxu0 0.0
      %660 = vmatprep.subr.mxu0 0.0
      %661 = vmatpush1.xpose.msra.mxu0 0.0
      %662 = vmatprep.subr.mxu0 0.0
      %663 = vmatpush1.xpose.msra.mxu0 0.0
      %664 = vmatprep.subr.mxu0 0.0
      %665 = vmatpush1.xpose.msra.mxu0 0.0
      %666 = vmatprep.subr.mxu0 0.0
      %667 = vmatpush1.xpose.msra.mxu0 0.0
      %668 = vmatprep.subr.mxu0 0.0
      %669 = vmatpush1.xpose.msra.mxu0 0.0
      %670 = vmatprep.subr.mxu0 0.0
      %671 = vmatpush1.xpose.msra.mxu0 0.0
      %672 = vmatprep.subr.mxu0 0.0
      %673 = vmatpush1.xpose.msra.mxu0 0.0
      %674 = vmatprep.subr.mxu0 0.0
      %675 = vmatpush1.xpose.msra.mxu0 0.0
      %676 = vmatprep.subr.mxu0 0.0
      %677 = vmatpush1.xpose.msra.mxu0 0.0
      %678 = vmatprep.subr.mxu0 0.0
      %679 = vmatpush1.xpose.msra.mxu0 0.0
      %680 = vmatprep.mubr.f32.mxu0 0.0
      %681 = vmatmul.mubr.f32.gmra.mrb[0].mxu0 %v612
      %v682 = vpop.f32.mrb[0].mxu0
      %v683 = vadd.f32 0.0, %v682
      %v684 = vpop.f32.mrb[0].mxu0
      %685 = vdwg.mxu0
      %v686 = vsel %vm357, %v683, -inf
      %687 = vmax.xlane.f32.xlu0 %v686
      %v688 = vpop.xlane.xlu0 %687
      %v689 = vsub.f32 %v683, %v688
      %v690 = vmul.f32 %v689, 1.442695
      %v691 = vpow.pop %v690
      %v692 = vsel %vm357, %v691, 0.0
      %693 = vadd.xlane.f32.xlu0 %v692
      %v694 = vpop.xlane.xlu0 %693
      %v695 = vrcp.pop %v694
      %v696 = vmul.f32 %v691, %v695
      %697 = vrot.lane.b32.xlu0 %v279, 64
      %v698 = vpop.permute.xlu0 %697
      %v701 = vsel %vm357, %v696, 0
      %703 = vmatprep.subr.mxu0 0.0
      %704 = vmatpush1.msra.mxu0 %v698
      %705 = vmatprep.subr.mxu0 0.0
      %706 = vmatpush1.msra.mxu0 0.0
      %707 = vmatprep.subr.mxu0 0.0
      %708 = vmatpush1.msra.mxu0 0.0
      %709 = vmatprep.subr.mxu0 0.0
      %710 = vmatpush1.msra.mxu0 0.0
      %711 = vmatprep.subr.mxu0 0.0
      %712 = vmatpush1.msra.mxu0 0.0
      %713 = vmatprep.subr.mxu0 0.0
      %714 = vmatpush1.msra.mxu0 0.0
      %715 = vmatprep.subr.mxu0 0.0
      %716 = vmatpush1.msra.mxu0 0.0
      %717 = vmatprep.subr.mxu0 0.0
      %718 = vmatpush1.msra.mxu0 0.0
      %719 = vmatprep.subr.mxu0 0.0
      %720 = vmatpush1.msra.mxu0 0.0
      %721 = vmatprep.subr.mxu0 0.0
      %722 = vmatpush1.msra.mxu0 0.0
      %723 = vmatprep.subr.mxu0 0.0
      %724 = vmatpush1.msra.mxu0 0.0
      %725 = vmatprep.subr.mxu0 0.0
      %726 = vmatpush1.msra.mxu0 0.0
      %727 = vmatprep.subr.mxu0 0.0
      %728 = vmatpush1.msra.mxu0 0.0
      %729 = vmatprep.subr.mxu0 0.0
      %730 = vmatpush1.msra.mxu0 0.0
      %731 = vmatprep.subr.mxu0 0.0
      %732 = vmatpush1.msra.mxu0 0.0
      %733 = vmatprep.subr.mxu0 0.0
      %734 = vmatpush1.msra.mxu0 0.0
      %735 = vmatprep.subr.mxu0 0.0
      %736 = vmatpush1.msra.mxu0 0.0
      %737 = vmatprep.subr.mxu0 0.0
      %738 = vmatpush1.msra.mxu0 0.0
      %739 = vmatprep.subr.mxu0 0.0
      %740 = vmatpush1.msra.mxu0 0.0
      %741 = vmatprep.subr.mxu0 0.0
      %742 = vmatpush1.msra.mxu0 0.0
      %743 = vmatprep.subr.mxu0 0.0
      %744 = vmatpush1.msra.mxu0 0.0
      %745 = vmatprep.subr.mxu0 0.0
      %746 = vmatpush1.msra.mxu0 0.0
      %747 = vmatprep.subr.mxu0 0.0
      %748 = vmatpush1.msra.mxu0 0.0
      %749 = vmatprep.subr.mxu0 0.0
      %750 = vmatpush1.msra.mxu0 0.0
      %751 = vmatprep.subr.mxu0 0.0
      %752 = vmatpush1.msra.mxu0 0.0
      %753 = vmatprep.subr.mxu0 0.0
      %754 = vmatpush1.msra.mxu0 0.0
      %755 = vmatprep.subr.mxu0 0.0
      %756 = vmatpush1.msra.mxu0 0.0
      %757 = vmatprep.subr.mxu0 0.0
      %758 = vmatpush1.msra.mxu0 0.0
      %759 = vmatprep.subr.mxu0 0.0
      %760 = vmatpush1.msra.mxu0 0.0
      %761 = vmatprep.subr.mxu0 0.0
      %762 = vmatpush1.msra.mxu0 0.0
      %763 = vmatprep.subr.mxu0 0.0
      %764 = vmatpush1.msra.mxu0 0.0
      %765 = vmatprep.subr.mxu0 0.0
      %766 = vmatpush1.msra.mxu0 0.0
      %767 = vmatprep.mubr.f32.mxu0 0.0
      %768 = vmatmul.mubr.f32.gmra.mrb[0].mxu0 %v701
      %v769 = vpop.f32.mrb[0].mxu0
      %v770 = vadd.f32 0.0, %v769
      %v771 = vpop.f32.mrb[0].mxu0
      %772 = vdwg.mxu0
      %773 = vrot.lane.b32.xlu0 %v277, 32
      %v774 = vpop.permute.xlu0 %773
      %775 = vrot.lane.b32.xlu0 %v278, 32
      %v776 = vpop.permute.xlu0 %775
      %v777 = vsel %vm280, %v774, 0
      %v779 = vsel %vm280, %v776, 0
      %781 = vmatprep.subr.mxu0 0.0
      %782 = vmatpush1.xpose.msra.mxu0 %v779
      %783 = vmatprep.subr.mxu0 0.0
      %784 = vmatpush1.xpose.msra.mxu0 0.0
      %785 = vmatprep.subr.mxu0 0.0
      %786 = vmatpush1.xpose.msra.mxu0 0.0
      %787 = vmatprep.subr.mxu0 0.0
      %788 = vmatpush1.xpose.msra.mxu0 0.0
      %789 = vmatprep.subr.mxu0 0.0
      %790 = vmatpush1.xpose.msra.mxu0 0.0
      %791 = vmatprep.subr.mxu0 0.0
      %792 = vmatpush1.xpose.msra.mxu0 0.0
      %793 = vmatprep.subr.mxu0 0.0
      %794 = vmatpush1.xpose.msra.mxu0 0.0
      %795 = vmatprep.subr.mxu0 0.0
      %796 = vmatpush1.xpose.msra.mxu0 0.0
      %797 = vmatprep.subr.mxu0 0.0
      %798 = vmatpush1.xpose.msra.mxu0 0.0
      %799 = vmatprep.subr.mxu0 0.0
      %800 = vmatpush1.xpose.msra.mxu0 0.0
      %801 = vmatprep.subr.mxu0 0.0
      %802 = vmatpush1.xpose.msra.mxu0 0.0
      %803 = vmatprep.subr.mxu0 0.0
      %804 = vmatpush1.xpose.msra.mxu0 0.0
      %805 = vmatprep.subr.mxu0 0.0
      %806 = vmatpush1.xpose.msra.mxu0 0.0
      %807 = vmatprep.subr.mxu0 0.0
      %808 = vmatpush1.xpose.msra.mxu0 0.0
      %809 = vmatprep.subr.mxu0 0.0
      %810 = vmatpush1.xpose.msra.mxu0 0.0
      %811 = vmatprep.subr.mxu0 0.0
      %812 = vmatpush1.xpose.msra.mxu0 0.0
      %813 = vmatprep.subr.mxu0 0.0
      %814 = vmatpush1.xpose.msra.mxu0 0.0
      %815 = vmatprep.subr.mxu0 0.0
      %816 = vmatpush1.xpose.msra.mxu0 0.0
      %817 = vmatprep.subr.mxu0 0.0
      %818 = vmatpush1.xpose.msra.mxu0 0.0
      %819 = vmatprep.subr.mxu0 0.0
      %820 = vmatpush1.xpose.msra.mxu0 0.0
      %821 = vmatprep.subr.mxu0 0.0
      %822 = vmatpush1.xpose.msra.mxu0 0.0
      %823 = vmatprep.subr.mxu0 0.0
      %824 = vmatpush1.xpose.msra.mxu0 0.0
      %825 = vmatprep.subr.mxu0 0.0
      %826 = vmatpush1.xpose.msra.mxu0 0.0
      %827 = vmatprep.subr.mxu0 0.0
      %828 = vmatpush1.xpose.msra.mxu0 0.0
      %829 = vmatprep.subr.mxu0 0.0
      %830 = vmatpush1.xpose.msra.mxu0 0.0
      %831 = vmatprep.subr.mxu0 0.0
      %832 = vmatpush1.xpose.msra.mxu0 0.0
      %833 = vmatprep.subr.mxu0 0.0
      %834 = vmatpush1.xpose.msra.mxu0 0.0
      %835 = vmatprep.subr.mxu0 0.0
      %836 = vmatpush1.xpose.msra.mxu0 0.0
      %837 = vmatprep.subr.mxu0 0.0
      %838 = vmatpush1.xpose.msra.mxu0 0.0
      %839 = vmatprep.subr.mxu0 0.0
      %840 = vmatpush1.xpose.msra.mxu0 0.0
      %841 = vmatprep.subr.mxu0 0.0
      %842 = vmatpush1.xpose.msra.mxu0 0.0
      %843 = vmatprep.subr.mxu0 0.0
      %844 = vmatpush1.xpose.msra.mxu0 0.0
      %845 = vmatprep.mubr.f32.mxu0 0.0
      %846 = vmatmul.mubr.f32.gmra.mrb[0].mxu0 %v777
      %v847 = vpop.f32.mrb[0].mxu0
      %v848 = vadd.f32 0.0, %v847
      %v849 = vpop.f32.mrb[0].mxu0
      %850 = vdwg.mxu0
      %v851 = vsel %vm357, %v848, -inf
      %852 = vmax.xlane.f32.xlu0 %v851
      %v853 = vpop.xlane.xlu0 %852
      %v854 = vsub.f32 %v848, %v853
      %v855 = vmul.f32 %v854, 1.442695
      %v856 = vpow.pop %v855
      %v857 = vsel %vm357, %v856, 0.0
      %858 = vadd.xlane.f32.xlu0 %v857
      %v859 = vpop.xlane.xlu0 %858
      %v860 = vrcp.pop %v859
      %v861 = vmul.f32 %v856, %v860
      %862 = vrot.lane.b32.xlu0 %v279, 32
      %v863 = vpop.permute.xlu0 %862
      %v866 = vsel %vm357, %v861, 0
      %868 = vmatprep.subr.mxu0 0.0
      %869 = vmatpush1.msra.mxu0 %v863
      %870 = vmatprep.subr.mxu0 0.0
      %871 = vmatpush1.msra.mxu0 0.0
      %872 = vmatprep.subr.mxu0 0.0
      %873 = vmatpush1.msra.mxu0 0.0
      %874 = vmatprep.subr.mxu0 0.0
      %875 = vmatpush1.msra.mxu0 0.0
      %876 = vmatprep.subr.mxu0 0.0
      %877 = vmatpush1.msra.mxu0 0.0
      %878 = vmatprep.subr.mxu0 0.0
      %879 = vmatpush1.msra.mxu0 0.0
      %880 = vmatprep.subr.mxu0 0.0
      %881 = vmatpush1.msra.mxu0 0.0
      %882 = vmatprep.subr.mxu0 0.0
      %883 = vmatpush1.msra.mxu0 0.0
      %884 = vmatprep.subr.mxu0 0.0
      %885 = vmatpush1.msra.mxu0 0.0
      %886 = vmatprep.subr.mxu0 0.0
      %887 = vmatpush1.msra.mxu0 0.0
      %888 = vmatprep.subr.mxu0 0.0
      %889 = vmatpush1.msra.mxu0 0.0
      %890 = vmatprep.subr.mxu0 0.0
      %891 = vmatpush1.msra.mxu0 0.0
      %892 = vmatprep.subr.mxu0 0.0
      %893 = vmatpush1.msra.mxu0 0.0
      %894 = vmatprep.subr.mxu0 0.0
      %895 = vmatpush1.msra.mxu0 0.0
      %896 = vmatprep.subr.mxu0 0.0
      %897 = vmatpush1.msra.mxu0 0.0
      %898 = vmatprep.subr.mxu0 0.0
      %899 = vmatpush1.msra.mxu0 0.0
      %900 = vmatprep.subr.mxu0 0.0
      %901 = vmatpush1.msra.mxu0 0.0
      %902 = vmatprep.subr.mxu0 0.0
      %903 = vmatpush1.msra.mxu0 0.0
      %904 = vmatprep.subr.mxu0 0.0
      %905 = vmatpush1.msra.mxu0 0.0
      %906 = vmatprep.subr.mxu0 0.0
      %907 = vmatpush1.msra.mxu0 0.0
      %908 = vmatprep.subr.mxu0 0.0
      %909 = vmatpush1.msra.mxu0 0.0
      %910 = vmatprep.subr.mxu0 0.0
      %911 = vmatpush1.msra.mxu0 0.0
      %912 = vmatprep.subr.mxu0 0.0
      %913 = vmatpush1.msra.mxu0 0.0
      %914 = vmatprep.subr.mxu0 0.0
      %915 = vmatpush1.msra.mxu0 0.0
      %916 = vmatprep.subr.mxu0 0.0
      %917 = vmatpush1.msra.mxu0 0.0
      %918 = vmatprep.subr.mxu0 0.0
      %919 = vmatpush1.msra.mxu0 0.0
      %920 = vmatprep.subr.mxu0 0.0
      %921 = vmatpush1.msra.mxu0 0.0
      %922 = vmatprep.subr.mxu0 0.0
      %923 = vmatpush1.msra.mxu0 0.0
      %924 = vmatprep.subr.mxu0 0.0
      %925 = vmatpush1.msra.mxu0 0.0
      %926 = vmatprep.subr.mxu0 0.0
      %927 = vmatpush1.msra.mxu0 0.0
      %928 = vmatprep.subr.mxu0 0.0
      %929 = vmatpush1.msra.mxu0 0.0
      %930 = vmatprep.subr.mxu0 0.0
      %931 = vmatpush1.msra.mxu0 0.0
      %932 = vmatprep.mubr.f32.mxu0 0.0
      %933 = vmatmul.mubr.f32.gmra.mrb[0].mxu0 %v866
      %v934 = vpop.f32.mrb[0].mxu0
      %v935 = vadd.f32 0.0, %v934
      %v936 = vpop.f32.mrb[0].mxu0
      %937 = vdwg.mxu0
      %939 = vrot.lane.b32.xlu0 %v605, 32
      %v940 = vpop.permute.xlu0 %939
      %943 = vrot.lane.b32.xlu0 %v770, 64
      %v944 = vpop.permute.xlu0 %943
      %947 = vrot.lane.b32.xlu0 %v935, 96
      %v948 = vpop.permute.xlu0 %947
      %v950 = vsel %vm280, %v439, %v940
      %vm951 = vcmask 523264
      %v952 = vsel %vm951, %v950, %v944
      %vm953 = vcmask 785408
      %v954 = vsel %vm953, %v952, %v948
      %955 = vst [vmem:[%s275] sm:$0xff] %v954
      %p956 = scmp.lt.s32.totalorder %s18, 1
      %s957 = scalar_select %p956, %s18, 1
      %p958 = scmp.lt.s32.totalorder %s19, 0
      %s959 = scalar_select %p958, %s19, 0
      %s960 = sadd.s32 %s959, %s957
      %s961 = smul.addr %s960, 8
      %s962 = scalar_lea.vmem %s3, %s961
      // Predicated region
      $region33: #{a_call__.11} parent=31 // pred_check
        %p963 = pneg %p134
      $region34: #{a_call__.11} parent=31 // pred_check_branch
        %965 = sbr.rel (%p963) target = $region36
      $region35: #{a_call__.11} parent=31 // pred_region
        _
      $region36: #{a_call__.11} parent=31 // pred_fallthru
        _
    $region32: #{a_call__.11} parent=5 // pred_fallthru
      _
    %p966 = scmp.le.s32.totalorder 2, %s9
    // Predicated region
    $region37: #{a_call__.11} parent=5 // pred_check
      %p967 = pneg %p966
    $region38: #{a_call__.11} parent=5 // pred_check_branch
      %969 = sbr.rel (%p967) target = $region40
    $region39: #{a_call__.11} parent=5 // pred_region
      %s970 = ssub.s32 %s9, 2
      // Predicated region
      $region41: #{a_call__.11} parent=39 // pred_check
        %p971 = pneg %p140
      $region42: #{a_call__.11} parent=39 // pred_check_branch
        %973 = sbr.rel (%p971) target = $region44
      $region43: #{a_call__.11} parent=39 // pred_region
        %p974 = scmp.lt.s32.totalorder %s20, 1
        %s975 = scalar_select %p974, %s20, 1
        %p976 = scmp.lt.s32.totalorder %s21, 0
        %s977 = scalar_select %p976, %s21, 0
        %s978 = sadd.s32 %s977, %s975
        %s979 = smul.addr %s978, 8
        %s980 = scalar_lea.vmem %s3, %s979
      $region44: #{a_call__.11} parent=39 // pred_fallthru
        _
    $region40: #{a_call__.11} parent=5 // pred_fallthru
      _
  $region6: #{a_call__.11} parent=0 // loop_footer
    %s13 = sadd.s32 1, %s9
  $region7: #{a_call__.11} parent=0 // loop_footer_branch
    %8 = sbr.rel target = $region3
  $region8: #{a_call__.11} parent=0 // loop_exit
    _

// kernel: a_call__.13
$region0: #{a_call__.13}
  #allocation0 [shape = 'u32[]', space=smem, size = 0x4, offset = 0x4, fixed_abs, tag = 'smem constant byte address 0x4 - core index']
  #allocation1 [shape = 'u32[144,128]{1,0:T(1,128)}', space=vmem, size = 0x12000, scoped, tag = 'internal scratch']
  #allocation2 [shape = 'f32[8,128]{1,0:T(8,128)}', space=vmem, size = 0x1000, scoped, tag = 'scratch operand']
  %s0 = inlined_call_operand.vmem [shape: f32[16,128], index: 0, kind: input, shape index: {}]
  %s1 = inlined_call_operand.vmem [shape: f32[1,128], index: 1, kind: input, shape index: {}]
  %s2 = inlined_call_operand.vmem [shape: f32[1,128], index: 2, kind: input, shape index: {}]
  %s3 = inlined_call_operand.vmem [shape: f32[128,256], index: 3, kind: input, shape index: {}]
  %s4 = inlined_call_operand.vmem [shape: f32[1,256], index: 4, kind: input, shape index: {}]
  %s5 = inlined_call_operand.vmem [shape: f32[16,256], index: 5, kind: output, shape index: {}]
  %s6 = sld [smem:[#allocation0]]
  $region57: #{a_call__.13} parent=0
    _
  %s8 = ssub.s32 1, %s6
  %s9 = scalar_select 0, %s8, %s6
  loop: start=0, step=1, limit=4
  $region2: #{a_call__.13} parent=0 // loop_pre_header
    _
  $region3: #{a_call__.13} parent=0 // loop_header
    %s11 = sphi 0, %s15
    %p12 = scmp.ge.s32.totalorder %s11, 4
    %s18 = sphi 0, %s30
    %s19 = sphi 0, %s26
    %s20 = sphi 0, %s18
    %s21 = sphi 0, %s19
    %s22 = sphi 0, %s20
    %s23 = sphi 0, %s21
    %s33 = sphi 0, %s35
    %s36 = sphi 0, %s33
    %s37 = sphi 0, %s36
    %s53 = sphi 0, %s37
    %s57 = sphi 0, %s57
    %s59 = sphi 0, %s57
    %s60 = sphi 0, %s59
    %s74 = sphi 0, %s60
    %s78 = sphi 0, %s78
    %s80 = sphi 0, %s78
    %s81 = sphi 0, %s80
    %s95 = sphi 0, %s81
    %s101 = sphi 0, %s103
    %s104 = sphi 0, %s101
    %s105 = sphi 0, %s104
    %s121 = sphi 0, %s105
    %s127 = sphi 0, %s129
    %s130 = sphi 0, %s127
    %s131 = sphi 0, %s130
    %s147 = sphi 0, %s131
    %s155 = sphi 0, %s157
    %s158 = sphi 0, %s155
    %s159 = sphi 0, %s158
    %s175 = sphi 0, %s159
  $region4: #{a_call__.13} parent=0 // loop_header_branch
    %14 = sbr.rel (%p12) target = $region8
  $region5: #{a_call__.13} parent=0 // loop_body
    %s16 = ssub.s32 %s11, 1
    %s17 = ssub.s32 %s11, 2
    %s24 = sadd.s32 1, %s19
    %p25 = scmp.ge.s32.totalorder %s24, 1
    %s26 = scalar_select %p25, 0, %s24
    %s27 = sadd.s32 1, %s18
    %s28 = scalar_select %p25, %s27, %s18
    %p29 = scmp.ge.s32.totalorder %s28, 2
    %s30 = scalar_select %p29, 0, %s28
    %s31 = ssub.s32 %s18, %s30
    %p32 = scmp.eq.s32.totalorder %s31, 0
    %s34 = sadd.s32 %s33, 1
    %s35 = scalar_select %p32, %s33, %s34
    %p38 = pneg %p32
    %p39 = scmp.eq.s32.totalorder %s11, 1
    %p40 = por %p38, %p39
    %p41 = scmp.ne.s32.totalorder %s33, %s36
    %p42 = scmp.eq.s32.totalorder %s11, 0
    %p43 = por %p41, %p42
    %p44 = scmp.ne.s32.totalorder %s33, %s36
    %p45 = scmp.eq.s32.totalorder %s16, 1
    %p46 = por %p44, %p45
    %p47 = scmp.ne.s32.totalorder %s36, %s37
    %p48 = scmp.eq.s32.totalorder %s16, 0
    %p49 = por %p47, %p48
    %p50 = scmp.ne.s32.totalorder %s36, %s37
    %p51 = scmp.eq.s32.totalorder %s17, 1
    %p52 = por %p50, %p51
    %p54 = scmp.ne.s32.totalorder %s37, %s53
    %p55 = scmp.eq.s32.totalorder %s17, 0
    %p56 = por %p54, %p55
    %s58 = sadd.s32 %s57, 1
    %p61 = scmp.eq.s32.totalorder %s11, 1
    %p62 = scmp.ne.s32.totalorder %s57, %s59
    %p63 = scmp.eq.s32.totalorder %s11, 0
    %p64 = por %p62, %p63
    %p65 = scmp.ne.s32.totalorder %s57, %s59
    %p66 = scmp.eq.s32.totalorder %s16, 1
    %p67 = por %p65, %p66
    %p68 = scmp.ne.s32.totalorder %s59, %s60
    %p69 = scmp.eq.s32.totalorder %s16, 0
    %p70 = por %p68, %p69
    %p71 = scmp.ne.s32.totalorder %s59, %s60
    %p72 = scmp.eq.s32.totalorder %s17, 1
    %p73 = por %p71, %p72
    %p75 = scmp.ne.s32.totalorder %s60, %s74
    %p76 = scmp.eq.s32.totalorder %s17, 0
    %p77 = por %p75, %p76
    %s79 = sadd.s32 %s78, 1
    %p82 = scmp.eq.s32.totalorder %s11, 1
    %p83 = scmp.ne.s32.totalorder %s78, %s80
    %p84 = scmp.eq.s32.totalorder %s11, 0
    %p85 = por %p83, %p84
    %p86 = scmp.ne.s32.totalorder %s78, %s80
    %p87 = scmp.eq.s32.totalorder %s16, 1
    %p88 = por %p86, %p87
    %p89 = scmp.ne.s32.totalorder %s80, %s81
    %p90 = scmp.eq.s32.totalorder %s16, 0
    %p91 = por %p89, %p90
    %p92 = scmp.ne.s32.totalorder %s80, %s81
    %p93 = scmp.eq.s32.totalorder %s17, 1
    %p94 = por %p92, %p93
    %p96 = scmp.ne.s32.totalorder %s81, %s95
    %p97 = scmp.eq.s32.totalorder %s17, 0
    %p98 = por %p96, %p97
    %s99 = ssub.s32 %s19, %s26
    %p100 = scmp.eq.s32.totalorder %s99, 0
    %s102 = sadd.s32 %s101, 1
    %s103 = scalar_select %p100, %s101, %s102
    %p106 = pneg %p100
    %p107 = scmp.eq.s32.totalorder %s11, 1
    %p108 = por %p106, %p107
    %p109 = scmp.ne.s32.totalorder %s101, %s104
    %p110 = scmp.eq.s32.totalorder %s11, 0
    %p111 = por %p109, %p110
    %p112 = scmp.ne.s32.totalorder %s101, %s104
    %p113 = scmp.eq.s32.totalorder %s16, 1
    %p114 = por %p112, %p113
    %p115 = scmp.ne.s32.totalorder %s104, %s105
    %p116 = scmp.eq.s32.totalorder %s16, 0
    %p117 = por %p115, %p116
    %p118 = scmp.ne.s32.totalorder %s104, %s105
    %p119 = scmp.eq.s32.totalorder %s17, 1
    %p120 = por %p118, %p119
    %p122 = scmp.ne.s32.totalorder %s105, %s121
    %p123 = scmp.eq.s32.totalorder %s17, 0
    %p124 = por %p122, %p123
    %s125 = ssub.s32 %s19, %s26
    %p126 = scmp.eq.s32.totalorder %s125, 0
    %s128 = sadd.s32 %s127, 1
    %s129 = scalar_select %p126, %s127, %s128
    %p132 = pneg %p126
    %p133 = scmp.eq.s32.totalorder %s11, 1
    %p134 = por %p132, %p133
    %p135 = scmp.ne.s32.totalorder %s127, %s130
    %p136 = scmp.eq.s32.totalorder %s11, 0
    %p137 = por %p135, %p136
    %p138 = scmp.ne.s32.totalorder %s127, %s130
    %p139 = scmp.eq.s32.totalorder %s16, 1
    %p140 = por %p138, %p139
    %p141 = scmp.ne.s32.totalorder %s130, %s131
    %p142 = scmp.eq.s32.totalorder %s16, 0
    %p143 = por %p141, %p142
    %p144 = scmp.ne.s32.totalorder %s130, %s131
    %p145 = scmp.eq.s32.totalorder %s17, 1
    %p146 = por %p144, %p145
    %p148 = scmp.ne.s32.totalorder %s131, %s147
    %p149 = scmp.eq.s32.totalorder %s17, 0
    %p150 = por %p148, %p149
    %s151 = ssub.s32 %s18, %s30
    %s152 = ssub.s32 %s19, %s26
    %s153 = sor.u32 %s151, %s152
    %p154 = scmp.eq.s32.totalorder %s153, 0
    %s156 = sadd.s32 %s155, 1
    %s157 = scalar_select %p154, %s155, %s156
    %p160 = pneg %p154
    %p161 = scmp.eq.s32.totalorder %s11, 1
    %p162 = por %p160, %p161
    %p163 = scmp.ne.s32.totalorder %s155, %s158
    %p164 = scmp.eq.s32.totalorder %s11, 0
    %p165 = por %p163, %p164
    %p166 = scmp.ne.s32.totalorder %s155, %s158
    %p167 = scmp.eq.s32.totalorder %s16, 1
    %p168 = por %p166, %p167
    %p169 = scmp.ne.s32.totalorder %s158, %s159
    %p170 = scmp.eq.s32.totalorder %s16, 0
    %p171 = por %p169, %p170
    %p172 = scmp.ne.s32.totalorder %s158, %s159
    %p173 = scmp.eq.s32.totalorder %s17, 1
    %p174 = por %p172, %p173
    %p176 = scmp.ne.s32.totalorder %s159, %s175
    %p177 = scmp.eq.s32.totalorder %s17, 0
    %p178 = por %p176, %p177
    %p179 = scmp.le.s32.totalorder 1, %s11
    %p180 = scmp.lt.s32.totalorder %s11, 3
    %p181 = pnand %p179, %p180
    %p182 = pneg %p181
    // Predicated region
    $region9: #{a_call__.13} parent=5 // pred_check
      _
    $region10: #{a_call__.13} parent=5 // pred_check_branch
      %184 = sbr.rel (%p181) target = $region12
    $region11: #{a_call__.13} parent=5 // pred_region
      %s185 = ssub.s32 %s11, 1
      // Predicated region
      $region13: #{a_call__.13} parent=11 // pred_check
        %p186 = pneg %p70
      $region14: #{a_call__.13} parent=11 // pred_check_branch
        %188 = sbr.rel (%p186) target = $region16
      $region15: #{a_call__.13} parent=11 // pred_region
        _
      $region16: #{a_call__.13} parent=11 // pred_fallthru
        _
      // Predicated region
      $region17: #{a_call__.13} parent=11 // pred_check
        %p189 = pneg %p91
      $region18: #{a_call__.13} parent=11 // pred_check_branch
        %191 = sbr.rel (%p189) target = $region20
      $region19: #{a_call__.13} parent=11 // pred_region
        _
      $region20: #{a_call__.13} parent=11 // pred_fallthru
        _
      // Predicated region
      $region21: #{a_call__.13} parent=11 // pred_check
        %p192 = pneg %p117
      $region22: #{a_call__.13} parent=11 // pred_check_branch
        %194 = sbr.rel (%p192) target = $region24
      $region23: #{a_call__.13} parent=11 // pred_region
        %s195 = smul.u32 2, %s21
        %p196 = scmp.lt.s32.totalorder %s195, 1
        %s197 = scalar_select %p196, %s195, 1
        %s198 = smul.addr %s197, 8
        %s199 = scalar_lea.vmem %s3, %s198
        %s200 = smul.u32 2, %s21
      $region24: #{a_call__.13} parent=11 // pred_fallthru
        _
      // Predicated region
      $region25: #{a_call__.13} parent=11 // pred_check
        %p201 = pneg %p143
      $region26: #{a_call__.13} parent=11 // pred_check_branch
        %203 = sbr.rel (%p201) target = $region28
      $region27: #{a_call__.13} parent=11 // pred_region
        %s204 = smul.u32 2, %s21
        %p205 = scmp.lt.s32.totalorder %s204, 1
        %s206 = scalar_select %p205, %s204, 1
        %s207 = scalar_lea.vmem %s4, %s206
        %s208 = smul.u32 2, %s21
      $region28: #{a_call__.13} parent=11 // pred_fallthru
        _
    $region12: #{a_call__.13} parent=5 // pred_fallthru
      _
    %p209 = scmp.lt.s32.totalorder %s11, 2
    // Predicated region
    $region29: #{a_call__.13} parent=5 // pred_check
      %p210 = pneg %p209
    $region30: #{a_call__.13} parent=5 // pred_check_branch
      %212 = sbr.rel (%p210) target = $region32
    $region31: #{a_call__.13} parent=5 // pred_region
      // Predicated region
      $region33: #{a_call__.13} parent=31 // pred_check
        %p213 = pneg %p43
      $region34: #{a_call__.13} parent=31 // pred_check_branch
        %215 = sbr.rel (%p213) target = $region36
      $region35: #{a_call__.13} parent=31 // pred_region
        %p216 = scmp.lt.s32.totalorder %s18, 1
        %s217 = scalar_select %p216, %s18, 1
        %s218 = smul.addr %s217, 8
        %s219 = scalar_lea.vmem %s0, %s218
      $region36: #{a_call__.13} parent=31 // pred_fallthru
        _
    $region32: #{a_call__.13} parent=5 // pred_fallthru
      _
    %p220 = scmp.le.s32.totalorder 1, %s11
    %p221 = scmp.lt.s32.totalorder %s11, 3
    %p222 = pnand %p220, %p221
    %p223 = pneg %p222
    // Predicated region
    $region37: #{a_call__.13} parent=5 // pred_check
      _
    $region38: #{a_call__.13} parent=5 // pred_check_branch
      %225 = sbr.rel (%p222) target = $region40
    $region39: #{a_call__.13} parent=5 // pred_region
      %s226 = ssub.s32 %s11, 1
      %p227 = scmp.lt.s32.totalorder %s20, 1
      %s228 = scalar_select %p227, %s20, 1
      %s229 = smul.addr %s228, 8
      %s230 = scalar_lea.vmem %s0, %s229
      %p231 = pneg %p49
      %p232 = pneg %p46
      %p233 = pneg %p70
      %p234 = pneg %p67
      %p235 = pneg %p91
      %p236 = pneg %p88
      %s237 = smul.u32 2, %s21
      %p238 = scmp.lt.s32.totalorder %s237, 1
      %s239 = scalar_select %p238, %s237, 1
      %s240 = smul.addr %s239, 8
      %s241 = scalar_lea.vmem %s3, %s240
      %p242 = pneg %p117
      %p243 = pneg %p114
      %s244 = smul.u32 2, %s21
      %p245 = scmp.lt.s32.totalorder %s244, 1
      %s246 = scalar_select %p245, %s244, 1
      %s247 = scalar_lea.vmem %s4, %s246
      %p248 = pneg %p143
      %p249 = pneg %p140
      %p250 = pneg %p171
      %p251 = pneg %p168
      %s252 = smul.u32 2, %s21
      %p253 = scmp.lt.s32.totalorder %s20, 1
      %s254 = scalar_select %p253, %s20, 1
      %p255 = scmp.lt.s32.totalorder %s252, 1
      %s256 = scalar_select %p255, %s252, 1
      %s257 = smul.addr %s254, 2
      %s258 = sadd.s32 %s256, %s257
      %s259 = smul.addr %s258, 8
      %s260 = scalar_lea.vmem %s5, %s259
      %p261 = scmp.lt.s32.totalorder %s20, 1
      %s262 = scalar_select %p261, %s20, 1
      %s263 = smul.addr %s262, 8
      %s264 = scalar_lea.vmem %s0, %s263
      %s265 = smul.u32 2, %s21
      %p266 = scmp.lt.s32.totalorder %s265, 1
      %s267 = scalar_select %p266, %s265, 1
      %s268 = smul.addr %s267, 8
      %s269 = scalar_lea.vmem %s3, %s268
      %s270 = smul.u32 2, %s21
      %s271 = smul.u32 2, %s21
      %p272 = scmp.lt.s32.totalorder %s271, 1
      %s273 = scalar_select %p272, %s271, 1
      %s274 = scalar_lea.vmem %s4, %s273
      %s275 = smul.u32 2, %s21
      %s276 = smul.u32 2, %s21
      %p277 = scmp.lt.s32.totalorder %s20, 1
      %s278 = scalar_select %p277, %s20, 1
      %p279 = scmp.lt.s32.totalorder %s276, 1
      %s280 = scalar_select %p279, %s276, 1
      %s281 = smul.addr %s278, 2
      %s282 = sadd.s32 %s280, %s281
      %s283 = smul.addr %s282, 8
      %s284 = scalar_lea.vmem %s5, %s283
      %s285 = smul.u32 2, %s21
      %p286 = scmp.eq.s32.totalorder %s21, 0
      // Predicated region
      $region41: #{a_call__.13} parent=39 // pred_check
        %p287 = pneg %p286
      $region42: #{a_call__.13} parent=39 // pred_check_branch
        %289 = sbr.rel (%p287) target = $region44
      $region43: #{a_call__.13} parent=39 // pred_region
        %v290 = vld [vmem:[%s264] sm:$0xff]
        %291 = vadd.xlane.f32.xlu0 %v290
        %v292 = vpop.xlane.xlu0 %291
        %v293 = vrcp.pop 128.0
        %v294 = vmul.f32 %v292, %v293
        %v295 = vsub.f32 %v290, %v294
        %v296 = vmul.f32 %v295, %v295
        %297 = vadd.xlane.f32.xlu0 %v296
        %v298 = vpop.xlane.xlu0 %297
        %v299 = vmul.f32 %v298, %v293
        %v300 = vadd.f32 %v299, 1e-05
        %v301 = vrsqrt.pop %v300
        %v302 = vmul.f32 %v295, %v301
        %v303 = vld [vmem:[%s1] sm:$0x1]
        %v305 = vlaneseq
        %v306 = vshrl.u32 %v305, 7
        %v307 = vsub.s32 0, %v306
        %v308 = vrot.slane %v303, %v307
        %v310 = vmul.f32 %v302, %v308
        %v311 = vld [vmem:[%s2] sm:$0x1]
        %v313 = vlaneseq
        %v314 = vshrl.u32 %v313, 7
        %v315 = vsub.s32 0, %v314
        %v316 = vrot.slane %v311, %v315
        %v318 = vadd.f32 %v310, %v316
        %319 = vst [vmem:[#allocation2] sm:$0xff] %v318
      $region44: #{a_call__.13} parent=39 // pred_fallthru
        _
      %v320 = vld [vmem:[#allocation2] sm:$0xff]
      %v321 = vld [vmem:[%s269] sm:$0xff]
      %v322 = vld [vmem:[%s269 + $0x8] sm:$0xff]
      %v323 = vld [vmem:[%s269 + $0x10] sm:$0xff]
      %v324 = vld [vmem:[%s269 + $0x18] sm:$0xff]
      %v325 = vld [vmem:[%s269 + $0x20] sm:$0xff]
      %v326 = vld [vmem:[%s269 + $0x28] sm:$0xff]
      %v327 = vld [vmem:[%s269 + $0x30] sm:$0xff]
      %v328 = vld [vmem:[%s269 + $0x38] sm:$0xff]
      %v329 = vld [vmem:[%s269 + $0x40] sm:$0xff]
      %v330 = vld [vmem:[%s269 + $0x48] sm:$0xff]
      %v331 = vld [vmem:[%s269 + $0x50] sm:$0xff]
      %v332 = vld [vmem:[%s269 + $0x58] sm:$0xff]
      %v333 = vld [vmem:[%s269 + $0x60] sm:$0xff]
      %v334 = vld [vmem:[%s269 + $0x68] sm:$0xff]
      %v335 = vld [vmem:[%s269 + $0x70] sm:$0xff]
      %v336 = vld [vmem:[%s269 + $0x78] sm:$0xff]
      %v337 = vld [vmem:[%s269 + $0x80] sm:$0xff]
      %v338 = vld [vmem:[%s269 + $0x88] sm:$0xff]
      %v339 = vld [vmem:[%s269 + $0x90] sm:$0xff]
      %v340 = vld [vmem:[%s269 + $0x98] sm:$0xff]
      %v341 = vld [vmem:[%s269 + $0xa0] sm:$0xff]
      %v342 = vld [vmem:[%s269 + $0xa8] sm:$0xff]
      %v343 = vld [vmem:[%s269 + $0xb0] sm:$0xff]
      %v344 = vld [vmem:[%s269 + $0xb8] sm:$0xff]
      %v345 = vld [vmem:[%s269 + $0xc0] sm:$0xff]
      %v346 = vld [vmem:[%s269 + $0xc8] sm:$0xff]
      %v347 = vld [vmem:[%s269 + $0xd0] sm:$0xff]
      %v348 = vld [vmem:[%s269 + $0xd8] sm:$0xff]
      %v349 = vld [vmem:[%s269 + $0xe0] sm:$0xff]
      %v350 = vld [vmem:[%s269 + $0xe8] sm:$0xff]
      %v351 = vld [vmem:[%s269 + $0xf0] sm:$0xff]
      %v352 = vld [vmem:[%s269 + $0xf8] sm:$0xff]
      %v353 = vld [vmem:[%s274] sm:$0x3]
      %v355 = vlaneseq
      %v356 = vshrl.u32 %v355, 7
      %v357 = vsub.s32 0, %v356
      %v358 = vrot.slane %v353, %v357
      %v359 = vlaneseq
      %v360 = vshrl.u32 %v359, 7
      %v361 = vsub.s32 1, %v360
      %v362 = vrot.slane %v353, %v361
      %365 = vmatprep.subr.mxu0 %v322
      %366 = vmatpush1.msra.mxu0 %v321
      %367 = vmatprep.subr.mxu0 %v324
      %368 = vmatpush1.msra.mxu0 %v323
      %369 = vmatprep.subr.mxu0 %v326
      %370 = vmatpush1.msra.mxu0 %v325
      %371 = vmatprep.subr.mxu0 %v328
      %372 = vmatpush1.msra.mxu0 %v327
      %373 = vmatprep.subr.mxu0 %v330
      %374 = vmatpush1.msra.mxu0 %v329
      %375 = vmatprep.subr.mxu0 %v332
      %376 = vmatpush1.msra.mxu0 %v331
      %377 = vmatprep.subr.mxu0 %v334
      %378 = vmatpush1.msra.mxu0 %v333
      %379 = vmatprep.subr.mxu0 %v336
      %380 = vmatpush1.msra.mxu0 %v335
      %381 = vmatprep.subr.mxu0 %v338
      %382 = vmatpush1.msra.mxu0 %v337
      %383 = vmatprep.subr.mxu0 %v340
      %384 = vmatpush1.msra.mxu0 %v339
      %385 = vmatprep.subr.mxu0 %v342
      %386 = vmatpush1.msra.mxu0 %v341
      %387 = vmatprep.subr.mxu0 %v344
      %388 = vmatpush1.msra.mxu0 %v343
      %389 = vmatprep.subr.mxu0 %v346
      %390 = vmatpush1.msra.mxu0 %v345
      %391 = vmatprep.subr.mxu0 %v348
      %392 = vmatpush1.msra.mxu0 %v347
      %393 = vmatprep.subr.mxu0 %v350
      %394 = vmatpush1.msra.mxu0 %v349
      %395 = vmatprep.subr.mxu0 %v352
      %396 = vmatpush1.msra.mxu0 %v351
      %397 = vmatprep.subr.mxu0 0.0
      %398 = vmatpush1.msra.mxu0 0.0
      %399 = vmatprep.subr.mxu0 0.0
      %400 = vmatpush1.msra.mxu0 0.0
      %401 = vmatprep.subr.mxu0 0.0
      %402 = vmatpush1.msra.mxu0 0.0
      %403 = vmatprep.subr.mxu0 0.0
      %404 = vmatpush1.msra.mxu0 0.0
      %405 = vmatprep.subr.mxu0 0.0
      %406 = vmatpush1.msra.mxu0 0.0
      %407 = vmatprep.subr.mxu0 0.0
      %408 = vmatpush1.msra.mxu0 0.0
      %409 = vmatprep.subr.mxu0 0.0
      %410 = vmatpush1.msra.mxu0 0.0
      %411 = vmatprep.subr.mxu0 0.0
      %412 = vmatpush1.msra.mxu0 0.0
      %413 = vmatprep.subr.mxu0 0.0
      %414 = vmatpush1.msra.mxu0 0.0
      %415 = vmatprep.subr.mxu0 0.0
      %416 = vmatpush1.msra.mxu0 0.0
      %417 = vmatprep.subr.mxu0 0.0
      %418 = vmatpush1.msra.mxu0 0.0
      %419 = vmatprep.subr.mxu0 0.0
      %420 = vmatpush1.msra.mxu0 0.0
      %421 = vmatprep.subr.mxu0 0.0
      %422 = vmatpush1.msra.mxu0 0.0
      %423 = vmatprep.subr.mxu0 0.0
      %424 = vmatpush1.msra.mxu0 0.0
      %425 = vmatprep.subr.mxu0 0.0
      %426 = vmatpush1.msra.mxu0 0.0
      %427 = vmatprep.subr.mxu0 0.0
      %428 = vmatpush1.msra.mxu0 0.0
      %429 = vmatprep.mubr.f32.mxu0 0.0
      %430 = vmatmul.mubr.f32.gmra.mrb[0].mxu0 %v320
      %v431 = vpop.f32.mrb[0].mxu0
      %v432 = vadd.f32 %v358, %v431
      %v433 = vpop.f32.mrb[0].mxu0
      %v434 = vadd.f32 %v362, %v433
      %435 = vdwg.mxu0
      %v436 = vmax.f32 %v432, 0.0
      %v437 = vmax.f32 %v434, 0.0
      %438 = vst [vmem:[%s284] sm:$0xff] %v436
      %439 = vst [vmem:[%s284 + $0x8] sm:$0xff] %v437
      %s440 = smul.u32 2, %s21
      %p441 = scmp.lt.s32.totalorder %s20, 1
      %s442 = scalar_select %p441, %s20, 1
      %p443 = scmp.lt.s32.totalorder %s440, 1
      %s444 = scalar_select %p443, %s440, 1
      %s445 = smul.addr %s442, 2
      %s446 = sadd.s32 %s444, %s445
      %s447 = smul.addr %s446, 8
      %s448 = scalar_lea.vmem %s5, %s447
      // Predicated region
      $region45: #{a_call__.13} parent=39 // pred_check
        %p449 = pneg %p168
      $region46: #{a_call__.13} parent=39 // pred_check_branch
        %451 = sbr.rel (%p449) target = $region48
      $region47: #{a_call__.13} parent=39 // pred_region
        %s452 = smul.u32 2, %s21
      $region48: #{a_call__.13} parent=39 // pred_fallthru
        _
    $region40: #{a_call__.13} parent=5 // pred_fallthru
      _
    %p453 = scmp.le.s32.totalorder 2, %s11
    // Predicated region
    $region49: #{a_call__.13} parent=5 // pred_check
      %p454 = pneg %p453
    $region50: #{a_call__.13} parent=5 // pred_check_branch
      %456 = sbr.rel (%p454) target = $region52
    $region51: #{a_call__.13} parent=5 // pred_region
      %s457 = ssub.s32 %s11, 2
      // Predicated region
      $region53: #{a_call__.13} parent=51 // pred_check
        %p458 = pneg %p174
      $region54: #{a_call__.13} parent=51 // pred_check_branch
        %460 = sbr.rel (%p458) target = $region56
      $region55: #{a_call__.13} parent=51 // pred_region
        %s461 = smul.u32 2, %s23
        %p462 = scmp.lt.s32.totalorder %s22, 1
        %s463 = scalar_select %p462, %s22, 1
        %p464 = scmp.lt.s32.totalorder %s461, 1
        %s465 = scalar_select %p464, %s461, 1
        %s466 = smul.addr %s463, 2
        %s467 = sadd.s32 %s465, %s466
        %s468 = smul.addr %s467, 8
        %s469 = scalar_lea.vmem %s5, %s468
      $region56: #{a_call__.13} parent=51 // pred_fallthru
        _
    $region52: #{a_call__.13} parent=5 // pred_fallthru
      _
  $region6: #{a_call__.13} parent=0 // loop_footer
    %s15 = sadd.s32 1, %s11
  $region7: #{a_call__.13} parent=0 // loop_footer_branch
    %10 = sbr.rel target = $region3
  $region8: #{a_call__.13} parent=0 // loop_exit
    _

// kernel: a_call__.14
$region0: #{a_call__.14}
  #allocation0 [shape = 'u32[]', space=smem, size = 0x4, offset = 0x4, fixed_abs, tag = 'smem constant byte address 0x4 - core index']
  #allocation1 [shape = 'u32[144,128]{1,0:T(1,128)}', space=vmem, size = 0x12000, scoped, tag = 'internal scratch']
  #allocation2 [shape = 'f32[8,128]{1,0:T(8,128)}', space=vmem, size = 0x1000, scoped, tag = 'scratch operand']
  %s0 = inlined_call_operand.vmem [shape: f32[16,256], index: 0, kind: input, shape index: {}]
  %s1 = inlined_call_operand.vmem [shape: f32[256,128], index: 1, kind: input, shape index: {}]
  %s2 = inlined_call_operand.vmem [shape: f32[1,128], index: 2, kind: input, shape index: {}]
  %s3 = inlined_call_operand.vmem [shape: f32[1,128], index: 3, kind: input, shape index: {}]
  %s4 = inlined_call_operand.vmem [shape: f32[16,128], index: 4, kind: input, shape index: {}, may-alias: {4,5}]
  %s5 = inlined_call_operand.vmem [shape: f32[16,128], index: 5, kind: output, shape index: {}, may-alias: {4,5}]
  %s6 = sld [smem:[#allocation0]]
  $region61: #{a_call__.14} parent=0
    _
  %s8 = ssub.s32 1, %s6
  %s9 = scalar_select 0, %s8, %s6
  loop: start=0, step=1, limit=4
  $region2: #{a_call__.14} parent=0 // loop_pre_header
    _
  $region3: #{a_call__.14} parent=0 // loop_header
    %s11 = sphi 0, %s15
    %p12 = scmp.ge.s32.totalorder %s11, 4
    %s18 = sphi 0, %s37
    %s19 = sphi 0, %s33
    %s20 = sphi 0, %s29
    %s21 = sphi 0, %s18
    %s22 = sphi 0, %s19
    %s23 = sphi 0, %s20
    %s24 = sphi 0, %s21
    %s25 = sphi 0, %s22
    %s26 = sphi 0, %s23
    %s42 = sphi 0, %s44
    %s45 = sphi 0, %s42
    %s46 = sphi 0, %s45
    %s62 = sphi 0, %s46
    %s70 = sphi 0, %s72
    %s73 = sphi 0, %s70
    %s74 = sphi 0, %s73
    %s90 = sphi 0, %s74
    %s96 = sphi 0, %s98
    %s99 = sphi 0, %s96
    %s100 = sphi 0, %s99
    %s116 = sphi 0, %s100
    %s122 = sphi 0, %s124
    %s125 = sphi 0, %s122
    %s126 = sphi 0, %s125
    %s142 = sphi 0, %s126
    %s150 = sphi 0, %s152
    %s153 = sphi 0, %s150
    %s154 = sphi 0, %s153
    %s170 = sphi 0, %s154
    %s178 = sphi 0, %s180
    %s181 = sphi 0, %s178
    %s182 = sphi 0, %s181
    %s198 = sphi 0, %s182
  $region4: #{a_call__.14} parent=0 // loop_header_branch
    %14 = sbr.rel (%p12) target = $region8
  $region5: #{a_call__.14} parent=0 // loop_body
    %s16 = ssub.s32 %s11, 1
    %s17 = ssub.s32 %s11, 2
    %s27 = sadd.s32 1, %s20
    %p28 = scmp.ge.s32.totalorder %s27, 1
    %s29 = scalar_select %p28, 0, %s27
    %s30 = sadd.s32 1, %s19
    %s31 = scalar_select %p28, %s30, %s19
    %p32 = scmp.ge.s32.totalorder %s31, 1
    %s33 = scalar_select %p32, 0, %s31
    %s34 = sadd.s32 1, %s18
    %s35 = scalar_select %p32, %s34, %s18
    %p36 = scmp.ge.s32.totalorder %s35, 2
    %s37 = scalar_select %p36, 0, %s35
    %s38 = ssub.s32 %s18, %s37
    %s39 = ssub.s32 %s20, %s29
    %s40 = sor.u32 %s38, %s39
    %p41 = scmp.eq.s32.totalorder %s40, 0
    %s43 = sadd.s32 %s42, 1
    %s44 = scalar_select %p41, %s42, %s43
    %p47 = pneg %p41
    %p48 = scmp.eq.s32.totalorder %s11, 1
    %p49 = por %p47, %p48
    %p50 = scmp.ne.s32.totalorder %s42, %s45
    %p51 = scmp.eq.s32.totalorder %s11, 0
    %p52 = por %p50, %p51
    %p53 = scmp.ne.s32.totalorder %s42, %s45
    %p54 = scmp.eq.s32.totalorder %s16, 1
    %p55 = por %p53, %p54
    %p56 = scmp.ne.s32.totalorder %s45, %s46
    %p57 = scmp.eq.s32.totalorder %s16, 0
    %p58 = por %p56, %p57
    %p59 = scmp.ne.s32.totalorder %s45, %s46
    %p60 = scmp.eq.s32.totalorder %s17, 1
    %p61 = por %p59, %p60
    %p63 = scmp.ne.s32.totalorder %s46, %s62
    %p64 = scmp.eq.s32.totalorder %s17, 0
    %p65 = por %p63, %p64
    %s66 = ssub.s32 %s20, %s29
    %s67 = ssub.s32 %s19, %s33
    %s68 = sor.u32 %s66, %s67
    %p69 = scmp.eq.s32.totalorder %s68, 0
    %s71 = sadd.s32 %s70, 1
    %s72 = scalar_select %p69, %s70, %s71
    %p75 = pneg %p69
    %p76 = scmp.eq.s32.totalorder %s11, 1
    %p77 = por %p75, %p76
    %p78 = scmp.ne.s32.totalorder %s70, %s73
    %p79 = scmp.eq.s32.totalorder %s11, 0
    %p80 = por %p78, %p79
    %p81 = scmp.ne.s32.totalorder %s70, %s73
    %p82 = scmp.eq.s32.totalorder %s16, 1
    %p83 = por %p81, %p82
    %p84 = scmp.ne.s32.totalorder %s73, %s74
    %p85 = scmp.eq.s32.totalorder %s16, 0
    %p86 = por %p84, %p85
    %p87 = scmp.ne.s32.totalorder %s73, %s74
    %p88 = scmp.eq.s32.totalorder %s17, 1
    %p89 = por %p87, %p88
    %p91 = scmp.ne.s32.totalorder %s74, %s90
    %p92 = scmp.eq.s32.totalorder %s17, 0
    %p93 = por %p91, %p92
    %s94 = ssub.s32 %s19, %s33
    %p95 = scmp.eq.s32.totalorder %s94, 0
    %s97 = sadd.s32 %s96, 1
    %s98 = scalar_select %p95, %s96, %s97
    %p101 = pneg %p95
    %p102 = scmp.eq.s32.totalorder %s11, 1
    %p103 = por %p101, %p102
    %p104 = scmp.ne.s32.totalorder %s96, %s99
    %p105 = scmp.eq.s32.totalorder %s11, 0
    %p106 = por %p104, %p105
    %p107 = scmp.ne.s32.totalorder %s96, %s99
    %p108 = scmp.eq.s32.totalorder %s16, 1
    %p109 = por %p107, %p108
    %p110 = scmp.ne.s32.totalorder %s99, %s100
    %p111 = scmp.eq.s32.totalorder %s16, 0
    %p112 = por %p110, %p111
    %p113 = scmp.ne.s32.totalorder %s99, %s100
    %p114 = scmp.eq.s32.totalorder %s17, 1
    %p115 = por %p113, %p114
    %p117 = scmp.ne.s32.totalorder %s100, %s116
    %p118 = scmp.eq.s32.totalorder %s17, 0
    %p119 = por %p117, %p118
    %s120 = ssub.s32 %s19, %s33
    %p121 = scmp.eq.s32.totalorder %s120, 0
    %s123 = sadd.s32 %s122, 1
    %s124 = scalar_select %p121, %s122, %s123
    %p127 = pneg %p121
    %p128 = scmp.eq.s32.totalorder %s11, 1
    %p129 = por %p127, %p128
    %p130 = scmp.ne.s32.totalorder %s122, %s125
    %p131 = scmp.eq.s32.totalorder %s11, 0
    %p132 = por %p130, %p131
    %p133 = scmp.ne.s32.totalorder %s122, %s125
    %p134 = scmp.eq.s32.totalorder %s16, 1
    %p135 = por %p133, %p134
    %p136 = scmp.ne.s32.totalorder %s125, %s126
    %p137 = scmp.eq.s32.totalorder %s16, 0
    %p138 = por %p136, %p137
    %p139 = scmp.ne.s32.totalorder %s125, %s126
    %p140 = scmp.eq.s32.totalorder %s17, 1
    %p141 = por %p139, %p140
    %p143 = scmp.ne.s32.totalorder %s126, %s142
    %p144 = scmp.eq.s32.totalorder %s17, 0
    %p145 = por %p143, %p144
    %s146 = ssub.s32 %s18, %s37
    %s147 = ssub.s32 %s19, %s33
    %s148 = sor.u32 %s146, %s147
    %p149 = scmp.eq.s32.totalorder %s148, 0
    %s151 = sadd.s32 %s150, 1
    %s152 = scalar_select %p149, %s150, %s151
    %p155 = pneg %p149
    %p156 = scmp.eq.s32.totalorder %s11, 1
    %p157 = por %p155, %p156
    %p158 = scmp.ne.s32.totalorder %s150, %s153
    %p159 = scmp.eq.s32.totalorder %s11, 0
    %p160 = por %p158, %p159
    %p161 = scmp.ne.s32.totalorder %s150, %s153
    %p162 = scmp.eq.s32.totalorder %s16, 1
    %p163 = por %p161, %p162
    %p164 = scmp.ne.s32.totalorder %s153, %s154
    %p165 = scmp.eq.s32.totalorder %s16, 0
    %p166 = por %p164, %p165
    %p167 = scmp.ne.s32.totalorder %s153, %s154
    %p168 = scmp.eq.s32.totalorder %s17, 1
    %p169 = por %p167, %p168
    %p171 = scmp.ne.s32.totalorder %s154, %s170
    %p172 = scmp.eq.s32.totalorder %s17, 0
    %p173 = por %p171, %p172
    %s174 = ssub.s32 %s18, %s37
    %s175 = ssub.s32 %s19, %s33
    %s176 = sor.u32 %s174, %s175
    %p177 = scmp.eq.s32.totalorder %s176, 0
    %s179 = sadd.s32 %s178, 1
    %s180 = scalar_select %p177, %s178, %s179
    %p183 = pneg %p177
    %p184 = scmp.eq.s32.totalorder %s11, 1
    %p185 = por %p183, %p184
    %p186 = scmp.ne.s32.totalorder %s178, %s181
    %p187 = scmp.eq.s32.totalorder %s11, 0
    %p188 = por %p186, %p187
    %p189 = scmp.ne.s32.totalorder %s178, %s181
    %p190 = scmp.eq.s32.totalorder %s16, 1
    %p191 = por %p189, %p190
    %p192 = scmp.ne.s32.totalorder %s181, %s182
    %p193 = scmp.eq.s32.totalorder %s16, 0
    %p194 = por %p192, %p193
    %p195 = scmp.ne.s32.totalorder %s181, %s182
    %p196 = scmp.eq.s32.totalorder %s17, 1
    %p197 = por %p195, %p196
    %p199 = scmp.ne.s32.totalorder %s182, %s198
    %p200 = scmp.eq.s32.totalorder %s17, 0
    %p201 = por %p199, %p200
    %p202 = scmp.le.s32.totalorder 1, %s11
    %p203 = scmp.lt.s32.totalorder %s11, 3
    %p204 = pnand %p202, %p203
    %p205 = pneg %p204
    // Predicated region
    $region9: #{a_call__.14} parent=5 // pred_check
      _
    $region10: #{a_call__.14} parent=5 // pred_check_branch
      %207 = sbr.rel (%p204) target = $region12
    $region11: #{a_call__.14} parent=5 // pred_region
      %s208 = ssub.s32 %s11, 1
      // Predicated region
      $region13: #{a_call__.14} parent=11 // pred_check
        %p209 = pneg %p86
      $region14: #{a_call__.14} parent=11 // pred_check_branch
        %211 = sbr.rel (%p209) target = $region16
      $region15: #{a_call__.14} parent=11 // pred_region
        %s212 = smul.u32 32, %s23
        %p213 = scmp.lt.s32.totalorder %s212, 31
        %s214 = scalar_select %p213, %s212, 31
        %p215 = scmp.lt.s32.totalorder %s22, 0
        %s216 = scalar_select %p215, %s22, 0
        %s217 = sadd.s32 %s216, %s214
        %s218 = smul.addr %s217, 8
        %s219 = scalar_lea.vmem %s1, %s218
        %s220 = smul.u32 32, %s23
      $region16: #{a_call__.14} parent=11 // pred_fallthru
        _
      // Predicated region
      $region17: #{a_call__.14} parent=11 // pred_check
        %p221 = pneg %p112
      $region18: #{a_call__.14} parent=11 // pred_check_branch
        %223 = sbr.rel (%p221) target = $region20
      $region19: #{a_call__.14} parent=11 // pred_region
        %p224 = scmp.lt.s32.totalorder %s22, 0
        %s225 = scalar_select %p224, %s22, 0
        %s226 = scalar_lea.vmem %s2, %s225
      $region20: #{a_call__.14} parent=11 // pred_fallthru
        _
      // Predicated region
      $region21: #{a_call__.14} parent=11 // pred_check
        %p227 = pneg %p138
      $region22: #{a_call__.14} parent=11 // pred_check_branch
        %229 = sbr.rel (%p227) target = $region24
      $region23: #{a_call__.14} parent=11 // pred_region
        %p230 = scmp.lt.s32.totalorder %s22, 0
        %s231 = scalar_select %p230, %s22, 0
        %s232 = scalar_lea.vmem %s3, %s231
      $region24: #{a_call__.14} parent=11 // pred_fallthru
        _
    $region12: #{a_call__.14} parent=5 // pred_fallthru
      _
    %p233 = scmp.lt.s32.totalorder %s11, 2
    // Predicated region
    $region25: #{a_call__.14} parent=5 // pred_check
      %p234 = pneg %p233
    $region26: #{a_call__.14} parent=5 // pred_check_branch
      %236 = sbr.rel (%p234) target = $region28
    $region27: #{a_call__.14} parent=5 // pred_region
      // Predicated region
      $region29: #{a_call__.14} parent=27 // pred_check
        %p237 = pneg %p52
      $region30: #{a_call__.14} parent=27 // pred_check_branch
        %239 = sbr.rel (%p237) target = $region32
      $region31: #{a_call__.14} parent=27 // pred_region
        %s240 = smul.u32 2, %s20
        %p241 = scmp.lt.s32.totalorder %s18, 1
        %s242 = scalar_select %p241, %s18, 1
        %p243 = scmp.lt.s32.totalorder %s240, 1
        %s244 = scalar_select %p243, %s240, 1
        %s245 = smul.addr %s242, 2
        %s246 = sadd.s32 %s244, %s245
        %s247 = smul.addr %s246, 8
        %s248 = scalar_lea.vmem %s0, %s247
        %s249 = smul.u32 2, %s20
      $region32: #{a_call__.14} parent=27 // pred_fallthru
        _
      // Predicated region
      $region33: #{a_call__.14} parent=27 // pred_check
        %p250 = pneg %p160
      $region34: #{a_call__.14} parent=27 // pred_check_branch
        %252 = sbr.rel (%p250) target = $region36
      $region35: #{a_call__.14} parent=27 // pred_region
        %p253 = scmp.lt.s32.totalorder %s18, 1
        %s254 = scalar_select %p253, %s18, 1
        %p255 = scmp.lt.s32.totalorder %s19, 0
        %s256 = scalar_select %p255, %s19, 0
        %s257 = sadd.s32 %s256, %s254
        %s258 = smul.addr %s257, 8
        %s259 = scalar_lea.vmem %s4, %s258
      $region36: #{a_call__.14} parent=27 // pred_fallthru
        _
    $region28: #{a_call__.14} parent=5 // pred_fallthru
      _
    %p260 = scmp.le.s32.totalorder 1, %s11
    %p261 = scmp.lt.s32.totalorder %s11, 3
    %p262 = pnand %p260, %p261
    %p263 = pneg %p262
    // Predicated region
    $region37: #{a_call__.14} parent=5 // pred_check
      _
    $region38: #{a_call__.14} parent=5 // pred_check_branch
      %265 = sbr.rel (%p262) target = $region40
    $region39: #{a_call__.14} parent=5 // pred_region
      %s266 = ssub.s32 %s11, 1
      %s267 = smul.u32 2, %s23
      %p268 = scmp.lt.s32.totalorder %s21, 1
      %s269 = scalar_select %p268, %s21, 1
      %p270 = scmp.lt.s32.totalorder %s267, 1
      %s271 = scalar_select %p270, %s267, 1
      %s272 = smul.addr %s269, 2
      %s273 = sadd.s32 %s271, %s272
      %s274 = smul.addr %s273, 8
      %s275 = scalar_lea.vmem %s0, %s274
      %p276 = pneg %p58
      %p277 = pneg %p55
      %s278 = smul.u32 32, %s23
      %p279 = scmp.lt.s32.totalorder %s278, 31
      %s280 = scalar_select %p279, %s278, 31
      %p281 = scmp.lt.s32.totalorder %s22, 0
      %s282 = scalar_select %p281, %s22, 0
      %s283 = sadd.s32 %s282, %s280
      %s284 = smul.addr %s283, 8
      %s285 = scalar_lea.vmem %s1, %s284
      %p286 = pneg %p86
      %p287 = pneg %p83
      %p288 = scmp.lt.s32.totalorder %s22, 0
      %s289 = scalar_select %p288, %s22, 0
      %s290 = scalar_lea.vmem %s2, %s289
      %p291 = pneg %p112
      %p292 = pneg %p109
      %p293 = scmp.lt.s32.totalorder %s22, 0
      %s294 = scalar_select %p293, %s22, 0
      %s295 = scalar_lea.vmem %s3, %s294
      %p296 = pneg %p138
      %p297 = pneg %p135
      %p298 = scmp.lt.s32.totalorder %s21, 1
      %s299 = scalar_select %p298, %s21, 1
      %p300 = scmp.lt.s32.totalorder %s22, 0
      %s301 = scalar_select %p300, %s22, 0
      %s302 = sadd.s32 %s301, %s299
      %s303 = smul.addr %s302, 8
      %s304 = scalar_lea.vmem %s4, %s303
      %p305 = pneg %p166
      %p306 = pneg %p163
      %p307 = pneg %p194
      %p308 = pneg %p191
      %p309 = scmp.lt.s32.totalorder %s21, 1
      %s310 = scalar_select %p309, %s21, 1
      %p311 = scmp.lt.s32.totalorder %s22, 0
      %s312 = scalar_select %p311, %s22, 0
      %s313 = sadd.s32 %s312, %s310
      %s314 = smul.addr %s313, 8
      %s315 = scalar_lea.vmem %s5, %s314
      %s316 = smul.u32 2, %s23
      %p317 = scmp.lt.s32.totalorder %s21, 1
      %s318 = scalar_select %p317, %s21, 1
      %p319 = scmp.lt.s32.totalorder %s316, 1
      %s320 = scalar_select %p319, %s316, 1
      %s321 = smul.addr %s318, 2
      %s322 = sadd.s32 %s320, %s321
      %s323 = smul.addr %s322, 8
      %s324 = scalar_lea.vmem %s0, %s323
      %s325 = smul.u32 2, %s23
      %s326 = smul.u32 32, %s23
      %p327 = scmp.lt.s32.totalorder %s326, 31
      %s328 = scalar_select %p327, %s326, 31
      %p329 = scmp.lt.s32.totalorder %s22, 0
      %s330 = scalar_select %p329, %s22, 0
      %s331 = sadd.s32 %s330, %s328
      %s332 = smul.addr %s331, 8
      %s333 = scalar_lea.vmem %s1, %s332
      %s334 = smul.u32 32, %s23
      %p335 = scmp.lt.s32.totalorder %s22, 0
      %s336 = scalar_select %p335, %s22, 0
      %s337 = scalar_lea.vmem %s2, %s336
      %p338 = scmp.lt.s32.totalorder %s22, 0
      %s339 = scalar_select %p338, %s22, 0
      %s340 = scalar_lea.vmem %s3, %s339
      %p341 = scmp.lt.s32.totalorder %s21, 1
      %s342 = scalar_select %p341, %s21, 1
      %p343 = scmp.lt.s32.totalorder %s22, 0
      %s344 = scalar_select %p343, %s22, 0
      %s345 = sadd.s32 %s344, %s342
      %s346 = smul.addr %s345, 8
      %s347 = scalar_lea.vmem %s4, %s346
      %p348 = scmp.lt.s32.totalorder %s21, 1
      %s349 = scalar_select %p348, %s21, 1
      %p350 = scmp.lt.s32.totalorder %s22, 0
      %s351 = scalar_select %p350, %s22, 0
      %s352 = sadd.s32 %s351, %s349
      %s353 = smul.addr %s352, 8
      %s354 = scalar_lea.vmem %s5, %s353
      %p355 = scmp.eq.s32.totalorder %s23, 0
      // Predicated region
      $region41: #{a_call__.14} parent=39 // pred_check
        %p356 = pneg %p355
      $region42: #{a_call__.14} parent=39 // pred_check_branch
        %358 = sbr.rel (%p356) target = $region44
      $region43: #{a_call__.14} parent=39 // pred_region
        %359 = vst [vmem:[#allocation2] sm:$0xff] 0.0
      $region44: #{a_call__.14} parent=39 // pred_fallthru
        _
      %v360 = vld [vmem:[#allocation2] sm:$0xff]
      %v361 = vld [vmem:[%s324] sm:$0xff]
      %v362 = vld [vmem:[%s324 + $0x8] sm:$0xff]
      %v363 = vld [vmem:[%s333] sm:$0xff]
      %v364 = vld [vmem:[%s333 + $0x8] sm:$0xff]
      %v365 = vld [vmem:[%s333 + $0x10] sm:$0xff]
      %v366 = vld [vmem:[%s333 + $0x18] sm:$0xff]
      %v367 = vld [vmem:[%s333 + $0x20] sm:$0xff]
      %v368 = vld [vmem:[%s333 + $0x28] sm:$0xff]
      %v369 = vld [vmem:[%s333 + $0x30] sm:$0xff]
      %v370 = vld [vmem:[%s333 + $0x38] sm:$0xff]
      %v371 = vld [vmem:[%s333 + $0x40] sm:$0xff]
      %v372 = vld [vmem:[%s333 + $0x48] sm:$0xff]
      %v373 = vld [vmem:[%s333 + $0x50] sm:$0xff]
      %v374 = vld [vmem:[%s333 + $0x58] sm:$0xff]
      %v375 = vld [vmem:[%s333 + $0x60] sm:$0xff]
      %v376 = vld [vmem:[%s333 + $0x68] sm:$0xff]
      %v377 = vld [vmem:[%s333 + $0x70] sm:$0xff]
      %v378 = vld [vmem:[%s333 + $0x78] sm:$0xff]
      %v379 = vld [vmem:[%s333 + $0x80] sm:$0xff]
      %v380 = vld [vmem:[%s333 + $0x88] sm:$0xff]
      %v381 = vld [vmem:[%s333 + $0x90] sm:$0xff]
      %v382 = vld [vmem:[%s333 + $0x98] sm:$0xff]
      %v383 = vld [vmem:[%s333 + $0xa0] sm:$0xff]
      %v384 = vld [vmem:[%s333 + $0xa8] sm:$0xff]
      %v385 = vld [vmem:[%s333 + $0xb0] sm:$0xff]
      %v386 = vld [vmem:[%s333 + $0xb8] sm:$0xff]
      %v387 = vld [vmem:[%s333 + $0xc0] sm:$0xff]
      %v388 = vld [vmem:[%s333 + $0xc8] sm:$0xff]
      %v389 = vld [vmem:[%s333 + $0xd0] sm:$0xff]
      %v390 = vld [vmem:[%s333 + $0xd8] sm:$0xff]
      %v391 = vld [vmem:[%s333 + $0xe0] sm:$0xff]
      %v392 = vld [vmem:[%s333 + $0xe8] sm:$0xff]
      %v393 = vld [vmem:[%s333 + $0xf0] sm:$0xff]
      %v394 = vld [vmem:[%s333 + $0xf8] sm:$0xff]
      %395 = vmatprep.subr.mxu0 0.0
      %396 = vmatpush1.msra.mxu0 %v363
      %397 = vmatprep.subr.mxu0 0.0
      %398 = vmatpush1.msra.mxu0 %v364
      %399 = vmatprep.subr.mxu0 0.0
      %400 = vmatpush1.msra.mxu0 %v365
      %401 = vmatprep.subr.mxu0 0.0
      %402 = vmatpush1.msra.mxu0 %v366
      %403 = vmatprep.subr.mxu0 0.0
      %404 = vmatpush1.msra.mxu0 %v367
      %405 = vmatprep.subr.mxu0 0.0
      %406 = vmatpush1.msra.mxu0 %v368
      %407 = vmatprep.subr.mxu0 0.0
      %408 = vmatpush1.msra.mxu0 %v369
      %409 = vmatprep.subr.mxu0 0.0
      %410 = vmatpush1.msra.mxu0 %v370
      %411 = vmatprep.subr.mxu0 0.0
      %412 = vmatpush1.msra.mxu0 %v371
      %413 = vmatprep.subr.mxu0 0.0
      %414 = vmatpush1.msra.mxu0 %v372
      %415 = vmatprep.subr.mxu0 0.0
      %416 = vmatpush1.msra.mxu0 %v373
      %417 = vmatprep.subr.mxu0 0.0
      %418 = vmatpush1.msra.mxu0 %v374
      %419 = vmatprep.subr.mxu0 0.0
      %420 = vmatpush1.msra.mxu0 %v375
      %421 = vmatprep.subr.mxu0 0.0
      %422 = vmatpush1.msra.mxu0 %v376
      %423 = vmatprep.subr.mxu0 0.0
      %424 = vmatpush1.msra.mxu0 %v377
      %425 = vmatprep.subr.mxu0 0.0
      %426 = vmatpush1.msra.mxu0 %v378
      %427 = vmatprep.subr.mxu0 0.0
      %428 = vmatpush1.msra.mxu0 %v379
      %429 = vmatprep.subr.mxu0 0.0
      %430 = vmatpush1.msra.mxu0 %v380
      %431 = vmatprep.subr.mxu0 0.0
      %432 = vmatpush1.msra.mxu0 %v381
      %433 = vmatprep.subr.mxu0 0.0
      %434 = vmatpush1.msra.mxu0 %v382
      %435 = vmatprep.subr.mxu0 0.0
      %436 = vmatpush1.msra.mxu0 %v383
      %437 = vmatprep.subr.mxu0 0.0
      %438 = vmatpush1.msra.mxu0 %v384
      %439 = vmatprep.subr.mxu0 0.0
      %440 = vmatpush1.msra.mxu0 %v385
      %441 = vmatprep.subr.mxu0 0.0
      %442 = vmatpush1.msra.mxu0 %v386
      %443 = vmatprep.subr.mxu0 0.0
      %444 = vmatpush1.msra.mxu0 %v387
      %445 = vmatprep.subr.mxu0 0.0
      %446 = vmatpush1.msra.mxu0 %v388
      %447 = vmatprep.subr.mxu0 0.0
      %448 = vmatpush1.msra.mxu0 %v389
      %449 = vmatprep.subr.mxu0 0.0
      %450 = vmatpush1.msra.mxu0 %v390
      %451 = vmatprep.subr.mxu0 0.0
      %452 = vmatpush1.msra.mxu0 %v391
      %453 = vmatprep.subr.mxu0 0.0
      %454 = vmatpush1.msra.mxu0 %v392
      %455 = vmatprep.subr.mxu0 0.0
      %456 = vmatpush1.msra.mxu0 %v393
      %457 = vmatprep.subr.mxu0 0.0
      %458 = vmatpush1.msra.mxu0 %v394
      %459 = vmatprep.mubr.f32.mxu0 %v362
      %460 = vmatmul.mubr.f32.gmra.mrb[0].mxu0 %v361
      %v461 = vpop.f32.mrb[0].mxu0
      %v462 = vadd.f32 0.0, %v461
      %v463 = vpop.f32.mrb[0].mxu0
      %464 = vdwg.mxu0
      %v465 = vadd.f32 %v360, %v462
      %466 = vst [vmem:[#allocation2] sm:$0xff] %v465
      // Predicated region
      $region45: #{a_call__.14} parent=39 // pred_check
        %p467 = pneg %p355
      $region46: #{a_call__.14} parent=39 // pred_check_branch
        %469 = sbr.rel (%p467) target = $region48
      $region47: #{a_call__.14} parent=39 // pred_region
        %v470 = vld [vmem:[#allocation2] sm:$0xff]
        %v471 = vld [vmem:[%s337] sm:$0x1]
        %v473 = vlaneseq
        %v474 = vshrl.u32 %v473, 7
        %v475 = vsub.s32 0, %v474
        %v476 = vrot.slane %v471, %v475
        %v478 = vadd.f32 %v470, %v476
        %v479 = vld [vmem:[%s340] sm:$0x1]
        %v481 = vlaneseq
        %v482 = vshrl.u32 %v481, 7
        %v483 = vsub.s32 0, %v482
        %v484 = vrot.slane %v479, %v483
        %v486 = vmul.f32 %v478, %v484
        %v487 = vld [vmem:[%s347] sm:$0xff]
        %v488 = vadd.f32 %v486, %v487
        %489 = vst [vmem:[%s354] sm:$0xff] %v488
      $region48: #{a_call__.14} parent=39 // pred_fallthru
        _
      %p490 = scmp.lt.s32.totalorder %s21, 1
      %s491 = scalar_select %p490, %s21, 1
      %p492 = scmp.lt.s32.totalorder %s22, 0
      %s493 = scalar_select %p492, %s22, 0
      %s494 = sadd.s32 %s493, %s491
      %s495 = smul.addr %s494, 8
      %s496 = scalar_lea.vmem %s5, %s495
      // Predicated region
      $region49: #{a_call__.14} parent=39 // pred_check
        %p497 = pneg %p191
      $region50: #{a_call__.14} parent=39 // pred_check_branch
        %499 = sbr.rel (%p497) target = $region52
      $region51: #{a_call__.14} parent=39 // pred_region
        _
      $region52: #{a_call__.14} parent=39 // pred_fallthru
        _
    $region40: #{a_call__.14} parent=5 // pred_fallthru
      _
    %p500 = scmp.le.s32.totalorder 2, %s11
    // Predicated region
    $region53: #{a_call__.14} parent=5 // pred_check
      %p501 = pneg %p500
    $region54: #{a_call__.14} parent=5 // pred_check_branch
      %503 = sbr.rel (%p501) target = $region56
    $region55: #{a_call__.14} parent=5 // pred_region
      %s504 = ssub.s32 %s11, 2
      // Predicated region
      $region57: #{a_call__.14} parent=55 // pred_check
        %p505 = pneg %p197
      $region58: #{a_call__.14} parent=55 // pred_check_branch
        %507 = sbr.rel (%p505) target = $region60
      $region59: #{a_call__.14} parent=55 // pred_region
        %p508 = scmp.lt.s32.totalorder %s24, 1
        %s509 = scalar_select %p508, %s24, 1
        %p510 = scmp.lt.s32.totalorder %s25, 0
        %s511 = scalar_select %p510, %s25, 0
        %s512 = sadd.s32 %s511, %s509
        %s513 = smul.addr %s512, 8
        %s514 = scalar_lea.vmem %s5, %s513
      $region60: #{a_call__.14} parent=55 // pred_fallthru
        _
    $region56: #{a_call__.14} parent=5 // pred_fallthru
      _
  $region6: #{a_call__.14} parent=0 // loop_footer
    %s15 = sadd.s32 1, %s11
  $region7: #{a_call__.14} parent=0 // loop_footer_branch
    %10 = sbr.rel target = $region3
  $region8: #{a_call__.14} parent=0 // loop_exit
    _

// kernel: a_call__.15
$region0: #{a_call__.15}
  #allocation0 [shape = 'u32[]', space=smem, size = 0x4, offset = 0x4, fixed_abs, tag = 'smem constant byte address 0x4 - core index']
  #allocation1 [shape = 'u32[144,128]{1,0:T(1,128)}', space=vmem, size = 0x12000, scoped, tag = 'internal scratch']
  #allocation2 [shape = 'f32[8,128]{1,0:T(8,128)}', space=vmem, size = 0x1000, scoped, tag = 'scratch operand']
  %s0 = inlined_call_operand.vmem [shape: f32[16,128], index: 0, kind: input, shape index: {}]
  %s1 = inlined_call_operand.vmem [shape: f32[1,128], index: 1, kind: input, shape index: {}]
  %s2 = inlined_call_operand.vmem [shape: f32[1,128], index: 2, kind: input, shape index: {}]
  %s3 = inlined_call_operand.vmem [shape: f32[128,384], index: 3, kind: input, shape index: {}]
  %s4 = inlined_call_operand.vmem [shape: f32[1,384], index: 4, kind: input, shape index: {}]
  %s5 = inlined_call_operand.vmem [shape: f32[16,384], index: 5, kind: output, shape index: {}]
  %s6 = sld [smem:[#allocation0]]
  $region95: #{a_call__.15} parent=0
    _
  %s8 = ssub.s32 1, %s6
  %s9 = scalar_select 0, %s8, %s6
  $region1: #{a_call__.15} parent=0
    #allocation3 [shape = 'u8[131072]{0}', space=vmem, size = 0x20000, scoped, tag = 'input window, operand 3']
    loop: start=0, step=1, limit=8
    $region2: #{a_call__.15} parent=1 // loop_pre_header
      _
    $region3: #{a_call__.15} parent=1 // loop_header
      %s11 = sphi 0, %s15
      %p12 = scmp.ge.s32.totalorder %s11, 8
      %s18 = sphi 0, %s30
      %s19 = sphi 0, %s26
      %s20 = sphi 0, %s18
      %s21 = sphi 0, %s19
      %s22 = sphi 0, %s20
      %s23 = sphi 0, %s21
      %s33 = sphi 0, %s35
      %s36 = sphi 0, %s33
      %s37 = sphi 0, %s36
      %s53 = sphi 0, %s37
      %s57 = sphi 0, %s57
      %s59 = sphi 0, %s57
      %s60 = sphi 0, %s59
      %s74 = sphi 0, %s60
      %s78 = sphi 0, %s78
      %s80 = sphi 0, %s78
      %s81 = sphi 0, %s80
      %s95 = sphi 0, %s81
      %s101 = sphi 0, %s103
      %s104 = sphi 0, %s101
      %s105 = sphi 0, %s104
      %s121 = sphi 0, %s105
      %s127 = sphi 0, %s129
      %s130 = sphi 0, %s127
      %s131 = sphi 0, %s130
      %s147 = sphi 0, %s131
      %s155 = sphi 0, %s157
      %s158 = sphi 0, %s155
      %s159 = sphi 0, %s158
      %s175 = sphi 0, %s159
    $region4: #{a_call__.15} parent=1 // loop_header_branch
      %14 = sbr.rel (%p12) target = $region8
    $region5: #{a_call__.15} parent=1 // loop_body
      %s16 = ssub.s32 %s11, 1
      %s17 = ssub.s32 %s11, 2
      %s24 = sadd.s32 1, %s19
      %p25 = scmp.ge.s32.totalorder %s24, 3
      %s26 = scalar_select %p25, 0, %s24
      %s27 = sadd.s32 1, %s18
      %s28 = scalar_select %p25, %s27, %s18
      %p29 = scmp.ge.s32.totalorder %s28, 2
      %s30 = scalar_select %p29, 0, %s28
      %s31 = ssub.s32 %s18, %s30
      %p32 = scmp.eq.s32.totalorder %s31, 0
      %s34 = sadd.s32 %s33, 1
      %s35 = scalar_select %p32, %s33, %s34
      %p38 = pneg %p32
      %p39 = scmp.eq.s32.totalorder %s11, 5
      %p40 = por %p38, %p39
      %p41 = scmp.ne.s32.totalorder %s33, %s36
      %p42 = scmp.eq.s32.totalorder %s11, 0
      %p43 = por %p41, %p42
      %p44 = scmp.ne.s32.totalorder %s33, %s36
      %p45 = scmp.eq.s32.totalorder %s16, 5
      %p46 = por %p44, %p45
      %p47 = scmp.ne.s32.totalorder %s36, %s37
      %p48 = scmp.eq.s32.totalorder %s16, 0
      %p49 = por %p47, %p48
      %p50 = scmp.ne.s32.totalorder %s36, %s37
      %p51 = scmp.eq.s32.totalorder %s17, 5
      %p52 = por %p50, %p51
      %p54 = scmp.ne.s32.totalorder %s37, %s53
      %p55 = scmp.eq.s32.totalorder %s17, 0
      %p56 = por %p54, %p55
      %s58 = sadd.s32 %s57, 1
      %p61 = scmp.eq.s32.totalorder %s11, 5
      %p62 = scmp.ne.s32.totalorder %s57, %s59
      %p63 = scmp.eq.s32.totalorder %s11, 0
      %p64 = por %p62, %p63
      %p65 = scmp.ne.s32.totalorder %s57, %s59
      %p66 = scmp.eq.s32.totalorder %s16, 5
      %p67 = por %p65, %p66
      %p68 = scmp.ne.s32.totalorder %s59, %s60
      %p69 = scmp.eq.s32.totalorder %s16, 0
      %p70 = por %p68, %p69
      %p71 = scmp.ne.s32.totalorder %s59, %s60
      %p72 = scmp.eq.s32.totalorder %s17, 5
      %p73 = por %p71, %p72
      %p75 = scmp.ne.s32.totalorder %s60, %s74
      %p76 = scmp.eq.s32.totalorder %s17, 0
      %p77 = por %p75, %p76
      %s79 = sadd.s32 %s78, 1
      %p82 = scmp.eq.s32.totalorder %s11, 5
      %p83 = scmp.ne.s32.totalorder %s78, %s80
      %p84 = scmp.eq.s32.totalorder %s11, 0
      %p85 = por %p83, %p84
      %p86 = scmp.ne.s32.totalorder %s78, %s80
      %p87 = scmp.eq.s32.totalorder %s16, 5
      %p88 = por %p86, %p87
      %p89 = scmp.ne.s32.totalorder %s80, %s81
      %p90 = scmp.eq.s32.totalorder %s16, 0
      %p91 = por %p89, %p90
      %p92 = scmp.ne.s32.totalorder %s80, %s81
      %p93 = scmp.eq.s32.totalorder %s17, 5
      %p94 = por %p92, %p93
      %p96 = scmp.ne.s32.totalorder %s81, %s95
      %p97 = scmp.eq.s32.totalorder %s17, 0
      %p98 = por %p96, %p97
      %s99 = ssub.s32 %s19, %s26
      %p100 = scmp.eq.s32.totalorder %s99, 0
      %s102 = sadd.s32 %s101, 1
      %s103 = scalar_select %p100, %s101, %s102
      %p106 = pneg %p100
      %p107 = scmp.eq.s32.totalorder %s11, 5
      %p108 = por %p106, %p107
      %p109 = scmp.ne.s32.totalorder %s101, %s104
      %p110 = scmp.eq.s32.totalorder %s11, 0
      %p111 = por %p109, %p110
      %p112 = scmp.ne.s32.totalorder %s101, %s104
      %p113 = scmp.eq.s32.totalorder %s16, 5
      %p114 = por %p112, %p113
      %p115 = scmp.ne.s32.totalorder %s104, %s105
      %p116 = scmp.eq.s32.totalorder %s16, 0
      %p117 = por %p115, %p116
      %p118 = scmp.ne.s32.totalorder %s104, %s105
      %p119 = scmp.eq.s32.totalorder %s17, 5
      %p120 = por %p118, %p119
      %p122 = scmp.ne.s32.totalorder %s105, %s121
      %p123 = scmp.eq.s32.totalorder %s17, 0
      %p124 = por %p122, %p123
      %s125 = ssub.s32 %s19, %s26
      %p126 = scmp.eq.s32.totalorder %s125, 0
      %s128 = sadd.s32 %s127, 1
      %s129 = scalar_select %p126, %s127, %s128
      %p132 = pneg %p126
      %p133 = scmp.eq.s32.totalorder %s11, 5
      %p134 = por %p132, %p133
      %p135 = scmp.ne.s32.totalorder %s127, %s130
      %p136 = scmp.eq.s32.totalorder %s11, 0
      %p137 = por %p135, %p136
      %p138 = scmp.ne.s32.totalorder %s127, %s130
      %p139 = scmp.eq.s32.totalorder %s16, 5
      %p140 = por %p138, %p139
      %p141 = scmp.ne.s32.totalorder %s130, %s131
      %p142 = scmp.eq.s32.totalorder %s16, 0
      %p143 = por %p141, %p142
      %p144 = scmp.ne.s32.totalorder %s130, %s131
      %p145 = scmp.eq.s32.totalorder %s17, 5
      %p146 = por %p144, %p145
      %p148 = scmp.ne.s32.totalorder %s131, %s147
      %p149 = scmp.eq.s32.totalorder %s17, 0
      %p150 = por %p148, %p149
      %s151 = ssub.s32 %s18, %s30
      %s152 = ssub.s32 %s19, %s26
      %s153 = sor.u32 %s151, %s152
      %p154 = scmp.eq.s32.totalorder %s153, 0
      %s156 = sadd.s32 %s155, 1
      %s157 = scalar_select %p154, %s155, %s156
      %p160 = pneg %p154
      %p161 = scmp.eq.s32.totalorder %s11, 5
      %p162 = por %p160, %p161
      %p163 = scmp.ne.s32.totalorder %s155, %s158
      %p164 = scmp.eq.s32.totalorder %s11, 0
      %p165 = por %p163, %p164
      %p166 = scmp.ne.s32.totalorder %s155, %s158
      %p167 = scmp.eq.s32.totalorder %s16, 5
      %p168 = por %p166, %p167
      %p169 = scmp.ne.s32.totalorder %s158, %s159
      %p170 = scmp.eq.s32.totalorder %s16, 0
      %p171 = por %p169, %p170
      %p172 = scmp.ne.s32.totalorder %s158, %s159
      %p173 = scmp.eq.s32.totalorder %s17, 5
      %p174 = por %p172, %p173
      %p176 = scmp.ne.s32.totalorder %s159, %s175
      %p177 = scmp.eq.s32.totalorder %s17, 0
      %p178 = por %p176, %p177
      %p179 = scmp.le.s32.totalorder 1, %s11
      %p180 = scmp.lt.s32.totalorder %s11, 7
      %p181 = pnand %p179, %p180
      %p182 = pneg %p181
      // Predicated region
      $region9: #{a_call__.15} parent=5 // pred_check
        _
      $region10: #{a_call__.15} parent=5 // pred_check_branch
        %184 = sbr.rel (%p181) target = $region12
      $region11: #{a_call__.15} parent=5 // pred_region
        %s185 = ssub.s32 %s11, 1
        // Predicated region
        $region13: #{a_call__.15} parent=11 // pred_check
          %p186 = pneg %p70
        $region14: #{a_call__.15} parent=11 // pred_check_branch
          %188 = sbr.rel (%p186) target = $region16
        $region15: #{a_call__.15} parent=11 // pred_region
          _
        $region16: #{a_call__.15} parent=11 // pred_fallthru
          _
        // Predicated region
        $region17: #{a_call__.15} parent=11 // pred_check
          %p189 = pneg %p91
        $region18: #{a_call__.15} parent=11 // pred_check_branch
          %191 = sbr.rel (%p189) target = $region20
        $region19: #{a_call__.15} parent=11 // pred_region
          _
        $region20: #{a_call__.15} parent=11 // pred_fallthru
          _
      $region12: #{a_call__.15} parent=5 // pred_fallthru
        _
      %p192 = scmp.lt.s32.totalorder %s11, 6
      // Predicated region
      $region21: #{a_call__.15} parent=5 // pred_check
        %p193 = pneg %p192
      $region22: #{a_call__.15} parent=5 // pred_check_branch
        %195 = sbr.rel (%p193) target = $region24
      $region23: #{a_call__.15} parent=5 // pred_region
        // Predicated region
        $region25: #{a_call__.15} parent=23 // pred_check
          %p196 = pneg %p43
        $region26: #{a_call__.15} parent=23 // pred_check_branch
          %198 = sbr.rel (%p196) target = $region28
        $region27: #{a_call__.15} parent=23 // pred_region
          %p199 = scmp.lt.s32.totalorder %s18, 1
          %s200 = scalar_select %p199, %s18, 1
          %s201 = smul.addr %s200, 8
          %s202 = scalar_lea.vmem %s0, %s201
        $region28: #{a_call__.15} parent=23 // pred_fallthru
          _
        // Predicated region
        $region29: #{a_call__.15} parent=23 // pred_check
          %p203 = pneg %p111
        $region30: #{a_call__.15} parent=23 // pred_check_branch
          %205 = sbr.rel (%p203) target = $region32
        $region31: #{a_call__.15} parent=23 // pred_region
          %s206 = sand.u32 %s101, 1
          %s207 = sand.u32 %s101, 1
          %s208 = smul.addr %s207, 128
          %s209 = scalar_lea.vmem [#allocation3], %s208
          %s210 = smul.addr %s19, 8
          %s211 = scalar_lea.vmem %s3, %s210
          // Predicated region
          $region33: #{a_call__.15} parent=31 // pred_check
            _
          $region34: #{a_call__.15} parent=31 // pred_check_branch
            %213 = sbr.rel (0) target = $region36
          $region35: #{a_call__.15} parent=31 // pred_region
            // Predicated region
            $region37: #{a_call__.15} parent=35 // pred_check
              _
            $region38: #{a_call__.15} parent=35 // pred_check_branch
              %215 = sbr.rel (0) target = $region40
            $region39: #{a_call__.15} parent=35 // pred_region
              // Predicated region
              $region52: #{a_call__.15} parent=39 // pred_check
                _
              $region53: #{a_call__.15} parent=39 // pred_check_branch
                %260 = sbr.rel (0) target = $region55
              $region54: #{a_call__.15} parent=39 // pred_region
                loop: start=0, step=1, limit=1
                $region56: #{a_call__.15} parent=54 // loop_pre_header
                  _
                $region57: #{a_call__.15} parent=54 // loop_header
                  %s262 = sphi 0, %s266
                  %p263 = scmp.ge.s32.totalorder %s262, 1
                  %s267 = sphi %s211, %s211
                  %s268 = sphi %s209, %s209
                $region58: #{a_call__.15} parent=54 // loop_header_branch
                  %265 = sbr.rel (%p263) target = $region62
                $region59: #{a_call__.15} parent=54 // loop_body
                  %v269 = vld [vmem:[%s267] sm:$0xff]
                  %270 = vst [vmem:[%s268] sm:$0xff] %v269
                  %v271 = vld [vmem:[%s267 + $0x18] sm:$0xff]
                  %272 = vst [vmem:[%s268 + $0x8] sm:$0xff] %v271
                  %v273 = vld [vmem:[%s267 + $0x30] sm:$0xff]
                  %274 = vst [vmem:[%s268 + $0x10] sm:$0xff] %v273
                  %v275 = vld [vmem:[%s267 + $0x48] sm:$0xff]
                  %276 = vst [vmem:[%s268 + $0x18] sm:$0xff] %v275
                  %v277 = vld [vmem:[%s267 + $0x60] sm:$0xff]
                  %278 = vst [vmem:[%s268 + $0x20] sm:$0xff] %v277
                  %v279 = vld [vmem:[%s267 + $0x78] sm:$0xff]
                  %280 = vst [vmem:[%s268 + $0x28] sm:$0xff] %v279
                  %v281 = vld [vmem:[%s267 + $0x90] sm:$0xff]
                  %282 = vst [vmem:[%s268 + $0x30] sm:$0xff] %v281
                  %v283 = vld [vmem:[%s267 + $0xa8] sm:$0xff]
                  %284 = vst [vmem:[%s268 + $0x38] sm:$0xff] %v283
                  %v285 = vld [vmem:[%s267 + $0xc0] sm:$0xff]
                  %286 = vst [vmem:[%s268 + $0x40] sm:$0xff] %v285
                  %v287 = vld [vmem:[%s267 + $0xd8] sm:$0xff]
                  %288 = vst [vmem:[%s268 + $0x48] sm:$0xff] %v287
                  %v289 = vld [vmem:[%s267 + $0xf0] sm:$0xff]
                  %290 = vst [vmem:[%s268 + $0x50] sm:$0xff] %v289
                  %v291 = vld [vmem:[%s267 + $0x108] sm:$0xff]
                  %292 = vst [vmem:[%s268 + $0x58] sm:$0xff] %v291
                  %v293 = vld [vmem:[%s267 + $0x120] sm:$0xff]
                  %294 = vst [vmem:[%s268 + $0x60] sm:$0xff] %v293
                  %v295 = vld [vmem:[%s267 + $0x138] sm:$0xff]
                  %296 = vst [vmem:[%s268 + $0x68] sm:$0xff] %v295
                  %v297 = vld [vmem:[%s267 + $0x150] sm:$0xff]
                  %298 = vst [vmem:[%s268 + $0x70] sm:$0xff] %v297
                  %v299 = vld [vmem:[%s267 + $0x168] sm:$0xff]
                  %300 = vst [vmem:[%s268 + $0x78] sm:$0xff] %v299
                $region60: #{a_call__.15} parent=54 // loop_footer
                  %s266 = sadd.s32 1, %s262
                $region61: #{a_call__.15} parent=54 // loop_footer_branch
                  %261 = sbr.rel target = $region57
                $region62: #{a_call__.15} parent=54 // loop_exit
                  _
              $region55: #{a_call__.15} parent=39 // pred_fallthru
                _
              // Predicated region
              $region63: #{a_call__.15} parent=39 // pred_check
                _
              $region64: #{a_call__.15} parent=39 // pred_check_branch
                %302 = sbr.rel target = $region66
              $region65: #{a_call__.15} parent=39 // pred_region
                _
              $region66: #{a_call__.15} parent=39 // pred_fallthru
                _
            $region40: #{a_call__.15} parent=35 // pred_fallthru
              _
            // Predicated region
            $region41: #{a_call__.15} parent=35 // pred_check
              _
            $region42: #{a_call__.15} parent=35 // pred_check_branch
              %217 = sbr.rel target = $region44
            $region43: #{a_call__.15} parent=35 // pred_region
              loop: start=0, step=1, limit=1
              $region45: #{a_call__.15} parent=43 // loop_pre_header
                _
              $region46: #{a_call__.15} parent=43 // loop_header
                %s220 = sphi 0, %s224
                %p221 = scmp.ge.s32.totalorder %s220, 1
                %s225 = sphi %s211, %s211
                %s226 = sphi %s209, %s209
              $region47: #{a_call__.15} parent=43 // loop_header_branch
                %223 = sbr.rel (%p221) target = $region51
              $region48: #{a_call__.15} parent=43 // loop_body
                %v227 = vld [vmem:[%s225] sm:$0xff]
                %228 = vst [vmem:[%s226] sm:$0xff] %v227
                %v229 = vld [vmem:[%s225 + $0x18] sm:$0xff]
                %230 = vst [vmem:[%s226 + $0x8] sm:$0xff] %v229
                %v231 = vld [vmem:[%s225 + $0x30] sm:$0xff]
                %232 = vst [vmem:[%s226 + $0x10] sm:$0xff] %v231
                %v233 = vld [vmem:[%s225 + $0x48] sm:$0xff]
                %234 = vst [vmem:[%s226 + $0x18] sm:$0xff] %v233
                %v235 = vld [vmem:[%s225 + $0x60] sm:$0xff]
                %236 = vst [vmem:[%s226 + $0x20] sm:$0xff] %v235
                %v237 = vld [vmem:[%s225 + $0x78] sm:$0xff]
                %238 = vst [vmem:[%s226 + $0x28] sm:$0xff] %v237
                %v239 = vld [vmem:[%s225 + $0x90] sm:$0xff]
                %240 = vst [vmem:[%s226 + $0x30] sm:$0xff] %v239
                %v241 = vld [vmem:[%s225 + $0xa8] sm:$0xff]
                %242 = vst [vmem:[%s226 + $0x38] sm:$0xff] %v241
                %v243 = vld [vmem:[%s225 + $0xc0] sm:$0xff]
                %244 = vst [vmem:[%s226 + $0x40] sm:$0xff] %v243
                %v245 = vld [vmem:[%s225 + $0xd8] sm:$0xff]
                %246 = vst [vmem:[%s226 + $0x48] sm:$0xff] %v245
                %v247 = vld [vmem:[%s225 + $0xf0] sm:$0xff]
                %248 = vst [vmem:[%s226 + $0x50] sm:$0xff] %v247
                %v249 = vld [vmem:[%s225 + $0x108] sm:$0xff]
                %250 = vst [vmem:[%s226 + $0x58] sm:$0xff] %v249
                %v251 = vld [vmem:[%s225 + $0x120] sm:$0xff]
                %252 = vst [vmem:[%s226 + $0x60] sm:$0xff] %v251
                %v253 = vld [vmem:[%s225 + $0x138] sm:$0xff]
                %254 = vst [vmem:[%s226 + $0x68] sm:$0xff] %v253
                %v255 = vld [vmem:[%s225 + $0x150] sm:$0xff]
                %256 = vst [vmem:[%s226 + $0x70] sm:$0xff] %v255
                %v257 = vld [vmem:[%s225 + $0x168] sm:$0xff]
                %258 = vst [vmem:[%s226 + $0x78] sm:$0xff] %v257
              $region49: #{a_call__.15} parent=43 // loop_footer
                %s224 = sadd.s32 1, %s220
              $region50: #{a_call__.15} parent=43 // loop_footer_branch
                %219 = sbr.rel target = $region46
              $region51: #{a_call__.15} parent=43 // loop_exit
                _
            $region44: #{a_call__.15} parent=35 // pred_fallthru
              _
          $region36: #{a_call__.15} parent=31 // pred_fallthru
            _
          %303 = vnop
        $region32: #{a_call__.15} parent=23 // pred_fallthru
          _
        // Predicated region
        $region67: #{a_call__.15} parent=23 // pred_check
          %p304 = pneg %p137
        $region68: #{a_call__.15} parent=23 // pred_check_branch
          %306 = sbr.rel (%p304) target = $region70
        $region69: #{a_call__.15} parent=23 // pred_region
          %p307 = scmp.lt.s32.totalorder %s19, 2
          %s308 = scalar_select %p307, %s19, 2
          %s309 = scalar_lea.vmem %s4, %s308
        $region70: #{a_call__.15} parent=23 // pred_fallthru
          _
      $region24: #{a_call__.15} parent=5 // pred_fallthru
        _
      %p310 = scmp.le.s32.totalorder 1, %s11
      %p311 = scmp.lt.s32.totalorder %s11, 7
      %p312 = pnand %p310, %p311
      %p313 = pneg %p312
      // Predicated region
      $region71: #{a_call__.15} parent=5 // pred_check
        _
      $region72: #{a_call__.15} parent=5 // pred_check_branch
        %315 = sbr.rel (%p312) target = $region74
      $region73: #{a_call__.15} parent=5 // pred_region
        %s316 = ssub.s32 %s11, 1
        %s317 = sand.u32 %s104, 1
        %s318 = sand.u32 %s104, 1
        %s319 = smul.addr %s318, 128
        %s320 = scalar_lea.vmem [#allocation3], %s319
        // Predicated region
        $region75: #{a_call__.15} parent=73 // pred_check
          %p321 = pneg %p117
        $region76: #{a_call__.15} parent=73 // pred_check_branch
          %323 = sbr.rel (%p321) target = $region78
        $region77: #{a_call__.15} parent=73 // pred_region
          _
        $region78: #{a_call__.15} parent=73 // pred_fallthru
          _
        %p324 = scmp.lt.s32.totalorder %s20, 1
        %s325 = scalar_select %p324, %s20, 1
        %s326 = smul.addr %s325, 8
        %s327 = scalar_lea.vmem %s0, %s326
        %p328 = pneg %p49
        %p329 = pneg %p46
        %p330 = pneg %p70
        %p331 = pneg %p67
        %p332 = pneg %p91
        %p333 = pneg %p88
        %s334 = sand.u32 %s104, 1
        %s335 = sand.u32 %s104, 1
        %s336 = smul.addr %s335, 128
        %s337 = scalar_lea.vmem [#allocation3], %s336
        %p338 = pneg %p117
        %p339 = pneg %p114
        %p340 = scmp.lt.s32.totalorder %s21, 2
        %s341 = scalar_select %p340, %s21, 2
        %s342 = scalar_lea.vmem %s4, %s341
        %p343 = pneg %p143
        %p344 = pneg %p140
        %p345 = pneg %p171
        %p346 = pneg %p168
        %p347 = scmp.lt.s32.totalorder %s20, 1
        %s348 = scalar_select %p347, %s20, 1
        %p349 = scmp.lt.s32.totalorder %s21, 2
        %s350 = scalar_select %p349, %s21, 2
        %s351 = smul.addr %s348, 3
        %s352 = sadd.s32 %s350, %s351
        %s353 = smul.addr %s352, 8
        %s354 = scalar_lea.vmem %s5, %s353
        %p355 = scmp.lt.s32.totalorder %s20, 1
        %s356 = scalar_select %p355, %s20, 1
        %s357 = smul.addr %s356, 8
        %s358 = scalar_lea.vmem %s0, %s357
        %p359 = scmp.lt.s32.totalorder %s21, 2
        %s360 = scalar_select %p359, %s21, 2
        %s361 = scalar_lea.vmem %s4, %s360
        %p362 = scmp.lt.s32.totalorder %s20, 1
        %s363 = scalar_select %p362, %s20, 1
        %p364 = scmp.lt.s32.totalorder %s21, 2
        %s365 = scalar_select %p364, %s21, 2
        %s366 = smul.addr %s363, 3
        %s367 = sadd.s32 %s365, %s366
        %s368 = smul.addr %s367, 8
        %s369 = scalar_lea.vmem %s5, %s368
        %p370 = scmp.eq.s32.totalorder %s21, 0
        // Predicated region
        $region79: #{a_call__.15} parent=73 // pred_check
          %p371 = pneg %p370
        $region80: #{a_call__.15} parent=73 // pred_check_branch
          %373 = sbr.rel (%p371) target = $region82
        $region81: #{a_call__.15} parent=73 // pred_region
          %v374 = vld [vmem:[%s358] sm:$0xff]
          %375 = vadd.xlane.f32.xlu0 %v374
          %v376 = vpop.xlane.xlu0 %375
          %v377 = vrcp.pop 128.0
          %v378 = vmul.f32 %v376, %v377
          %v379 = vsub.f32 %v374, %v378
          %v380 = vmul.f32 %v379, %v379
          %381 = vadd.xlane.f32.xlu0 %v380
          %v382 = vpop.xlane.xlu0 %381
          %v383 = vmul.f32 %v382, %v377
          %v384 = vadd.f32 %v383, 1e-05
          %v385 = vrsqrt.pop %v384
          %v386 = vmul.f32 %v379, %v385
          %v387 = vld [vmem:[%s1] sm:$0x1]
          %v389 = vlaneseq
          %v390 = vshrl.u32 %v389, 7
          %v391 = vsub.s32 0, %v390
          %v392 = vrot.slane %v387, %v391
          %v394 = vmul.f32 %v386, %v392
          %v395 = vld [vmem:[%s2] sm:$0x1]
          %v397 = vlaneseq
          %v398 = vshrl.u32 %v397, 7
          %v399 = vsub.s32 0, %v398
          %v400 = vrot.slane %v395, %v399
          %v402 = vadd.f32 %v394, %v400
          %403 = vst [vmem:[#allocation2] sm:$0xff] %v402
        $region82: #{a_call__.15} parent=73 // pred_fallthru
          _
        %v404 = vld [vmem:[#allocation2] sm:$0xff]
        %v405 = vld [vmem:[%s320] sm:$0xff]
        %v406 = vld [vmem:[%s320 + $0x8] sm:$0xff]
        %v407 = vld [vmem:[%s320 + $0x10] sm:$0xff]
        %v408 = vld [vmem:[%s320 + $0x18] sm:$0xff]
        %v409 = vld [vmem:[%s320 + $0x20] sm:$0xff]
        %v410 = vld [vmem:[%s320 + $0x28] sm:$0xff]
        %v411 = vld [vmem:[%s320 + $0x30] sm:$0xff]
        %v412 = vld [vmem:[%s320 + $0x38] sm:$0xff]
        %v413 = vld [vmem:[%s320 + $0x40] sm:$0xff]
        %v414 = vld [vmem:[%s320 + $0x48] sm:$0xff]
        %v415 = vld [vmem:[%s320 + $0x50] sm:$0xff]
        %v416 = vld [vmem:[%s320 + $0x58] sm:$0xff]
        %v417 = vld [vmem:[%s320 + $0x60] sm:$0xff]
        %v418 = vld [vmem:[%s320 + $0x68] sm:$0xff]
        %v419 = vld [vmem:[%s320 + $0x70] sm:$0xff]
        %v420 = vld [vmem:[%s320 + $0x78] sm:$0xff]
        %v421 = vld [vmem:[%s361] sm:$0x1]
        %v423 = vlaneseq
        %v424 = vshrl.u32 %v423, 7
        %v425 = vsub.s32 0, %v424
        %v426 = vrot.slane %v421, %v425
        %428 = vmatprep.subr.mxu0 0.0
        %429 = vmatpush1.msra.mxu0 %v405
        %430 = vmatprep.subr.mxu0 0.0
        %431 = vmatpush1.msra.mxu0 %v406
        %432 = vmatprep.subr.mxu0 0.0
        %433 = vmatpush1.msra.mxu0 %v407
        %434 = vmatprep.subr.mxu0 0.0
        %435 = vmatpush1.msra.mxu0 %v408
        %436 = vmatprep.subr.mxu0 0.0
        %437 = vmatpush1.msra.mxu0 %v409
        %438 = vmatprep.subr.mxu0 0.0
        %439 = vmatpush1.msra.mxu0 %v410
        %440 = vmatprep.subr.mxu0 0.0
        %441 = vmatpush1.msra.mxu0 %v411
        %442 = vmatprep.subr.mxu0 0.0
        %443 = vmatpush1.msra.mxu0 %v412
        %444 = vmatprep.subr.mxu0 0.0
        %445 = vmatpush1.msra.mxu0 %v413
        %446 = vmatprep.subr.mxu0 0.0
        %447 = vmatpush1.msra.mxu0 %v414
        %448 = vmatprep.subr.mxu0 0.0
        %449 = vmatpush1.msra.mxu0 %v415
        %450 = vmatprep.subr.mxu0 0.0
        %451 = vmatpush1.msra.mxu0 %v416
        %452 = vmatprep.subr.mxu0 0.0
        %453 = vmatpush1.msra.mxu0 %v417
        %454 = vmatprep.subr.mxu0 0.0
        %455 = vmatpush1.msra.mxu0 %v418
        %456 = vmatprep.subr.mxu0 0.0
        %457 = vmatpush1.msra.mxu0 %v419
        %458 = vmatprep.subr.mxu0 0.0
        %459 = vmatpush1.msra.mxu0 %v420
        %460 = vmatprep.subr.mxu0 0.0
        %461 = vmatpush1.msra.mxu0 0.0
        %462 = vmatprep.subr.mxu0 0.0
        %463 = vmatpush1.msra.mxu0 0.0
        %464 = vmatprep.subr.mxu0 0.0
        %465 = vmatpush1.msra.mxu0 0.0
        %466 = vmatprep.subr.mxu0 0.0
        %467 = vmatpush1.msra.mxu0 0.0
        %468 = vmatprep.subr.mxu0 0.0
        %469 = vmatpush1.msra.mxu0 0.0
        %470 = vmatprep.subr.mxu0 0.0
        %471 = vmatpush1.msra.mxu0 0.0
        %472 = vmatprep.subr.mxu0 0.0
        %473 = vmatpush1.msra.mxu0 0.0
        %474 = vmatprep.subr.mxu0 0.0
        %475 = vmatpush1.msra.mxu0 0.0
        %476 = vmatprep.subr.mxu0 0.0
        %477 = vmatpush1.msra.mxu0 0.0
        %478 = vmatprep.subr.mxu0 0.0
        %479 = vmatpush1.msra.mxu0 0.0
        %480 = vmatprep.subr.mxu0 0.0
        %481 = vmatpush1.msra.mxu0 0.0
        %482 = vmatprep.subr.mxu0 0.0
        %483 = vmatpush1.msra.mxu0 0.0
        %484 = vmatprep.subr.mxu0 0.0
        %485 = vmatpush1.msra.mxu0 0.0
        %486 = vmatprep.subr.mxu0 0.0
        %487 = vmatpush1.msra.mxu0 0.0
        %488 = vmatprep.subr.mxu0 0.0
        %489 = vmatpush1.msra.mxu0 0.0
        %490 = vmatprep.subr.mxu0 0.0
        %491 = vmatpush1.msra.mxu0 0.0
        %492 = vmatprep.mubr.f32.mxu0 0.0
        %493 = vmatmul.mubr.f32.gmra.mrb[0].mxu0 %v404
        %v494 = vpop.f32.mrb[0].mxu0
        %v495 = vadd.f32 %v426, %v494
        %v496 = vpop.f32.mrb[0].mxu0
        %497 = vdwg.mxu0
        %498 = vst [vmem:[%s369] sm:$0xff] %v495
        %p499 = scmp.lt.s32.totalorder %s20, 1
        %s500 = scalar_select %p499, %s20, 1
        %p501 = scmp.lt.s32.totalorder %s21, 2
        %s502 = scalar_select %p501, %s21, 2
        %s503 = smul.addr %s500, 3
        %s504 = sadd.s32 %s502, %s503
        %s505 = smul.addr %s504, 8
        %s506 = scalar_lea.vmem %s5, %s505
        // Predicated region
        $region83: #{a_call__.15} parent=73 // pred_check
          %p507 = pneg %p168
        $region84: #{a_call__.15} parent=73 // pred_check_branch
          %509 = sbr.rel (%p507) target = $region86
        $region85: #{a_call__.15} parent=73 // pred_region
          _
        $region86: #{a_call__.15} parent=73 // pred_fallthru
          _
      $region74: #{a_call__.15} parent=5 // pred_fallthru
        _
      %p510 = scmp.le.s32.totalorder 2, %s11
      // Predicated region
      $region87: #{a_call__.15} parent=5 // pred_check
        %p511 = pneg %p510
      $region88: #{a_call__.15} parent=5 // pred_check_branch
        %513 = sbr.rel (%p511) target = $region90
      $region89: #{a_call__.15} parent=5 // pred_region
        %s514 = ssub.s32 %s11, 2
        // Predicated region
        $region91: #{a_call__.15} parent=89 // pred_check
          %p515 = pneg %p174
        $region92: #{a_call__.15} parent=89 // pred_check_branch
          %517 = sbr.rel (%p515) target = $region94
        $region93: #{a_call__.15} parent=89 // pred_region
          %p518 = scmp.lt.s32.totalorder %s22, 1
          %s519 = scalar_select %p518, %s22, 1
          %p520 = scmp.lt.s32.totalorder %s23, 2
          %s521 = scalar_select %p520, %s23, 2
          %s522 = smul.addr %s519, 3
          %s523 = sadd.s32 %s521, %s522
          %s524 = smul.addr %s523, 8
          %s525 = scalar_lea.vmem %s5, %s524
        $region94: #{a_call__.15} parent=89 // pred_fallthru
          _
      $region90: #{a_call__.15} parent=5 // pred_fallthru
        _
    $region6: #{a_call__.15} parent=1 // loop_footer
      %s15 = sadd.s32 1, %s11
    $region7: #{a_call__.15} parent=1 // loop_footer_branch
      %10 = sbr.rel target = $region3
    $region8: #{a_call__.15} parent=1 // loop_exit
      _

</llo_original>
